<compile_context>
chip_gen: v6e
topology: v6e:2x2x1
jax: 0.10.0
libtpu: 0.0.40
codegen_flags: <defaults>
</compile_context>

<pallas_src>
import jax
import jax.numpy as jnp
from jax.experimental import pallas as pl
from jax.experimental.pallas import tpu as pltpu

HIDDEN = 768    # BERT hidden size
FC1 = 512       # fc1 output width
NCLASS = 2      # fc2 output width (real classes)
NPAD = 128      # lane-dense padded class width


def fused_head_kernel(pooled_ref, wp_ref, bp_ref, w1_ref, b1_ref,
                      w2_ref, b2_ref, o_ref):
    # pooled_ref: (TB, 768) f32 masked-mean embedding
    pooled = pooled_ref[...]

    # BERT pooler dense + tanh  (bf16 MXU operands, f32 accumulate, f32 tanh)
    cls_hs = jnp.tanh(
        jnp.dot(pooled.astype(jnp.bfloat16), wp_ref[...],
                preferred_element_type=jnp.float32) + bp_ref[...])

    # fc1 + relu
    h = jnp.maximum(
        jnp.dot(cls_hs.astype(jnp.bfloat16), w1_ref[...],
                preferred_element_type=jnp.float32) + b1_ref[...],
        0.0)
    # dropout(p=0.1): identity at inference time (eval mode)

    # fc2, padded to 128 lanes for a lane-dense output block
    logits = jnp.dot(h.astype(jnp.bfloat16), w2_ref[...],
                     preferred_element_type=jnp.float32) + b2_ref[...]

    # mask padded classes so they contribute nothing to log_softmax
    col = jax.lax.broadcasted_iota(jnp.int32, logits.shape, 1)
    logits = jnp.where(col < NCLASS, logits, -jnp.inf)

    # log_softmax over the class axis (f32, numerically stable)
    m = jnp.max(logits, axis=1, keepdims=True)
    lse = jnp.log(jnp.sum(jnp.exp(logits - m), axis=1, keepdims=True)) + m
    o_ref[...] = logits - lse


def bert_arch_forward(pooled, w_pool, b_pool, w1, b1, w2, b2, *, tb=256):
    """Fused pooler-dense + fc1/relu/fc2/log_softmax head.

    pooled: (B, 768) f32.  Returns (B, 2) f32 log-probabilities.
    tb: batch tile (use 256-1024 for real serving batches; any multiple of 8).
    """
    B = pooled.shape[0]
    tb = min(tb, max(8, pl.cdiv(B, 8) * 8))
    n_blocks = pl.cdiv(B, tb)
    Bp = n_blocks * tb
    if Bp != B:
        pooled = jnp.pad(pooled, ((0, Bp - B), (0, 0)))

    # Weights in bf16 (halve HBM traffic, native MXU); biases stay f32.
    wp_bf = w_pool.astype(jnp.bfloat16)
    w1_bf = w1.astype(jnp.bfloat16)
    w2_pad = (jnp.zeros((FC1, NPAD), jnp.float32)
              .at[:, :NCLASS].set(w2).astype(jnp.bfloat16))
    bp = b_pool.reshape(1, HIDDEN).astype(jnp.float32)
    b1_ = b1.reshape(1, FC1).astype(jnp.float32)
    b2_pad = jnp.zeros((1, NPAD), jnp.float32).at[:, :NCLASS].set(
        b2.reshape(1, NCLASS))

    out = pl.pallas_call(
        fused_head_kernel,
        out_shape=jax.ShapeDtypeStruct((Bp, NPAD), jnp.float32),
        grid_spec=pl.GridSpec(
            grid=(n_blocks,),
            in_specs=[
                pl.BlockSpec((tb, HIDDEN), lambda i: (i, 0)),      # pooled (streamed)
                pl.BlockSpec((HIDDEN, HIDDEN), lambda i: (0, 0)),  # w_pool (resident)
                pl.BlockSpec((1, HIDDEN), lambda i: (0, 0)),       # b_pool
                pl.BlockSpec((HIDDEN, FC1), lambda i: (0, 0)),     # w1
                pl.BlockSpec((1, FC1), lambda i: (0, 0)),          # b1
                pl.BlockSpec((FC1, NPAD), lambda i: (0, 0)),       # w2 (padded)
                pl.BlockSpec((1, NPAD), lambda i: (0, 0)),         # b2 (padded)
            ],
            out_specs=pl.BlockSpec((tb, NPAD), lambda i: (i, 0)),
        ),
        compiler_params=pltpu.CompilerParams(
            dimension_semantics=("parallel",)),
    )(pooled, wp_bf, bp, w1_bf, b1_, w2_pad, b2_pad)

    return out[:B, :NCLASS]


def masked_mean_embed(sent_id, mask, emb_table):
    """Deterministic stand-in for the BERT encoder body (plain JAX gather + mean)."""
    tok = emb_table[sent_id]                                   # (B, S, 768)
    m = mask.astype(jnp.float32)[..., None]                    # (B, S, 1)
    return (tok * m).sum(axis=1) / jnp.maximum(m.sum(axis=1), 1.0)   # (B, 768)


def reference_forward(pooled, w_pool, b_pool, w1, b1, w2, b2):
    """Plain-JAX reference mirroring the kernel's bf16-operand / f32-accumulate path."""
    def mm(a, b):
        return jnp.dot(a.astype(jnp.bfloat16).astype(jnp.float32),
                       b.astype(jnp.bfloat16).astype(jnp.float32))
    cls_hs = jnp.tanh(mm(pooled, w_pool) + b_pool.reshape(1, HIDDEN))
    h = jnp.maximum(mm(cls_hs, w1) + b1.reshape(1, FC1), 0.0)
    logits = mm(h, w2) + b2.reshape(1, NCLASS)
    return jax.nn.log_softmax(logits, axis=1)


if __name__ == "__main__":
    key = jax.random.PRNGKey(0)
    k_emb, k_wp, k_bp, k_w1, k_b1, k_w2, k_b2, k_ids = jax.random.split(key, 8)

    B, S, VOCAB = 16, 8, 100   # small demo shapes

    # Tokenizer-style inputs
    sent_id = jax.random.randint(k_ids, (B, S), 0, VOCAB, dtype=jnp.int32)
    mask = jnp.ones((B, S), dtype=jnp.int32)

    # Deterministic synthetic "bert" parameters
    emb_table = jax.random.normal(k_emb, (VOCAB, HIDDEN), jnp.float32) * 0.02
    w_pool = jax.random.normal(k_wp, (HIDDEN, HIDDEN), jnp.float32) * 0.02
    b_pool = jax.random.normal(k_bp, (HIDDEN,), jnp.float32) * 0.02

    # Classification-head parameters (fc1: 768->512, fc2: 512->2)
    w1 = jax.random.normal(k_w1, (HIDDEN, FC1), jnp.float32) * 0.02
    b1 = jax.random.normal(k_b1, (FC1,), jnp.float32) * 0.02
    w2 = jax.random.normal(k_w2, (FC1, NCLASS), jnp.float32) * 0.02
    b2 = jax.random.normal(k_b2, (NCLASS,), jnp.float32) * 0.02

    # Forward pass: plain-JAX embedding/mean, fused Pallas pooler+head.
    pooled = masked_mean_embed(sent_id, mask, emb_table)
    out = bert_arch_forward(pooled, w_pool, b_pool, w1, b1, w2, b2, tb=8)
    out = jax.block_until_ready(out)

    # Correctness check against a precision-matched JAX reference.
    ref = reference_forward(pooled, w_pool, b_pool, w1, b1, w2, b2)
    assert out.shape == (B, NCLASS)
    assert jnp.allclose(out, ref, atol=1e-4, rtol=1e-4), float(jnp.max(jnp.abs(out - ref)))

    print("KERNEL_OK")
</pallas_src>

<mosaic_0001>
module attributes {stable_mosaic.version = 11 : i64} {
  func.func @fused_head_kernel(%arg0: i32, %arg1: memref<8x768xf32, #tpu.memory_space<vmem>>, %arg2: memref<768x768xbf16, #tpu.memory_space<vmem>>, %arg3: memref<1x768xf32, #tpu.memory_space<vmem>>, %arg4: memref<768x512xbf16, #tpu.memory_space<vmem>>, %arg5: memref<1x512xf32, #tpu.memory_space<vmem>>, %arg6: memref<512x128xbf16, #tpu.memory_space<vmem>>, %arg7: memref<1x128xf32, #tpu.memory_space<vmem>>, %arg8: memref<8x128xf32, #tpu.memory_space<vmem>>) attributes {dimension_semantics = [#tpu.dimension_semantics<parallel>], iteration_bounds = array<i64: 2>, scalar_prefetch = 0 : i64, scratch_operands = 0 : i64, tpu.core_type = #tpu.core_type<tc>, window_params = [{transform_indices = @transform_0, window_bounds = array<i64: 8, 768>}, {pipeline_mode = #tpu.pipeline_mode<synchronous>, transform_indices = @transform_1, window_bounds = array<i64: 768, 768>}, {pipeline_mode = #tpu.pipeline_mode<synchronous>, transform_indices = @transform_2, window_bounds = array<i64: 1, 768>}, {pipeline_mode = #tpu.pipeline_mode<synchronous>, transform_indices = @transform_3, window_bounds = array<i64: 768, 512>}, {pipeline_mode = #tpu.pipeline_mode<synchronous>, transform_indices = @transform_4, window_bounds = array<i64: 1, 512>}, {pipeline_mode = #tpu.pipeline_mode<synchronous>, transform_indices = @transform_5, window_bounds = array<i64: 512, 128>}, {pipeline_mode = #tpu.pipeline_mode<synchronous>, transform_indices = @transform_6, window_bounds = array<i64: 1, 128>}, {transform_indices = @transform_7, window_bounds = array<i64: 8, 128>}]} {
    %c0 = arith.constant 0 : index
    %c0_0 = arith.constant 0 : index
    %0 = vector.load %arg1[%c0, %c0_0] : memref<8x768xf32, #tpu.memory_space<vmem>>, vector<8x768xf32>
    %1 = arith.truncf %0 : vector<8x768xf32> to vector<8x768xbf16>
    %c0_1 = arith.constant 0 : index
    %c0_2 = arith.constant 0 : index
    %2 = vector.load %arg2[%c0_1, %c0_2] : memref<768x768xbf16, #tpu.memory_space<vmem>>, vector<768x768xbf16>
    %cst = arith.constant dense<0.000000e+00> : vector<8x768xf32>
    %3 = tpu.matmul %1, %2, %cst {dimension_numbers = #tpu.dot_dimension_numbers<[1], [0], [0], [1], [0, 0, 1, 1], [], []>} : vector<8x768xbf16>, vector<768x768xbf16>, vector<8x768xf32> -> vector<8x768xf32>
    %c0_3 = arith.constant 0 : index
    %c0_4 = arith.constant 0 : index
    %4 = vector.load %arg3[%c0_3, %c0_4] : memref<1x768xf32, #tpu.memory_space<vmem>>, vector<1x768xf32>
    %5 = vector.broadcast %4 : vector<1x768xf32> to vector<8x768xf32>
    %6 = arith.addf %3, %5 : vector<8x768xf32>
    %7 = math.tanh %6 : vector<8x768xf32>
    %8 = arith.truncf %7 : vector<8x768xf32> to vector<8x768xbf16>
    %c0_5 = arith.constant 0 : index
    %c0_6 = arith.constant 0 : index
    %9 = vector.load %arg4[%c0_5, %c0_6] : memref<768x512xbf16, #tpu.memory_space<vmem>>, vector<768x512xbf16>
    %cst_7 = arith.constant dense<0.000000e+00> : vector<8x512xf32>
    %10 = tpu.matmul %8, %9, %cst_7 {dimension_numbers = #tpu.dot_dimension_numbers<[1], [0], [0], [1], [0, 0, 1, 1], [], []>} : vector<8x768xbf16>, vector<768x512xbf16>, vector<8x512xf32> -> vector<8x512xf32>
    %c0_8 = arith.constant 0 : index
    %c0_9 = arith.constant 0 : index
    %11 = vector.load %arg5[%c0_8, %c0_9] : memref<1x512xf32, #tpu.memory_space<vmem>>, vector<1x512xf32>
    %12 = vector.broadcast %11 : vector<1x512xf32> to vector<8x512xf32>
    %13 = arith.addf %10, %12 : vector<8x512xf32>
    %cst_10 = arith.constant 0.000000e+00 : f32
    %14 = vector.broadcast %cst_10 : f32 to vector<8x512xf32>
    %15 = arith.maximumf %13, %14 : vector<8x512xf32>
    %16 = arith.truncf %15 : vector<8x512xf32> to vector<8x512xbf16>
    %c0_11 = arith.constant 0 : index
    %c0_12 = arith.constant 0 : index
    %17 = vector.load %arg6[%c0_11, %c0_12] : memref<512x128xbf16, #tpu.memory_space<vmem>>, vector<512x128xbf16>
    %cst_13 = arith.constant dense<0.000000e+00> : vector<8x128xf32>
    %18 = tpu.matmul %16, %17, %cst_13 {dimension_numbers = #tpu.dot_dimension_numbers<[1], [0], [0], [1], [0, 0, 1, 1], [], []>} : vector<8x512xbf16>, vector<512x128xbf16>, vector<8x128xf32> -> vector<8x128xf32>
    %c0_14 = arith.constant 0 : index
    %c0_15 = arith.constant 0 : index
    %19 = vector.load %arg7[%c0_14, %c0_15] : memref<1x128xf32, #tpu.memory_space<vmem>>, vector<1x128xf32>
    %20 = vector.broadcast %19 : vector<1x128xf32> to vector<8x128xf32>
    %21 = arith.addf %18, %20 : vector<8x128xf32>
    %22 = tpu.iota {dimensions = array<i32: 1>} : vector<8x128xi32>
    %c2_i32 = arith.constant 2 : i32
    %23 = vector.broadcast %c2_i32 : i32 to vector<8x128xi32>
    %24 = arith.cmpi slt, %22, %23 : vector<8x128xi32>
    %cst_16 = arith.constant 0xFF800000 : f32
    %25 = vector.broadcast %cst_16 : f32 to vector<8x128xf32>
    %26 = arith.select %24, %21, %25 : vector<8x128xi1>, vector<8x128xf32>
    %cst_17 = arith.constant dense<0xFF800000> : vector<8xf32>
    %27 = vector.multi_reduction <maximumf>, %26, %cst_17 [1] : vector<8x128xf32> to vector<8xf32>
    %28 = vector.shape_cast %27 : vector<8xf32> to vector<8x1xf32>
    %29 = vector.broadcast %28 : vector<8x1xf32> to vector<8x128xf32>
    %30 = arith.subf %26, %29 : vector<8x128xf32>
    %31 = math.exp %30 : vector<8x128xf32>
    %cst_18 = arith.constant dense<0.000000e+00> : vector<8xf32>
    %32 = vector.multi_reduction <add>, %31, %cst_18 [1] : vector<8x128xf32> to vector<8xf32>
    %33 = vector.shape_cast %32 : vector<8xf32> to vector<8x1xf32>
    %34 = math.log %33 : vector<8x1xf32>
    %35 = arith.addf %34, %28 : vector<8x1xf32>
    %36 = vector.broadcast %35 : vector<8x1xf32> to vector<8x128xf32>
    %37 = arith.subf %26, %36 : vector<8x128xf32>
    %c0_19 = arith.constant 0 : index
    %c0_20 = arith.constant 0 : index
    %38 = vector.load %arg8[%c0_19, %c0_20] : memref<8x128xf32, #tpu.memory_space<vmem>>, vector<8x128xf32>
    tpu.vector_store %arg8[%c0_19, %c0_20], %37 {strides = array<i32>} : memref<8x128xf32, #tpu.memory_space<vmem>>, vector<8x128xf32>,
    return
  }
  func.func @transform_0(%arg0: i32) -> (i32, i32) {
    %c0_i32 = arith.constant 0 : i32
    %c0_i32_0 = arith.constant 0 : i32
    return %arg0, %c0_i32 : i32, i32
  }
  func.func @transform_1(%arg0: i32) -> (i32, i32) {
    %c0_i32 = arith.constant 0 : i32
    %c0_i32_0 = arith.constant 0 : i32
    %c0_i32_1 = arith.constant 0 : i32
    return %c0_i32, %c0_i32_0 : i32, i32
  }
  func.func @transform_2(%arg0: i32) -> (i32, i32) {
    %c0_i32 = arith.constant 0 : i32
    %c0_i32_0 = arith.constant 0 : i32
    %c0_i32_1 = arith.constant 0 : i32
    return %c0_i32, %c0_i32_0 : i32, i32
  }
  func.func @transform_3(%arg0: i32) -> (i32, i32) {
    %c0_i32 = arith.constant 0 : i32
    %c0_i32_0 = arith.constant 0 : i32
    %c0_i32_1 = arith.constant 0 : i32
    return %c0_i32, %c0_i32_0 : i32, i32
  }
  func.func @transform_4(%arg0: i32) -> (i32, i32) {
    %c0_i32 = arith.constant 0 : i32
    %c0_i32_0 = arith.constant 0 : i32
    %c0_i32_1 = arith.constant 0 : i32
    return %c0_i32, %c0_i32_0 : i32, i32
  }
  func.func @transform_5(%arg0: i32) -> (i32, i32) {
    %c0_i32 = arith.constant 0 : i32
    %c0_i32_0 = arith.constant 0 : i32
    %c0_i32_1 = arith.constant 0 : i32
    return %c0_i32, %c0_i32_0 : i32, i32
  }
  func.func @transform_6(%arg0: i32) -> (i32, i32) {
    %c0_i32 = arith.constant 0 : i32
    %c0_i32_0 = arith.constant 0 : i32
    %c0_i32_1 = arith.constant 0 : i32
    return %c0_i32, %c0_i32_0 : i32, i32
  }
  func.func @transform_7(%arg0: i32) -> (i32, i32) {
    %c0_i32 = arith.constant 0 : i32
    %c0_i32_0 = arith.constant 0 : i32
    return %arg0, %c0_i32 : i32, i32
  }
}

</mosaic_0001>

<llo_original>
// kernel: tpu_custom_call.1
$region0: #{tpu_custom_call.1}
  #allocation0 [shape = 'u32[]', space=smem, size = 0x4, offset = 0x4, fixed_abs, tag = 'smem constant byte address 0x4 - core index']
  #allocation1 [shape = 'u32[144,128]{1,0:T(1,128)}', space=vmem, size = 0x12000, scoped, tag = 'internal scratch']
  %s0 = inlined_call_operand.hbm [shape: f32[16,768], index: 0, kind: input, shape index: {}]
  %s1 = inlined_call_operand.hbm [shape: bf16[768,768], index: 1, kind: input, shape index: {}]
  %s2 = inlined_call_operand.hbm [shape: f32[1,768], index: 2, kind: input, shape index: {}]
  %s3 = inlined_call_operand.hbm [shape: bf16[768,512], index: 3, kind: input, shape index: {}]
  %s4 = inlined_call_operand.hbm [shape: f32[1,512], index: 4, kind: input, shape index: {}]
  %s5 = inlined_call_operand.hbm [shape: bf16[512,128], index: 5, kind: input, shape index: {}]
  %s6 = inlined_call_operand.hbm [shape: f32[1,128], index: 6, kind: input, shape index: {}]
  %s7 = inlined_call_operand.hbm [shape: f32[16,128], index: 7, kind: output, shape index: {}]
  %s8 = sld [smem:[#allocation0]]
  $region89: #{tpu_custom_call.1} parent=0
    _
  %s10 = ssub.s32 1, %s8
  %s11 = scalar_select 0, %s10, %s8
  $region1: #{tpu_custom_call.1} parent=0
    #allocation2 [shape = 'u8[49152]{0}', space=vmem, size = 0xc000, scoped, tag = 'input window, operand 0']
    #allocation3 [shape = 's32[2]{0}', space=sflag, size = 0x8, scoped, tag = 'scoped memory for tpu_custom_call.1']
    #allocation4 [shape = 's32[2]{0}', space=sflag, size = 0x8, scoped, tag = 'scoped memory for tpu_custom_call.1']
    #allocation5 [shape = 'u8[1179648]{0}', space=vmem, size = 0x120000, scoped, tag = 'input window, operand 1, single buffered']
    #allocation6 [shape = 's32[1]{0}', space=sflag, size = 0x4, scoped, tag = 'scoped memory for tpu_custom_call.1']
    #allocation7 [shape = 'u8[3072]{0}', space=vmem, size = 0xc00, scoped, tag = 'input window, operand 2, single buffered']
    #allocation8 [shape = 'u8[786432]{0}', space=vmem, size = 0xc0000, scoped, tag = 'input window, operand 3, single buffered']
    #allocation9 [shape = 's32[1]{0}', space=sflag, size = 0x4, scoped, tag = 'scoped memory for tpu_custom_call.1']
    #allocation10 [shape = 'u8[2048]{0}', space=vmem, size = 0x800, scoped, tag = 'input window, operand 4, single buffered']
    #allocation11 [shape = 'u8[131072]{0}', space=vmem, size = 0x20000, scoped, tag = 'input window, operand 5, single buffered']
    #allocation12 [shape = 's32[1]{0}', space=sflag, size = 0x4, scoped, tag = 'scoped memory for tpu_custom_call.1']
    #allocation13 [shape = 'u8[512]{0}', space=vmem, size = 0x400, scoped, tag = 'input window, operand 6, single buffered']
    #allocation14 [shape = 'u8[8192]{0}', space=vmem, size = 0x2000, scoped, tag = 'output window, operand 0']
    %12 = vsyncpa [#allocation3], 0
    %s13 = scalar_lea.sflag [#allocation3], 1
    %14 = vsyncpa %s13, 0
    %15 = vsyncpa [#allocation6], 0
    %16 = vsyncpa [#allocation9], 0
    %17 = vsyncpa [#allocation12], 0
    %18 = vsyncpa [#allocation4], 0
    %s19 = scalar_lea.sflag [#allocation4], 1
    %20 = vsyncpa %s19, 0
    loop: start=0, step=1, limit=4
    $region2: #{tpu_custom_call.1} parent=1 // loop_pre_header
      _
    $region3: #{tpu_custom_call.1} parent=1 // loop_header
      %s22 = sphi 0, %s26
      %p23 = scmp.ge.s32.totalorder %s22, 4
      %s32 = sphi 0, %s34
      %s35 = sphi 0, %s32
      %s36 = sphi 0, %s35
      %s52 = sphi 0, %s36
      %s56 = sphi 0, %s56
      %s58 = sphi 0, %s56
      %s59 = sphi 0, %s58
      %s73 = sphi 0, %s59
      %s77 = sphi 0, %s77
      %s79 = sphi 0, %s77
      %s80 = sphi 0, %s79
      %s94 = sphi 0, %s80
      %s98 = sphi 0, %s98
      %s100 = sphi 0, %s98
      %s101 = sphi 0, %s100
      %s115 = sphi 0, %s101
      %s119 = sphi 0, %s119
      %s121 = sphi 0, %s119
      %s122 = sphi 0, %s121
      %s136 = sphi 0, %s122
      %s140 = sphi 0, %s140
      %s142 = sphi 0, %s140
      %s143 = sphi 0, %s142
      %s157 = sphi 0, %s143
      %s161 = sphi 0, %s161
      %s163 = sphi 0, %s161
      %s164 = sphi 0, %s163
      %s178 = sphi 0, %s164
      %s184 = sphi 0, %s186
      %s187 = sphi 0, %s184
      %s188 = sphi 0, %s187
      %s204 = sphi 0, %s188
    $region4: #{tpu_custom_call.1} parent=1 // loop_header_branch
      %25 = sbr.rel (%p23) target = $region8
    $region5: #{tpu_custom_call.1} parent=1 // loop_body
      %s27 = ssub.s32 %s22, 1
      %s28 = ssub.s32 %s22, 2
      %s29 = sadd.s32 %s22, 1
      %s30 = ssub.s32 %s22, %s29
      %p31 = scmp.eq.s32.totalorder %s30, 0
      %s33 = sadd.s32 %s32, 1
      %s34 = scalar_select %p31, %s32, %s33
      %p37 = pneg %p31
      %p38 = scmp.eq.s32.totalorder %s22, 1
      %p39 = por %p37, %p38
      %p40 = scmp.ne.s32.totalorder %s32, %s35
      %p41 = scmp.eq.s32.totalorder %s22, 0
      %p42 = por %p40, %p41
      %p43 = scmp.ne.s32.totalorder %s32, %s35
      %p44 = scmp.eq.s32.totalorder %s27, 1
      %p45 = por %p43, %p44
      %p46 = scmp.ne.s32.totalorder %s35, %s36
      %p47 = scmp.eq.s32.totalorder %s27, 0
      %p48 = por %p46, %p47
      %p49 = scmp.ne.s32.totalorder %s35, %s36
      %p50 = scmp.eq.s32.totalorder %s28, 1
      %p51 = por %p49, %p50
      %p53 = scmp.ne.s32.totalorder %s36, %s52
      %p54 = scmp.eq.s32.totalorder %s28, 0
      %p55 = por %p53, %p54
      %s57 = sadd.s32 %s56, 1
      %p60 = scmp.eq.s32.totalorder %s22, 1
      %p61 = scmp.ne.s32.totalorder %s56, %s58
      %p62 = scmp.eq.s32.totalorder %s22, 0
      %p63 = por %p61, %p62
      %p64 = scmp.ne.s32.totalorder %s56, %s58
      %p65 = scmp.eq.s32.totalorder %s27, 1
      %p66 = por %p64, %p65
      %p67 = scmp.ne.s32.totalorder %s58, %s59
      %p68 = scmp.eq.s32.totalorder %s27, 0
      %p69 = por %p67, %p68
      %p70 = scmp.ne.s32.totalorder %s58, %s59
      %p71 = scmp.eq.s32.totalorder %s28, 1
      %p72 = por %p70, %p71
      %p74 = scmp.ne.s32.totalorder %s59, %s73
      %p75 = scmp.eq.s32.totalorder %s28, 0
      %p76 = por %p74, %p75
      %s78 = sadd.s32 %s77, 1
      %p81 = scmp.eq.s32.totalorder %s22, 1
      %p82 = scmp.ne.s32.totalorder %s77, %s79
      %p83 = scmp.eq.s32.totalorder %s22, 0
      %p84 = por %p82, %p83
      %p85 = scmp.ne.s32.totalorder %s77, %s79
      %p86 = scmp.eq.s32.totalorder %s27, 1
      %p87 = por %p85, %p86
      %p88 = scmp.ne.s32.totalorder %s79, %s80
      %p89 = scmp.eq.s32.totalorder %s27, 0
      %p90 = por %p88, %p89
      %p91 = scmp.ne.s32.totalorder %s79, %s80
      %p92 = scmp.eq.s32.totalorder %s28, 1
      %p93 = por %p91, %p92
      %p95 = scmp.ne.s32.totalorder %s80, %s94
      %p96 = scmp.eq.s32.totalorder %s28, 0
      %p97 = por %p95, %p96
      %s99 = sadd.s32 %s98, 1
      %p102 = scmp.eq.s32.totalorder %s22, 1
      %p103 = scmp.ne.s32.totalorder %s98, %s100
      %p104 = scmp.eq.s32.totalorder %s22, 0
      %p105 = por %p103, %p104
      %p106 = scmp.ne.s32.totalorder %s98, %s100
      %p107 = scmp.eq.s32.totalorder %s27, 1
      %p108 = por %p106, %p107
      %p109 = scmp.ne.s32.totalorder %s100, %s101
      %p110 = scmp.eq.s32.totalorder %s27, 0
      %p111 = por %p109, %p110
      %p112 = scmp.ne.s32.totalorder %s100, %s101
      %p113 = scmp.eq.s32.totalorder %s28, 1
      %p114 = por %p112, %p113
      %p116 = scmp.ne.s32.totalorder %s101, %s115
      %p117 = scmp.eq.s32.totalorder %s28, 0
      %p118 = por %p116, %p117
      %s120 = sadd.s32 %s119, 1
      %p123 = scmp.eq.s32.totalorder %s22, 1
      %p124 = scmp.ne.s32.totalorder %s119, %s121
      %p125 = scmp.eq.s32.totalorder %s22, 0
      %p126 = por %p124, %p125
      %p127 = scmp.ne.s32.totalorder %s119, %s121
      %p128 = scmp.eq.s32.totalorder %s27, 1
      %p129 = por %p127, %p128
      %p130 = scmp.ne.s32.totalorder %s121, %s122
      %p131 = scmp.eq.s32.totalorder %s27, 0
      %p132 = por %p130, %p131
      %p133 = scmp.ne.s32.totalorder %s121, %s122
      %p134 = scmp.eq.s32.totalorder %s28, 1
      %p135 = por %p133, %p134
      %p137 = scmp.ne.s32.totalorder %s122, %s136
      %p138 = scmp.eq.s32.totalorder %s28, 0
      %p139 = por %p137, %p138
      %s141 = sadd.s32 %s140, 1
      %p144 = scmp.eq.s32.totalorder %s22, 1
      %p145 = scmp.ne.s32.totalorder %s140, %s142
      %p146 = scmp.eq.s32.totalorder %s22, 0
      %p147 = por %p145, %p146
      %p148 = scmp.ne.s32.totalorder %s140, %s142
      %p149 = scmp.eq.s32.totalorder %s27, 1
      %p150 = por %p148, %p149
      %p151 = scmp.ne.s32.totalorder %s142, %s143
      %p152 = scmp.eq.s32.totalorder %s27, 0
      %p153 = por %p151, %p152
      %p154 = scmp.ne.s32.totalorder %s142, %s143
      %p155 = scmp.eq.s32.totalorder %s28, 1
      %p156 = por %p154, %p155
      %p158 = scmp.ne.s32.totalorder %s143, %s157
      %p159 = scmp.eq.s32.totalorder %s28, 0
      %p160 = por %p158, %p159
      %s162 = sadd.s32 %s161, 1
      %p165 = scmp.eq.s32.totalorder %s22, 1
      %p166 = scmp.ne.s32.totalorder %s161, %s163
      %p167 = scmp.eq.s32.totalorder %s22, 0
      %p168 = por %p166, %p167
      %p169 = scmp.ne.s32.totalorder %s161, %s163
      %p170 = scmp.eq.s32.totalorder %s27, 1
      %p171 = por %p169, %p170
      %p172 = scmp.ne.s32.totalorder %s163, %s164
      %p173 = scmp.eq.s32.totalorder %s27, 0
      %p174 = por %p172, %p173
      %p175 = scmp.ne.s32.totalorder %s163, %s164
      %p176 = scmp.eq.s32.totalorder %s28, 1
      %p177 = por %p175, %p176
      %p179 = scmp.ne.s32.totalorder %s164, %s178
      %p180 = scmp.eq.s32.totalorder %s28, 0
      %p181 = por %p179, %p180
      %s182 = ssub.s32 %s22, %s29
      %p183 = scmp.eq.s32.totalorder %s182, 0
      %s185 = sadd.s32 %s184, 1
      %s186 = scalar_select %p183, %s184, %s185
      %p189 = pneg %p183
      %p190 = scmp.eq.s32.totalorder %s22, 1
      %p191 = por %p189, %p190
      %p192 = scmp.ne.s32.totalorder %s184, %s187
      %p193 = scmp.eq.s32.totalorder %s22, 0
      %p194 = por %p192, %p193
      %p195 = scmp.ne.s32.totalorder %s184, %s187
      %p196 = scmp.eq.s32.totalorder %s27, 1
      %p197 = por %p195, %p196
      %p198 = scmp.ne.s32.totalorder %s187, %s188
      %p199 = scmp.eq.s32.totalorder %s27, 0
      %p200 = por %p198, %p199
      %p201 = scmp.ne.s32.totalorder %s187, %s188
      %p202 = scmp.eq.s32.totalorder %s28, 1
      %p203 = por %p201, %p202
      %p205 = scmp.ne.s32.totalorder %s188, %s204
      %p206 = scmp.eq.s32.totalorder %s28, 0
      %p207 = por %p205, %p206
      %p208 = scmp.le.s32.totalorder 1, %s22
      %p209 = scmp.lt.s32.totalorder %s22, 3
      %p210 = pnand %p208, %p209
      %p211 = pneg %p210
      // Predicated region
      $region9: #{tpu_custom_call.1} parent=5 // pred_check
        _
      $region10: #{tpu_custom_call.1} parent=5 // pred_check_branch
        %213 = sbr.rel (%p210) target = $region12
      $region11: #{tpu_custom_call.1} parent=5 // pred_region
        %s214 = ssub.s32 %s22, 1
        // Predicated region
        $region13: #{tpu_custom_call.1} parent=11 // pred_check
          %p215 = pneg %p69
        $region14: #{tpu_custom_call.1} parent=11 // pred_check_branch
          %217 = sbr.rel (%p215) target = $region16
        $region15: #{tpu_custom_call.1} parent=11 // pred_region
          %s219 = ssub.s32 36864, 36864
          %220 = vsyncadd [#allocation6], %s219
          %s221 = sshll.u32 [#allocation5], 4
          %s222 = int_to_ptr.vmem [resolvable:$true] %s221
          %227 = dma.hbm_to_vmem [thread:$0]  %s1, 36864, %s222, [#allocation6], 384, 384, 24
        $region16: #{tpu_custom_call.1} parent=11 // pred_fallthru
          _
        // Predicated region
        $region17: #{tpu_custom_call.1} parent=11 // pred_check
          %p228 = pneg %p90
        $region18: #{tpu_custom_call.1} parent=11 // pred_check_branch
          %230 = sbr.rel (%p228) target = $region20
        $region19: #{tpu_custom_call.1} parent=11 // pred_region
          %s232 = ssub.s32 96, 96
          %233 = vsyncadd [#allocation6], %s232
          %s235 = sshll.u32 [#allocation7], 4
          %s236 = int_to_ptr.vmem [resolvable:$true] %s235
          %238 = dma.hbm_to_vmem [thread:$0]  %s2, 96, %s236, [#allocation6]
        $region20: #{tpu_custom_call.1} parent=11 // pred_fallthru
          _
        // Predicated region
        $region21: #{tpu_custom_call.1} parent=11 // pred_check
          %p239 = pneg %p111
        $region22: #{tpu_custom_call.1} parent=11 // pred_check_branch
          %241 = sbr.rel (%p239) target = $region24
        $region23: #{tpu_custom_call.1} parent=11 // pred_region
          %s243 = ssub.s32 24576, 24576
          %244 = vsyncadd [#allocation9], %s243
          %s245 = sshll.u32 [#allocation8], 4
          %s246 = int_to_ptr.vmem [resolvable:$true] %s245
          %251 = dma.hbm_to_vmem [thread:$0]  %s3, 24576, %s246, [#allocation9], 256, 256, 16
        $region24: #{tpu_custom_call.1} parent=11 // pred_fallthru
          _
        // Predicated region
        $region25: #{tpu_custom_call.1} parent=11 // pred_check
          %p252 = pneg %p132
        $region26: #{tpu_custom_call.1} parent=11 // pred_check_branch
          %254 = sbr.rel (%p252) target = $region28
        $region27: #{tpu_custom_call.1} parent=11 // pred_region
          %s256 = ssub.s32 64, 64
          %257 = vsyncadd [#allocation9], %s256
          %s259 = sshll.u32 [#allocation10], 4
          %s260 = int_to_ptr.vmem [resolvable:$true] %s259
          %262 = dma.hbm_to_vmem [thread:$0]  %s4, 64, %s260, [#allocation9]
        $region28: #{tpu_custom_call.1} parent=11 // pred_fallthru
          _
        // Predicated region
        $region29: #{tpu_custom_call.1} parent=11 // pred_check
          %p263 = pneg %p153
        $region30: #{tpu_custom_call.1} parent=11 // pred_check_branch
          %265 = sbr.rel (%p263) target = $region32
        $region31: #{tpu_custom_call.1} parent=11 // pred_region
          %s267 = ssub.s32 4096, 4096
          %268 = vsyncadd [#allocation12], %s267
          %s269 = sshll.u32 [#allocation11], 4
          %s270 = int_to_ptr.vmem [resolvable:$true] %s269
          %275 = dma.hbm_to_vmem [thread:$0]  %s5, 4096, %s270, [#allocation12], 64, 64, 4
        $region32: #{tpu_custom_call.1} parent=11 // pred_fallthru
          _
        // Predicated region
        $region33: #{tpu_custom_call.1} parent=11 // pred_check
          %p276 = pneg %p174
        $region34: #{tpu_custom_call.1} parent=11 // pred_check_branch
          %278 = sbr.rel (%p276) target = $region36
        $region35: #{tpu_custom_call.1} parent=11 // pred_region
          %s280 = ssub.s32 16, 16
          %281 = vsyncadd [#allocation12], %s280
          %s283 = sshll.u32 [#allocation13], 4
          %s284 = int_to_ptr.vmem [resolvable:$true] %s283
          %286 = dma.hbm_to_vmem [thread:$0]  %s6, 16, %s284, [#allocation12]
        $region36: #{tpu_custom_call.1} parent=11 // pred_fallthru
          _
      $region12: #{tpu_custom_call.1} parent=5 // pred_fallthru
        _
      %p287 = scmp.lt.s32.totalorder %s22, 2
      // Predicated region
      $region37: #{tpu_custom_call.1} parent=5 // pred_check
        %p288 = pneg %p287
      $region38: #{tpu_custom_call.1} parent=5 // pred_check_branch
        %290 = sbr.rel (%p288) target = $region40
      $region39: #{tpu_custom_call.1} parent=5 // pred_region
        // Predicated region
        $region41: #{tpu_custom_call.1} parent=39 // pred_check
          %p291 = pneg %p42
        $region42: #{tpu_custom_call.1} parent=39 // pred_check_branch
          %293 = sbr.rel (%p291) target = $region44
        $region43: #{tpu_custom_call.1} parent=39 // pred_region
          %s294 = sand.u32 %s32, 1
          %s295 = scalar_lea.sflag [#allocation3], %s294
          %s296 = sand.u32 %s32, 1
          %s297 = smul.addr %s296, 48
          %s298 = scalar_lea.vmem [#allocation2], %s297
          %s300 = ssub.s32 768, 768
          %301 = vsyncadd %s295, %s300
          %s302 = smul.addr %s22, 6
          %s303 = smul.addr %s302, 128
          %s304 = scalar_lea.hbm %s0, %s303
          %s306 = sshll.u32 %s298, 4
          %s307 = int_to_ptr.vmem [resolvable:$true] %s306
          %309 = dma.hbm_to_vmem [thread:$0]  %s304, 768, %s307, %s295
        $region44: #{tpu_custom_call.1} parent=39 // pred_fallthru
          _
      $region40: #{tpu_custom_call.1} parent=5 // pred_fallthru
        _
      %p310 = scmp.le.s32.totalorder 1, %s22
      %p311 = scmp.lt.s32.totalorder %s22, 3
      %p312 = pnand %p310, %p311
      %p313 = pneg %p312
      // Predicated region
      $region45: #{tpu_custom_call.1} parent=5 // pred_check
        _
      $region46: #{tpu_custom_call.1} parent=5 // pred_check_branch
        %315 = sbr.rel (%p312) target = $region48
      $region47: #{tpu_custom_call.1} parent=5 // pred_region
        %s316 = ssub.s32 %s22, 1
        %s317 = sand.u32 %s35, 1
        %s318 = scalar_lea.sflag [#allocation3], %s317
        %s319 = sand.u32 %s35, 1
        %s320 = smul.addr %s319, 48
        %s321 = scalar_lea.vmem [#allocation2], %s320
        // Predicated region
        $region49: #{tpu_custom_call.1} parent=47 // pred_check
          %p322 = pneg %p48
        $region50: #{tpu_custom_call.1} parent=47 // pred_check_branch
          %324 = sbr.rel (%p322) target = $region52
        $region51: #{tpu_custom_call.1} parent=47 // pred_region
          %325 = dma.done %s318, 768
        $region52: #{tpu_custom_call.1} parent=47 // pred_fallthru
          _
        // Predicated region
        $region53: #{tpu_custom_call.1} parent=47 // pred_check
          %p326 = pneg %p69
        $region54: #{tpu_custom_call.1} parent=47 // pred_check_branch
          %328 = sbr.rel (%p326) target = $region56
        $region55: #{tpu_custom_call.1} parent=47 // pred_region
          %329 = dma.done [#allocation6], 36864
        $region56: #{tpu_custom_call.1} parent=47 // pred_fallthru
          _
        // Predicated region
        $region57: #{tpu_custom_call.1} parent=47 // pred_check
          %p330 = pneg %p90
        $region58: #{tpu_custom_call.1} parent=47 // pred_check_branch
          %332 = sbr.rel (%p330) target = $region60
        $region59: #{tpu_custom_call.1} parent=47 // pred_region
          %333 = dma.done [#allocation6], 96
        $region60: #{tpu_custom_call.1} parent=47 // pred_fallthru
          _
        // Predicated region
        $region61: #{tpu_custom_call.1} parent=47 // pred_check
          %p334 = pneg %p111
        $region62: #{tpu_custom_call.1} parent=47 // pred_check_branch
          %336 = sbr.rel (%p334) target = $region64
        $region63: #{tpu_custom_call.1} parent=47 // pred_region
          %337 = dma.done [#allocation9], 24576
        $region64: #{tpu_custom_call.1} parent=47 // pred_fallthru
          _
        // Predicated region
        $region65: #{tpu_custom_call.1} parent=47 // pred_check
          %p338 = pneg %p132
        $region66: #{tpu_custom_call.1} parent=47 // pred_check_branch
          %340 = sbr.rel (%p338) target = $region68
        $region67: #{tpu_custom_call.1} parent=47 // pred_region
          %341 = dma.done [#allocation9], 64
        $region68: #{tpu_custom_call.1} parent=47 // pred_fallthru
          _
        // Predicated region
        $region69: #{tpu_custom_call.1} parent=47 // pred_check
          %p342 = pneg %p153
        $region70: #{tpu_custom_call.1} parent=47 // pred_check_branch
          %344 = sbr.rel (%p342) target = $region72
        $region71: #{tpu_custom_call.1} parent=47 // pred_region
          %345 = dma.done [#allocation12], 4096
        $region72: #{tpu_custom_call.1} parent=47 // pred_fallthru
          _
        // Predicated region
        $region73: #{tpu_custom_call.1} parent=47 // pred_check
          %p346 = pneg %p174
        $region74: #{tpu_custom_call.1} parent=47 // pred_check_branch
          %348 = sbr.rel (%p346) target = $region76
        $region75: #{tpu_custom_call.1} parent=47 // pred_region
          %349 = dma.done [#allocation12], 16
        $region76: #{tpu_custom_call.1} parent=47 // pred_fallthru
          _
        %s350 = sand.u32 %s35, 1
        %s351 = scalar_lea.sflag [#allocation3], %s350
        %s352 = sand.u32 %s35, 1
        %s353 = smul.addr %s352, 48
        %s354 = scalar_lea.vmem [#allocation2], %s353
        %p355 = pneg %p48
        %p356 = pneg %p45
        %p357 = pneg %p69
        %p358 = pneg %p66
        %p359 = pneg %p90
        %p360 = pneg %p87
        %p361 = pneg %p111
        %p362 = pneg %p108
        %p363 = pneg %p132
        %p364 = pneg %p129
        %p365 = pneg %p153
        %p366 = pneg %p150
        %p367 = pneg %p174
        %p368 = pneg %p171
        %p369 = pneg %p200
        %p370 = pneg %p197
        %s371 = sand.u32 %s187, 1
        %s372 = scalar_lea.sflag [#allocation4], %s371
        %s373 = sand.u32 %s187, 1
        %s374 = smul.addr %s373, 8
        %s375 = scalar_lea.vmem [#allocation14], %s374
        %v377 = vld [vmem:[%s321] sm:$0xff]
        %v378 = vld [vmem:[%s321 + $0x8] sm:$0xff]
        %v379 = vld [vmem:[%s321 + $0x10] sm:$0xff]
        %v380 = vld [vmem:[%s321 + $0x18] sm:$0xff]
        %v381 = vld [vmem:[%s321 + $0x20] sm:$0xff]
        %v382 = vld [vmem:[%s321 + $0x28] sm:$0xff]
        %v383 = vpack.c.bf16 %v377, %v377
        %v384 = vpack.c.bf16 %v378, %v378
        %v385 = vpack.c.bf16 %v379, %v379
        %v386 = vpack.c.bf16 %v380, %v380
        %v387 = vpack.c.bf16 %v381, %v381
        %v388 = vpack.c.bf16 %v382, %v382
        %v389 = vld [vmem:[#allocation5] sm:$0xff]
        %v390 = vld [vmem:[#allocation5 + $0x8] sm:$0xff]
        %v391 = vld [vmem:[#allocation5 + $0x10] sm:$0xff]
        %v392 = vld [vmem:[#allocation5 + $0x18] sm:$0xff]
        %v393 = vld [vmem:[#allocation5 + $0x20] sm:$0xff]
        %v394 = vld [vmem:[#allocation5 + $0x28] sm:$0xff]
        %v395 = vld [vmem:[#allocation5 + $0x30] sm:$0xff]
        %v396 = vld [vmem:[#allocation5 + $0x38] sm:$0xff]
        %v397 = vld [vmem:[#allocation5 + $0x40] sm:$0xff]
        %v398 = vld [vmem:[#allocation5 + $0x48] sm:$0xff]
        %v399 = vld [vmem:[#allocation5 + $0x50] sm:$0xff]
        %v400 = vld [vmem:[#allocation5 + $0x58] sm:$0xff]
        %v401 = vld [vmem:[#allocation5 + $0x60] sm:$0xff]
        %v402 = vld [vmem:[#allocation5 + $0x68] sm:$0xff]
        %v403 = vld [vmem:[#allocation5 + $0x70] sm:$0xff]
        %v404 = vld [vmem:[#allocation5 + $0x78] sm:$0xff]
        %v405 = vld [vmem:[#allocation5 + $0x80] sm:$0xff]
        %v406 = vld [vmem:[#allocation5 + $0x88] sm:$0xff]
        %v407 = vld [vmem:[#allocation5 + $0x90] sm:$0xff]
        %v408 = vld [vmem:[#allocation5 + $0x98] sm:$0xff]
        %v409 = vld [vmem:[#allocation5 + $0xa0] sm:$0xff]
        %v410 = vld [vmem:[#allocation5 + $0xa8] sm:$0xff]
        %v411 = vld [vmem:[#allocation5 + $0xb0] sm:$0xff]
        %v412 = vld [vmem:[#allocation5 + $0xb8] sm:$0xff]
        %v413 = vld [vmem:[#allocation5 + $0xc0] sm:$0xff]
        %v414 = vld [vmem:[#allocation5 + $0xc8] sm:$0xff]
        %v415 = vld [vmem:[#allocation5 + $0xd0] sm:$0xff]
        %v416 = vld [vmem:[#allocation5 + $0xd8] sm:$0xff]
        %v417 = vld [vmem:[#allocation5 + $0xe0] sm:$0xff]
        %v418 = vld [vmem:[#allocation5 + $0xe8] sm:$0xff]
        %v419 = vld [vmem:[#allocation5 + $0xf0] sm:$0xff]
        %v420 = vld [vmem:[#allocation5 + $0xf8] sm:$0xff]
        %v421 = vld [vmem:[#allocation5 + $0x100] sm:$0xff]
        %v422 = vld [vmem:[#allocation5 + $0x108] sm:$0xff]
        %v423 = vld [vmem:[#allocation5 + $0x110] sm:$0xff]
        %v424 = vld [vmem:[#allocation5 + $0x118] sm:$0xff]
        %v425 = vld [vmem:[#allocation5 + $0x120] sm:$0xff]
        %v426 = vld [vmem:[#allocation5 + $0x128] sm:$0xff]
        %v427 = vld [vmem:[#allocation5 + $0x130] sm:$0xff]
        %v428 = vld [vmem:[#allocation5 + $0x138] sm:$0xff]
        %v429 = vld [vmem:[#allocation5 + $0x140] sm:$0xff]
        %v430 = vld [vmem:[#allocation5 + $0x148] sm:$0xff]
        %v431 = vld [vmem:[#allocation5 + $0x150] sm:$0xff]
        %v432 = vld [vmem:[#allocation5 + $0x158] sm:$0xff]
        %v433 = vld [vmem:[#allocation5 + $0x160] sm:$0xff]
        %v434 = vld [vmem:[#allocation5 + $0x168] sm:$0xff]
        %v435 = vld [vmem:[#allocation5 + $0x170] sm:$0xff]
        %v436 = vld [vmem:[#allocation5 + $0x178] sm:$0xff]
        %v437 = vld [vmem:[#allocation5 + $0x180] sm:$0xff]
        %v438 = vld [vmem:[#allocation5 + $0x188] sm:$0xff]
        %v439 = vld [vmem:[#allocation5 + $0x190] sm:$0xff]
        %v440 = vld [vmem:[#allocation5 + $0x198] sm:$0xff]
        %v441 = vld [vmem:[#allocation5 + $0x1a0] sm:$0xff]
        %v442 = vld [vmem:[#allocation5 + $0x1a8] sm:$0xff]
        %v443 = vld [vmem:[#allocation5 + $0x1b0] sm:$0xff]
        %v444 = vld [vmem:[#allocation5 + $0x1b8] sm:$0xff]
        %v445 = vld [vmem:[#allocation5 + $0x1c0] sm:$0xff]
        %v446 = vld [vmem:[#allocation5 + $0x1c8] sm:$0xff]
        %v447 = vld [vmem:[#allocation5 + $0x1d0] sm:$0xff]
        %v448 = vld [vmem:[#allocation5 + $0x1d8] sm:$0xff]
        %v449 = vld [vmem:[#allocation5 + $0x1e0] sm:$0xff]
        %v450 = vld [vmem:[#allocation5 + $0x1e8] sm:$0xff]
        %v451 = vld [vmem:[#allocation5 + $0x1f0] sm:$0xff]
        %v452 = vld [vmem:[#allocation5 + $0x1f8] sm:$0xff]
        %v453 = vld [vmem:[#allocation5 + $0x200] sm:$0xff]
        %v454 = vld [vmem:[#allocation5 + $0x208] sm:$0xff]
        %v455 = vld [vmem:[#allocation5 + $0x210] sm:$0xff]
        %v456 = vld [vmem:[#allocation5 + $0x218] sm:$0xff]
        %v457 = vld [vmem:[#allocation5 + $0x220] sm:$0xff]
        %v458 = vld [vmem:[#allocation5 + $0x228] sm:$0xff]
        %v459 = vld [vmem:[#allocation5 + $0x230] sm:$0xff]
        %v460 = vld [vmem:[#allocation5 + $0x238] sm:$0xff]
        %v461 = vld [vmem:[#allocation5 + $0x240] sm:$0xff]
        %v462 = vld [vmem:[#allocation5 + $0x248] sm:$0xff]
        %v463 = vld [vmem:[#allocation5 + $0x250] sm:$0xff]
        %v464 = vld [vmem:[#allocation5 + $0x258] sm:$0xff]
        %v465 = vld [vmem:[#allocation5 + $0x260] sm:$0xff]
        %v466 = vld [vmem:[#allocation5 + $0x268] sm:$0xff]
        %v467 = vld [vmem:[#allocation5 + $0x270] sm:$0xff]
        %v468 = vld [vmem:[#allocation5 + $0x278] sm:$0xff]
        %v469 = vld [vmem:[#allocation5 + $0x280] sm:$0xff]
        %v470 = vld [vmem:[#allocation5 + $0x288] sm:$0xff]
        %v471 = vld [vmem:[#allocation5 + $0x290] sm:$0xff]
        %v472 = vld [vmem:[#allocation5 + $0x298] sm:$0xff]
        %v473 = vld [vmem:[#allocation5 + $0x2a0] sm:$0xff]
        %v474 = vld [vmem:[#allocation5 + $0x2a8] sm:$0xff]
        %v475 = vld [vmem:[#allocation5 + $0x2b0] sm:$0xff]
        %v476 = vld [vmem:[#allocation5 + $0x2b8] sm:$0xff]
        %v477 = vld [vmem:[#allocation5 + $0x2c0] sm:$0xff]
        %v478 = vld [vmem:[#allocation5 + $0x2c8] sm:$0xff]
        %v479 = vld [vmem:[#allocation5 + $0x2d0] sm:$0xff]
        %v480 = vld [vmem:[#allocation5 + $0x2d8] sm:$0xff]
        %v481 = vld [vmem:[#allocation5 + $0x2e0] sm:$0xff]
        %v482 = vld [vmem:[#allocation5 + $0x2e8] sm:$0xff]
        %v483 = vld [vmem:[#allocation5 + $0x2f0] sm:$0xff]
        %v484 = vld [vmem:[#allocation5 + $0x2f8] sm:$0xff]
        %v485 = vld [vmem:[#allocation5 + $0x300] sm:$0xff]
        %v486 = vld [vmem:[#allocation5 + $0x308] sm:$0xff]
        %v487 = vld [vmem:[#allocation5 + $0x310] sm:$0xff]
        %v488 = vld [vmem:[#allocation5 + $0x318] sm:$0xff]
        %v489 = vld [vmem:[#allocation5 + $0x320] sm:$0xff]
        %v490 = vld [vmem:[#allocation5 + $0x328] sm:$0xff]
        %v491 = vld [vmem:[#allocation5 + $0x330] sm:$0xff]
        %v492 = vld [vmem:[#allocation5 + $0x338] sm:$0xff]
        %v493 = vld [vmem:[#allocation5 + $0x340] sm:$0xff]
        %v494 = vld [vmem:[#allocation5 + $0x348] sm:$0xff]
        %v495 = vld [vmem:[#allocation5 + $0x350] sm:$0xff]
        %v496 = vld [vmem:[#allocation5 + $0x358] sm:$0xff]
        %v497 = vld [vmem:[#allocation5 + $0x360] sm:$0xff]
        %v498 = vld [vmem:[#allocation5 + $0x368] sm:$0xff]
        %v499 = vld [vmem:[#allocation5 + $0x370] sm:$0xff]
        %v500 = vld [vmem:[#allocation5 + $0x378] sm:$0xff]
        %v501 = vld [vmem:[#allocation5 + $0x380] sm:$0xff]
        %v502 = vld [vmem:[#allocation5 + $0x388] sm:$0xff]
        %v503 = vld [vmem:[#allocation5 + $0x390] sm:$0xff]
        %v504 = vld [vmem:[#allocation5 + $0x398] sm:$0xff]
        %v505 = vld [vmem:[#allocation5 + $0x3a0] sm:$0xff]
        %v506 = vld [vmem:[#allocation5 + $0x3a8] sm:$0xff]
        %v507 = vld [vmem:[#allocation5 + $0x3b0] sm:$0xff]
        %v508 = vld [vmem:[#allocation5 + $0x3b8] sm:$0xff]
        %v509 = vld [vmem:[#allocation5 + $0x3c0] sm:$0xff]
        %v510 = vld [vmem:[#allocation5 + $0x3c8] sm:$0xff]
        %v511 = vld [vmem:[#allocation5 + $0x3d0] sm:$0xff]
        %v512 = vld [vmem:[#allocation5 + $0x3d8] sm:$0xff]
        %v513 = vld [vmem:[#allocation5 + $0x3e0] sm:$0xff]
        %v514 = vld [vmem:[#allocation5 + $0x3e8] sm:$0xff]
        %v515 = vld [vmem:[#allocation5 + $0x3f0] sm:$0xff]
        %v516 = vld [vmem:[#allocation5 + $0x3f8] sm:$0xff]
        %v517 = vld [vmem:[#allocation5 + $0x400] sm:$0xff]
        %v518 = vld [vmem:[#allocation5 + $0x408] sm:$0xff]
        %v519 = vld [vmem:[#allocation5 + $0x410] sm:$0xff]
        %v520 = vld [vmem:[#allocation5 + $0x418] sm:$0xff]
        %v521 = vld [vmem:[#allocation5 + $0x420] sm:$0xff]
        %v522 = vld [vmem:[#allocation5 + $0x428] sm:$0xff]
        %v523 = vld [vmem:[#allocation5 + $0x430] sm:$0xff]
        %v524 = vld [vmem:[#allocation5 + $0x438] sm:$0xff]
        %v525 = vld [vmem:[#allocation5 + $0x440] sm:$0xff]
        %v526 = vld [vmem:[#allocation5 + $0x448] sm:$0xff]
        %v527 = vld [vmem:[#allocation5 + $0x450] sm:$0xff]
        %v528 = vld [vmem:[#allocation5 + $0x458] sm:$0xff]
        %v529 = vld [vmem:[#allocation5 + $0x460] sm:$0xff]
        %v530 = vld [vmem:[#allocation5 + $0x468] sm:$0xff]
        %v531 = vld [vmem:[#allocation5 + $0x470] sm:$0xff]
        %v532 = vld [vmem:[#allocation5 + $0x478] sm:$0xff]
        %v533 = vld [vmem:[#allocation5 + $0x480] sm:$0xff]
        %v534 = vld [vmem:[#allocation5 + $0x488] sm:$0xff]
        %v535 = vld [vmem:[#allocation5 + $0x490] sm:$0xff]
        %v536 = vld [vmem:[#allocation5 + $0x498] sm:$0xff]
        %v537 = vld [vmem:[#allocation5 + $0x4a0] sm:$0xff]
        %v538 = vld [vmem:[#allocation5 + $0x4a8] sm:$0xff]
        %v539 = vld [vmem:[#allocation5 + $0x4b0] sm:$0xff]
        %v540 = vld [vmem:[#allocation5 + $0x4b8] sm:$0xff]
        %v541 = vld [vmem:[#allocation5 + $0x4c0] sm:$0xff]
        %v542 = vld [vmem:[#allocation5 + $0x4c8] sm:$0xff]
        %v543 = vld [vmem:[#allocation5 + $0x4d0] sm:$0xff]
        %v544 = vld [vmem:[#allocation5 + $0x4d8] sm:$0xff]
        %v545 = vld [vmem:[#allocation5 + $0x4e0] sm:$0xff]
        %v546 = vld [vmem:[#allocation5 + $0x4e8] sm:$0xff]
        %v547 = vld [vmem:[#allocation5 + $0x4f0] sm:$0xff]
        %v548 = vld [vmem:[#allocation5 + $0x4f8] sm:$0xff]
        %v549 = vld [vmem:[#allocation5 + $0x500] sm:$0xff]
        %v550 = vld [vmem:[#allocation5 + $0x508] sm:$0xff]
        %v551 = vld [vmem:[#allocation5 + $0x510] sm:$0xff]
        %v552 = vld [vmem:[#allocation5 + $0x518] sm:$0xff]
        %v553 = vld [vmem:[#allocation5 + $0x520] sm:$0xff]
        %v554 = vld [vmem:[#allocation5 + $0x528] sm:$0xff]
        %v555 = vld [vmem:[#allocation5 + $0x530] sm:$0xff]
        %v556 = vld [vmem:[#allocation5 + $0x538] sm:$0xff]
        %v557 = vld [vmem:[#allocation5 + $0x540] sm:$0xff]
        %v558 = vld [vmem:[#allocation5 + $0x548] sm:$0xff]
        %v559 = vld [vmem:[#allocation5 + $0x550] sm:$0xff]
        %v560 = vld [vmem:[#allocation5 + $0x558] sm:$0xff]
        %v561 = vld [vmem:[#allocation5 + $0x560] sm:$0xff]
        %v562 = vld [vmem:[#allocation5 + $0x568] sm:$0xff]
        %v563 = vld [vmem:[#allocation5 + $0x570] sm:$0xff]
        %v564 = vld [vmem:[#allocation5 + $0x578] sm:$0xff]
        %v565 = vld [vmem:[#allocation5 + $0x580] sm:$0xff]
        %v566 = vld [vmem:[#allocation5 + $0x588] sm:$0xff]
        %v567 = vld [vmem:[#allocation5 + $0x590] sm:$0xff]
        %v568 = vld [vmem:[#allocation5 + $0x598] sm:$0xff]
        %v569 = vld [vmem:[#allocation5 + $0x5a0] sm:$0xff]
        %v570 = vld [vmem:[#allocation5 + $0x5a8] sm:$0xff]
        %v571 = vld [vmem:[#allocation5 + $0x5b0] sm:$0xff]
        %v572 = vld [vmem:[#allocation5 + $0x5b8] sm:$0xff]
        %v573 = vld [vmem:[#allocation5 + $0x5c0] sm:$0xff]
        %v574 = vld [vmem:[#allocation5 + $0x5c8] sm:$0xff]
        %v575 = vld [vmem:[#allocation5 + $0x5d0] sm:$0xff]
        %v576 = vld [vmem:[#allocation5 + $0x5d8] sm:$0xff]
        %v577 = vld [vmem:[#allocation5 + $0x5e0] sm:$0xff]
        %v578 = vld [vmem:[#allocation5 + $0x5e8] sm:$0xff]
        %v579 = vld [vmem:[#allocation5 + $0x5f0] sm:$0xff]
        %v580 = vld [vmem:[#allocation5 + $0x5f8] sm:$0xff]
        %v581 = vld [vmem:[#allocation5 + $0x600] sm:$0xff]
        %v582 = vld [vmem:[#allocation5 + $0x608] sm:$0xff]
        %v583 = vld [vmem:[#allocation5 + $0x610] sm:$0xff]
        %v584 = vld [vmem:[#allocation5 + $0x618] sm:$0xff]
        %v585 = vld [vmem:[#allocation5 + $0x620] sm:$0xff]
        %v586 = vld [vmem:[#allocation5 + $0x628] sm:$0xff]
        %v587 = vld [vmem:[#allocation5 + $0x630] sm:$0xff]
        %v588 = vld [vmem:[#allocation5 + $0x638] sm:$0xff]
        %v589 = vld [vmem:[#allocation5 + $0x640] sm:$0xff]
        %v590 = vld [vmem:[#allocation5 + $0x648] sm:$0xff]
        %v591 = vld [vmem:[#allocation5 + $0x650] sm:$0xff]
        %v592 = vld [vmem:[#allocation5 + $0x658] sm:$0xff]
        %v593 = vld [vmem:[#allocation5 + $0x660] sm:$0xff]
        %v594 = vld [vmem:[#allocation5 + $0x668] sm:$0xff]
        %v595 = vld [vmem:[#allocation5 + $0x670] sm:$0xff]
        %v596 = vld [vmem:[#allocation5 + $0x678] sm:$0xff]
        %v597 = vld [vmem:[#allocation5 + $0x680] sm:$0xff]
        %v598 = vld [vmem:[#allocation5 + $0x688] sm:$0xff]
        %v599 = vld [vmem:[#allocation5 + $0x690] sm:$0xff]
        %v600 = vld [vmem:[#allocation5 + $0x698] sm:$0xff]
        %v601 = vld [vmem:[#allocation5 + $0x6a0] sm:$0xff]
        %v602 = vld [vmem:[#allocation5 + $0x6a8] sm:$0xff]
        %v603 = vld [vmem:[#allocation5 + $0x6b0] sm:$0xff]
        %v604 = vld [vmem:[#allocation5 + $0x6b8] sm:$0xff]
        %v605 = vld [vmem:[#allocation5 + $0x6c0] sm:$0xff]
        %v606 = vld [vmem:[#allocation5 + $0x6c8] sm:$0xff]
        %v607 = vld [vmem:[#allocation5 + $0x6d0] sm:$0xff]
        %v608 = vld [vmem:[#allocation5 + $0x6d8] sm:$0xff]
        %v609 = vld [vmem:[#allocation5 + $0x6e0] sm:$0xff]
        %v610 = vld [vmem:[#allocation5 + $0x6e8] sm:$0xff]
        %v611 = vld [vmem:[#allocation5 + $0x6f0] sm:$0xff]
        %v612 = vld [vmem:[#allocation5 + $0x6f8] sm:$0xff]
        %v613 = vld [vmem:[#allocation5 + $0x700] sm:$0xff]
        %v614 = vld [vmem:[#allocation5 + $0x708] sm:$0xff]
        %v615 = vld [vmem:[#allocation5 + $0x710] sm:$0xff]
        %v616 = vld [vmem:[#allocation5 + $0x718] sm:$0xff]
        %v617 = vld [vmem:[#allocation5 + $0x720] sm:$0xff]
        %v618 = vld [vmem:[#allocation5 + $0x728] sm:$0xff]
        %v619 = vld [vmem:[#allocation5 + $0x730] sm:$0xff]
        %v620 = vld [vmem:[#allocation5 + $0x738] sm:$0xff]
        %v621 = vld [vmem:[#allocation5 + $0x740] sm:$0xff]
        %v622 = vld [vmem:[#allocation5 + $0x748] sm:$0xff]
        %v623 = vld [vmem:[#allocation5 + $0x750] sm:$0xff]
        %v624 = vld [vmem:[#allocation5 + $0x758] sm:$0xff]
        %v625 = vld [vmem:[#allocation5 + $0x760] sm:$0xff]
        %v626 = vld [vmem:[#allocation5 + $0x768] sm:$0xff]
        %v627 = vld [vmem:[#allocation5 + $0x770] sm:$0xff]
        %v628 = vld [vmem:[#allocation5 + $0x778] sm:$0xff]
        %v629 = vld [vmem:[#allocation5 + $0x780] sm:$0xff]
        %v630 = vld [vmem:[#allocation5 + $0x788] sm:$0xff]
        %v631 = vld [vmem:[#allocation5 + $0x790] sm:$0xff]
        %v632 = vld [vmem:[#allocation5 + $0x798] sm:$0xff]
        %v633 = vld [vmem:[#allocation5 + $0x7a0] sm:$0xff]
        %v634 = vld [vmem:[#allocation5 + $0x7a8] sm:$0xff]
        %v635 = vld [vmem:[#allocation5 + $0x7b0] sm:$0xff]
        %v636 = vld [vmem:[#allocation5 + $0x7b8] sm:$0xff]
        %v637 = vld [vmem:[#allocation5 + $0x7c0] sm:$0xff]
        %v638 = vld [vmem:[#allocation5 + $0x7c8] sm:$0xff]
        %v639 = vld [vmem:[#allocation5 + $0x7d0] sm:$0xff]
        %v640 = vld [vmem:[#allocation5 + $0x7d8] sm:$0xff]
        %v641 = vld [vmem:[#allocation5 + $0x7e0] sm:$0xff]
        %v642 = vld [vmem:[#allocation5 + $0x7e8] sm:$0xff]
        %v643 = vld [vmem:[#allocation5 + $0x7f0] sm:$0xff]
        %v644 = vld [vmem:[#allocation5 + $0x7f8] sm:$0xff]
        %v645 = vld [vmem:[#allocation5 + $0x800] sm:$0xff]
        %v646 = vld [vmem:[#allocation5 + $0x808] sm:$0xff]
        %v647 = vld [vmem:[#allocation5 + $0x810] sm:$0xff]
        %v648 = vld [vmem:[#allocation5 + $0x818] sm:$0xff]
        %v649 = vld [vmem:[#allocation5 + $0x820] sm:$0xff]
        %v650 = vld [vmem:[#allocation5 + $0x828] sm:$0xff]
        %v651 = vld [vmem:[#allocation5 + $0x830] sm:$0xff]
        %v652 = vld [vmem:[#allocation5 + $0x838] sm:$0xff]
        %v653 = vld [vmem:[#allocation5 + $0x840] sm:$0xff]
        %v654 = vld [vmem:[#allocation5 + $0x848] sm:$0xff]
        %v655 = vld [vmem:[#allocation5 + $0x850] sm:$0xff]
        %v656 = vld [vmem:[#allocation5 + $0x858] sm:$0xff]
        %v657 = vld [vmem:[#allocation5 + $0x860] sm:$0xff]
        %v658 = vld [vmem:[#allocation5 + $0x868] sm:$0xff]
        %v659 = vld [vmem:[#allocation5 + $0x870] sm:$0xff]
        %v660 = vld [vmem:[#allocation5 + $0x878] sm:$0xff]
        %v661 = vld [vmem:[#allocation5 + $0x880] sm:$0xff]
        %v662 = vld [vmem:[#allocation5 + $0x888] sm:$0xff]
        %v663 = vld [vmem:[#allocation5 + $0x890] sm:$0xff]
        %v664 = vld [vmem:[#allocation5 + $0x898] sm:$0xff]
        %v665 = vld [vmem:[#allocation5 + $0x8a0] sm:$0xff]
        %v666 = vld [vmem:[#allocation5 + $0x8a8] sm:$0xff]
        %v667 = vld [vmem:[#allocation5 + $0x8b0] sm:$0xff]
        %v668 = vld [vmem:[#allocation5 + $0x8b8] sm:$0xff]
        %v669 = vld [vmem:[#allocation5 + $0x8c0] sm:$0xff]
        %v670 = vld [vmem:[#allocation5 + $0x8c8] sm:$0xff]
        %v671 = vld [vmem:[#allocation5 + $0x8d0] sm:$0xff]
        %v672 = vld [vmem:[#allocation5 + $0x8d8] sm:$0xff]
        %v673 = vld [vmem:[#allocation5 + $0x8e0] sm:$0xff]
        %v674 = vld [vmem:[#allocation5 + $0x8e8] sm:$0xff]
        %v675 = vld [vmem:[#allocation5 + $0x8f0] sm:$0xff]
        %v676 = vld [vmem:[#allocation5 + $0x8f8] sm:$0xff]
        %v677 = vld [vmem:[#allocation7] sm:$0x3f]
        %v679 = vlaneseq
        %v680 = vshrl.u32 %v679, 7
        %v681 = vsub.s32 0, %v680
        %v682 = vrot.slane %v677, %v681
        %v683 = vlaneseq
        %v684 = vshrl.u32 %v683, 7
        %v685 = vsub.s32 1, %v684
        %v686 = vrot.slane %v677, %v685
        %v687 = vlaneseq
        %v688 = vshrl.u32 %v687, 7
        %v689 = vsub.s32 2, %v688
        %v690 = vrot.slane %v677, %v689
        %v691 = vlaneseq
        %v692 = vshrl.u32 %v691, 7
        %v693 = vsub.s32 3, %v692
        %v694 = vrot.slane %v677, %v693
        %v695 = vlaneseq
        %v696 = vshrl.u32 %v695, 7
        %v697 = vsub.s32 4, %v696
        %v698 = vrot.slane %v677, %v697
        %v699 = vlaneseq
        %v700 = vshrl.u32 %v699, 7
        %v701 = vsub.s32 5, %v700
        %v702 = vrot.slane %v677, %v701
        %v997 = vunpack.c.l.b16 %v389
        %v998 = vunpack.c.h.b16 %v389
        %v999 = vunpack.c.l.b16 %v390
        %v1000 = vunpack.c.h.b16 %v390
        %v1001 = vunpack.c.l.b16 %v391
        %v1002 = vunpack.c.h.b16 %v391
        %v1003 = vunpack.c.l.b16 %v392
        %v1004 = vunpack.c.h.b16 %v392
        %v1005 = vunpack.c.l.b16 %v393
        %v1006 = vunpack.c.h.b16 %v393
        %v1007 = vunpack.c.l.b16 %v394
        %v1008 = vunpack.c.h.b16 %v394
        %v1009 = vunpack.c.l.b16 %v395
        %v1010 = vunpack.c.h.b16 %v395
        %v1011 = vunpack.c.l.b16 %v396
        %v1012 = vunpack.c.h.b16 %v396
        %v1013 = vunpack.c.l.b16 %v397
        %v1014 = vunpack.c.h.b16 %v397
        %v1015 = vunpack.c.l.b16 %v398
        %v1016 = vunpack.c.h.b16 %v398
        %v1017 = vunpack.c.l.b16 %v399
        %v1018 = vunpack.c.h.b16 %v399
        %v1019 = vunpack.c.l.b16 %v400
        %v1020 = vunpack.c.h.b16 %v400
        %v1021 = vunpack.c.l.b16 %v401
        %v1022 = vunpack.c.h.b16 %v401
        %v1023 = vunpack.c.l.b16 %v402
        %v1024 = vunpack.c.h.b16 %v402
        %v1025 = vunpack.c.l.b16 %v403
        %v1026 = vunpack.c.h.b16 %v403
        %v1027 = vunpack.c.l.b16 %v404
        %v1028 = vunpack.c.h.b16 %v404
        %v1029 = vunpack.c.l.b16 %v405
        %v1030 = vunpack.c.h.b16 %v405
        %v1031 = vunpack.c.l.b16 %v406
        %v1032 = vunpack.c.h.b16 %v406
        %v1033 = vunpack.c.l.b16 %v407
        %v1034 = vunpack.c.h.b16 %v407
        %v1035 = vunpack.c.l.b16 %v408
        %v1036 = vunpack.c.h.b16 %v408
        %v1037 = vunpack.c.l.b16 %v409
        %v1038 = vunpack.c.h.b16 %v409
        %v1039 = vunpack.c.l.b16 %v410
        %v1040 = vunpack.c.h.b16 %v410
        %v1041 = vunpack.c.l.b16 %v411
        %v1042 = vunpack.c.h.b16 %v411
        %v1043 = vunpack.c.l.b16 %v412
        %v1044 = vunpack.c.h.b16 %v412
        %v1045 = vunpack.c.l.b16 %v413
        %v1046 = vunpack.c.h.b16 %v413
        %v1047 = vunpack.c.l.b16 %v414
        %v1048 = vunpack.c.h.b16 %v414
        %v1049 = vunpack.c.l.b16 %v415
        %v1050 = vunpack.c.h.b16 %v415
        %v1051 = vunpack.c.l.b16 %v416
        %v1052 = vunpack.c.h.b16 %v416
        %v1053 = vunpack.c.l.b16 %v417
        %v1054 = vunpack.c.h.b16 %v417
        %v1055 = vunpack.c.l.b16 %v418
        %v1056 = vunpack.c.h.b16 %v418
        %v1057 = vunpack.c.l.b16 %v419
        %v1058 = vunpack.c.h.b16 %v419
        %v1059 = vunpack.c.l.b16 %v420
        %v1060 = vunpack.c.h.b16 %v420
        %v1061 = vunpack.c.l.b16 %v421
        %v1062 = vunpack.c.h.b16 %v421
        %v1063 = vunpack.c.l.b16 %v422
        %v1064 = vunpack.c.h.b16 %v422
        %v1065 = vunpack.c.l.b16 %v423
        %v1066 = vunpack.c.h.b16 %v423
        %v1067 = vunpack.c.l.b16 %v424
        %v1068 = vunpack.c.h.b16 %v424
        %v1069 = vunpack.c.l.b16 %v425
        %v1070 = vunpack.c.h.b16 %v425
        %v1071 = vunpack.c.l.b16 %v426
        %v1072 = vunpack.c.h.b16 %v426
        %v1073 = vunpack.c.l.b16 %v427
        %v1074 = vunpack.c.h.b16 %v427
        %v1075 = vunpack.c.l.b16 %v428
        %v1076 = vunpack.c.h.b16 %v428
        %v1077 = vunpack.c.l.b16 %v429
        %v1078 = vunpack.c.h.b16 %v429
        %v1079 = vunpack.c.l.b16 %v430
        %v1080 = vunpack.c.h.b16 %v430
        %v1081 = vunpack.c.l.b16 %v431
        %v1082 = vunpack.c.h.b16 %v431
        %v1083 = vunpack.c.l.b16 %v432
        %v1084 = vunpack.c.h.b16 %v432
        %v1085 = vunpack.c.l.b16 %v433
        %v1086 = vunpack.c.h.b16 %v433
        %v1087 = vunpack.c.l.b16 %v434
        %v1088 = vunpack.c.h.b16 %v434
        %v1089 = vunpack.c.l.b16 %v435
        %v1090 = vunpack.c.h.b16 %v435
        %v1091 = vunpack.c.l.b16 %v436
        %v1092 = vunpack.c.h.b16 %v436
        %v1093 = vunpack.c.l.b16 %v437
        %v1094 = vunpack.c.h.b16 %v437
        %v1095 = vunpack.c.l.b16 %v438
        %v1096 = vunpack.c.h.b16 %v438
        %v1097 = vunpack.c.l.b16 %v439
        %v1098 = vunpack.c.h.b16 %v439
        %v1099 = vunpack.c.l.b16 %v440
        %v1100 = vunpack.c.h.b16 %v440
        %v1101 = vunpack.c.l.b16 %v441
        %v1102 = vunpack.c.h.b16 %v441
        %v1103 = vunpack.c.l.b16 %v442
        %v1104 = vunpack.c.h.b16 %v442
        %v1105 = vunpack.c.l.b16 %v443
        %v1106 = vunpack.c.h.b16 %v443
        %v1107 = vunpack.c.l.b16 %v444
        %v1108 = vunpack.c.h.b16 %v444
        %v1109 = vunpack.c.l.b16 %v445
        %v1110 = vunpack.c.h.b16 %v445
        %v1111 = vunpack.c.l.b16 %v446
        %v1112 = vunpack.c.h.b16 %v446
        %v1113 = vunpack.c.l.b16 %v447
        %v1114 = vunpack.c.h.b16 %v447
        %v1115 = vunpack.c.l.b16 %v448
        %v1116 = vunpack.c.h.b16 %v448
        %v1117 = vunpack.c.l.b16 %v449
        %v1118 = vunpack.c.h.b16 %v449
        %v1119 = vunpack.c.l.b16 %v450
        %v1120 = vunpack.c.h.b16 %v450
        %v1121 = vunpack.c.l.b16 %v451
        %v1122 = vunpack.c.h.b16 %v451
        %v1123 = vunpack.c.l.b16 %v452
        %v1124 = vunpack.c.h.b16 %v452
        %v1125 = vunpack.c.l.b16 %v453
        %v1126 = vunpack.c.h.b16 %v453
        %v1127 = vunpack.c.l.b16 %v454
        %v1128 = vunpack.c.h.b16 %v454
        %v1129 = vunpack.c.l.b16 %v455
        %v1130 = vunpack.c.h.b16 %v455
        %v1131 = vunpack.c.l.b16 %v456
        %v1132 = vunpack.c.h.b16 %v456
        %v1133 = vunpack.c.l.b16 %v457
        %v1134 = vunpack.c.h.b16 %v457
        %v1135 = vunpack.c.l.b16 %v458
        %v1136 = vunpack.c.h.b16 %v458
        %v1137 = vunpack.c.l.b16 %v459
        %v1138 = vunpack.c.h.b16 %v459
        %v1139 = vunpack.c.l.b16 %v460
        %v1140 = vunpack.c.h.b16 %v460
        %v1141 = vunpack.c.l.b16 %v461
        %v1142 = vunpack.c.h.b16 %v461
        %v1143 = vunpack.c.l.b16 %v462
        %v1144 = vunpack.c.h.b16 %v462
        %v1145 = vunpack.c.l.b16 %v463
        %v1146 = vunpack.c.h.b16 %v463
        %v1147 = vunpack.c.l.b16 %v464
        %v1148 = vunpack.c.h.b16 %v464
        %v1149 = vunpack.c.l.b16 %v465
        %v1150 = vunpack.c.h.b16 %v465
        %v1151 = vunpack.c.l.b16 %v466
        %v1152 = vunpack.c.h.b16 %v466
        %v1153 = vunpack.c.l.b16 %v467
        %v1154 = vunpack.c.h.b16 %v467
        %v1155 = vunpack.c.l.b16 %v468
        %v1156 = vunpack.c.h.b16 %v468
        %v1157 = vunpack.c.l.b16 %v469
        %v1158 = vunpack.c.h.b16 %v469
        %v1159 = vunpack.c.l.b16 %v470
        %v1160 = vunpack.c.h.b16 %v470
        %v1161 = vunpack.c.l.b16 %v471
        %v1162 = vunpack.c.h.b16 %v471
        %v1163 = vunpack.c.l.b16 %v472
        %v1164 = vunpack.c.h.b16 %v472
        %v1165 = vunpack.c.l.b16 %v473
        %v1166 = vunpack.c.h.b16 %v473
        %v1167 = vunpack.c.l.b16 %v474
        %v1168 = vunpack.c.h.b16 %v474
        %v1169 = vunpack.c.l.b16 %v475
        %v1170 = vunpack.c.h.b16 %v475
        %v1171 = vunpack.c.l.b16 %v476
        %v1172 = vunpack.c.h.b16 %v476
        %v1173 = vunpack.c.l.b16 %v477
        %v1174 = vunpack.c.h.b16 %v477
        %v1175 = vunpack.c.l.b16 %v478
        %v1176 = vunpack.c.h.b16 %v478
        %v1177 = vunpack.c.l.b16 %v479
        %v1178 = vunpack.c.h.b16 %v479
        %v1179 = vunpack.c.l.b16 %v480
        %v1180 = vunpack.c.h.b16 %v480
        %v1181 = vunpack.c.l.b16 %v481
        %v1182 = vunpack.c.h.b16 %v481
        %v1183 = vunpack.c.l.b16 %v482
        %v1184 = vunpack.c.h.b16 %v482
        %v1185 = vunpack.c.l.b16 %v483
        %v1186 = vunpack.c.h.b16 %v483
        %v1187 = vunpack.c.l.b16 %v484
        %v1188 = vunpack.c.h.b16 %v484
        %v1189 = vunpack.c.l.b16 %v485
        %v1190 = vunpack.c.h.b16 %v485
        %v1191 = vunpack.c.l.b16 %v486
        %v1192 = vunpack.c.h.b16 %v486
        %v1193 = vunpack.c.l.b16 %v487
        %v1194 = vunpack.c.h.b16 %v487
        %v1195 = vunpack.c.l.b16 %v488
        %v1196 = vunpack.c.h.b16 %v488
        %v1197 = vunpack.c.l.b16 %v489
        %v1198 = vunpack.c.h.b16 %v489
        %v1199 = vunpack.c.l.b16 %v490
        %v1200 = vunpack.c.h.b16 %v490
        %v1201 = vunpack.c.l.b16 %v491
        %v1202 = vunpack.c.h.b16 %v491
        %v1203 = vunpack.c.l.b16 %v492
        %v1204 = vunpack.c.h.b16 %v492
        %v1205 = vunpack.c.l.b16 %v493
        %v1206 = vunpack.c.h.b16 %v493
        %v1207 = vunpack.c.l.b16 %v494
        %v1208 = vunpack.c.h.b16 %v494
        %v1209 = vunpack.c.l.b16 %v495
        %v1210 = vunpack.c.h.b16 %v495
        %v1211 = vunpack.c.l.b16 %v496
        %v1212 = vunpack.c.h.b16 %v496
        %v1213 = vunpack.c.l.b16 %v497
        %v1214 = vunpack.c.h.b16 %v497
        %v1215 = vunpack.c.l.b16 %v498
        %v1216 = vunpack.c.h.b16 %v498
        %v1217 = vunpack.c.l.b16 %v499
        %v1218 = vunpack.c.h.b16 %v499
        %v1219 = vunpack.c.l.b16 %v500
        %v1220 = vunpack.c.h.b16 %v500
        %v1221 = vunpack.c.l.b16 %v501
        %v1222 = vunpack.c.h.b16 %v501
        %v1223 = vunpack.c.l.b16 %v502
        %v1224 = vunpack.c.h.b16 %v502
        %v1225 = vunpack.c.l.b16 %v503
        %v1226 = vunpack.c.h.b16 %v503
        %v1227 = vunpack.c.l.b16 %v504
        %v1228 = vunpack.c.h.b16 %v504
        %v1229 = vunpack.c.l.b16 %v505
        %v1230 = vunpack.c.h.b16 %v505
        %v1231 = vunpack.c.l.b16 %v506
        %v1232 = vunpack.c.h.b16 %v506
        %v1233 = vunpack.c.l.b16 %v507
        %v1234 = vunpack.c.h.b16 %v507
        %v1235 = vunpack.c.l.b16 %v508
        %v1236 = vunpack.c.h.b16 %v508
        %v1237 = vunpack.c.l.b16 %v509
        %v1238 = vunpack.c.h.b16 %v509
        %v1239 = vunpack.c.l.b16 %v510
        %v1240 = vunpack.c.h.b16 %v510
        %v1241 = vunpack.c.l.b16 %v511
        %v1242 = vunpack.c.h.b16 %v511
        %v1243 = vunpack.c.l.b16 %v512
        %v1244 = vunpack.c.h.b16 %v512
        %v1245 = vunpack.c.l.b16 %v513
        %v1246 = vunpack.c.h.b16 %v513
        %v1247 = vunpack.c.l.b16 %v514
        %v1248 = vunpack.c.h.b16 %v514
        %v1249 = vunpack.c.l.b16 %v515
        %v1250 = vunpack.c.h.b16 %v515
        %v1251 = vunpack.c.l.b16 %v516
        %v1252 = vunpack.c.h.b16 %v516
        %v1253 = vunpack.c.l.b16 %v517
        %v1254 = vunpack.c.h.b16 %v517
        %v1255 = vunpack.c.l.b16 %v518
        %v1256 = vunpack.c.h.b16 %v518
        %v1257 = vunpack.c.l.b16 %v519
        %v1258 = vunpack.c.h.b16 %v519
        %v1259 = vunpack.c.l.b16 %v520
        %v1260 = vunpack.c.h.b16 %v520
        %v1261 = vunpack.c.l.b16 %v521
        %v1262 = vunpack.c.h.b16 %v521
        %v1263 = vunpack.c.l.b16 %v522
        %v1264 = vunpack.c.h.b16 %v522
        %v1265 = vunpack.c.l.b16 %v523
        %v1266 = vunpack.c.h.b16 %v523
        %v1267 = vunpack.c.l.b16 %v524
        %v1268 = vunpack.c.h.b16 %v524
        %v1269 = vunpack.c.l.b16 %v525
        %v1270 = vunpack.c.h.b16 %v525
        %v1271 = vunpack.c.l.b16 %v526
        %v1272 = vunpack.c.h.b16 %v526
        %v1273 = vunpack.c.l.b16 %v527
        %v1274 = vunpack.c.h.b16 %v527
        %v1275 = vunpack.c.l.b16 %v528
        %v1276 = vunpack.c.h.b16 %v528
        %v1277 = vunpack.c.l.b16 %v529
        %v1278 = vunpack.c.h.b16 %v529
        %v1279 = vunpack.c.l.b16 %v530
        %v1280 = vunpack.c.h.b16 %v530
        %v1281 = vunpack.c.l.b16 %v531
        %v1282 = vunpack.c.h.b16 %v531
        %v1283 = vunpack.c.l.b16 %v532
        %v1284 = vunpack.c.h.b16 %v532
        %v1285 = vunpack.c.l.b16 %v533
        %v1286 = vunpack.c.h.b16 %v533
        %v1287 = vunpack.c.l.b16 %v534
        %v1288 = vunpack.c.h.b16 %v534
        %v1289 = vunpack.c.l.b16 %v535
        %v1290 = vunpack.c.h.b16 %v535
        %v1291 = vunpack.c.l.b16 %v536
        %v1292 = vunpack.c.h.b16 %v536
        %v1293 = vunpack.c.l.b16 %v537
        %v1294 = vunpack.c.h.b16 %v537
        %v1295 = vunpack.c.l.b16 %v538
        %v1296 = vunpack.c.h.b16 %v538
        %v1297 = vunpack.c.l.b16 %v539
        %v1298 = vunpack.c.h.b16 %v539
        %v1299 = vunpack.c.l.b16 %v540
        %v1300 = vunpack.c.h.b16 %v540
        %v1301 = vunpack.c.l.b16 %v541
        %v1302 = vunpack.c.h.b16 %v541
        %v1303 = vunpack.c.l.b16 %v542
        %v1304 = vunpack.c.h.b16 %v542
        %v1305 = vunpack.c.l.b16 %v543
        %v1306 = vunpack.c.h.b16 %v543
        %v1307 = vunpack.c.l.b16 %v544
        %v1308 = vunpack.c.h.b16 %v544
        %v1309 = vunpack.c.l.b16 %v545
        %v1310 = vunpack.c.h.b16 %v545
        %v1311 = vunpack.c.l.b16 %v546
        %v1312 = vunpack.c.h.b16 %v546
        %v1313 = vunpack.c.l.b16 %v547
        %v1314 = vunpack.c.h.b16 %v547
        %v1315 = vunpack.c.l.b16 %v548
        %v1316 = vunpack.c.h.b16 %v548
        %v1317 = vunpack.c.l.b16 %v549
        %v1318 = vunpack.c.h.b16 %v549
        %v1319 = vunpack.c.l.b16 %v550
        %v1320 = vunpack.c.h.b16 %v550
        %v1321 = vunpack.c.l.b16 %v551
        %v1322 = vunpack.c.h.b16 %v551
        %v1323 = vunpack.c.l.b16 %v552
        %v1324 = vunpack.c.h.b16 %v552
        %v1325 = vunpack.c.l.b16 %v553
        %v1326 = vunpack.c.h.b16 %v553
        %v1327 = vunpack.c.l.b16 %v554
        %v1328 = vunpack.c.h.b16 %v554
        %v1329 = vunpack.c.l.b16 %v555
        %v1330 = vunpack.c.h.b16 %v555
        %v1331 = vunpack.c.l.b16 %v556
        %v1332 = vunpack.c.h.b16 %v556
        %v1333 = vunpack.c.l.b16 %v557
        %v1334 = vunpack.c.h.b16 %v557
        %v1335 = vunpack.c.l.b16 %v558
        %v1336 = vunpack.c.h.b16 %v558
        %v1337 = vunpack.c.l.b16 %v559
        %v1338 = vunpack.c.h.b16 %v559
        %v1339 = vunpack.c.l.b16 %v560
        %v1340 = vunpack.c.h.b16 %v560
        %v1341 = vunpack.c.l.b16 %v561
        %v1342 = vunpack.c.h.b16 %v561
        %v1343 = vunpack.c.l.b16 %v562
        %v1344 = vunpack.c.h.b16 %v562
        %v1345 = vunpack.c.l.b16 %v563
        %v1346 = vunpack.c.h.b16 %v563
        %v1347 = vunpack.c.l.b16 %v564
        %v1348 = vunpack.c.h.b16 %v564
        %v1349 = vunpack.c.l.b16 %v565
        %v1350 = vunpack.c.h.b16 %v565
        %v1351 = vunpack.c.l.b16 %v566
        %v1352 = vunpack.c.h.b16 %v566
        %v1353 = vunpack.c.l.b16 %v567
        %v1354 = vunpack.c.h.b16 %v567
        %v1355 = vunpack.c.l.b16 %v568
        %v1356 = vunpack.c.h.b16 %v568
        %v1357 = vunpack.c.l.b16 %v569
        %v1358 = vunpack.c.h.b16 %v569
        %v1359 = vunpack.c.l.b16 %v570
        %v1360 = vunpack.c.h.b16 %v570
        %v1361 = vunpack.c.l.b16 %v571
        %v1362 = vunpack.c.h.b16 %v571
        %v1363 = vunpack.c.l.b16 %v572
        %v1364 = vunpack.c.h.b16 %v572
        %v1365 = vunpack.c.l.b16 %v573
        %v1366 = vunpack.c.h.b16 %v573
        %v1367 = vunpack.c.l.b16 %v574
        %v1368 = vunpack.c.h.b16 %v574
        %v1369 = vunpack.c.l.b16 %v575
        %v1370 = vunpack.c.h.b16 %v575
        %v1371 = vunpack.c.l.b16 %v576
        %v1372 = vunpack.c.h.b16 %v576
        %v1373 = vunpack.c.l.b16 %v577
        %v1374 = vunpack.c.h.b16 %v577
        %v1375 = vunpack.c.l.b16 %v578
        %v1376 = vunpack.c.h.b16 %v578
        %v1377 = vunpack.c.l.b16 %v579
        %v1378 = vunpack.c.h.b16 %v579
        %v1379 = vunpack.c.l.b16 %v580
        %v1380 = vunpack.c.h.b16 %v580
        %v1381 = vunpack.c.l.b16 %v581
        %v1382 = vunpack.c.h.b16 %v581
        %v1383 = vunpack.c.l.b16 %v582
        %v1384 = vunpack.c.h.b16 %v582
        %v1385 = vunpack.c.l.b16 %v583
        %v1386 = vunpack.c.h.b16 %v583
        %v1387 = vunpack.c.l.b16 %v584
        %v1388 = vunpack.c.h.b16 %v584
        %v1389 = vunpack.c.l.b16 %v585
        %v1390 = vunpack.c.h.b16 %v585
        %v1391 = vunpack.c.l.b16 %v586
        %v1392 = vunpack.c.h.b16 %v586
        %v1393 = vunpack.c.l.b16 %v587
        %v1394 = vunpack.c.h.b16 %v587
        %v1395 = vunpack.c.l.b16 %v588
        %v1396 = vunpack.c.h.b16 %v588
        %v1397 = vunpack.c.l.b16 %v589
        %v1398 = vunpack.c.h.b16 %v589
        %v1399 = vunpack.c.l.b16 %v590
        %v1400 = vunpack.c.h.b16 %v590
        %v1401 = vunpack.c.l.b16 %v591
        %v1402 = vunpack.c.h.b16 %v591
        %v1403 = vunpack.c.l.b16 %v592
        %v1404 = vunpack.c.h.b16 %v592
        %v1405 = vunpack.c.l.b16 %v593
        %v1406 = vunpack.c.h.b16 %v593
        %v1407 = vunpack.c.l.b16 %v594
        %v1408 = vunpack.c.h.b16 %v594
        %v1409 = vunpack.c.l.b16 %v595
        %v1410 = vunpack.c.h.b16 %v595
        %v1411 = vunpack.c.l.b16 %v596
        %v1412 = vunpack.c.h.b16 %v596
        %v1413 = vunpack.c.l.b16 %v597
        %v1414 = vunpack.c.h.b16 %v597
        %v1415 = vunpack.c.l.b16 %v598
        %v1416 = vunpack.c.h.b16 %v598
        %v1417 = vunpack.c.l.b16 %v599
        %v1418 = vunpack.c.h.b16 %v599
        %v1419 = vunpack.c.l.b16 %v600
        %v1420 = vunpack.c.h.b16 %v600
        %v1421 = vunpack.c.l.b16 %v601
        %v1422 = vunpack.c.h.b16 %v601
        %v1423 = vunpack.c.l.b16 %v602
        %v1424 = vunpack.c.h.b16 %v602
        %v1425 = vunpack.c.l.b16 %v603
        %v1426 = vunpack.c.h.b16 %v603
        %v1427 = vunpack.c.l.b16 %v604
        %v1428 = vunpack.c.h.b16 %v604
        %v1429 = vunpack.c.l.b16 %v605
        %v1430 = vunpack.c.h.b16 %v605
        %v1431 = vunpack.c.l.b16 %v606
        %v1432 = vunpack.c.h.b16 %v606
        %v1433 = vunpack.c.l.b16 %v607
        %v1434 = vunpack.c.h.b16 %v607
        %v1435 = vunpack.c.l.b16 %v608
        %v1436 = vunpack.c.h.b16 %v608
        %v1437 = vunpack.c.l.b16 %v609
        %v1438 = vunpack.c.h.b16 %v609
        %v1439 = vunpack.c.l.b16 %v610
        %v1440 = vunpack.c.h.b16 %v610
        %v1441 = vunpack.c.l.b16 %v611
        %v1442 = vunpack.c.h.b16 %v611
        %v1443 = vunpack.c.l.b16 %v612
        %v1444 = vunpack.c.h.b16 %v612
        %v1445 = vunpack.c.l.b16 %v613
        %v1446 = vunpack.c.h.b16 %v613
        %v1447 = vunpack.c.l.b16 %v614
        %v1448 = vunpack.c.h.b16 %v614
        %v1449 = vunpack.c.l.b16 %v615
        %v1450 = vunpack.c.h.b16 %v615
        %v1451 = vunpack.c.l.b16 %v616
        %v1452 = vunpack.c.h.b16 %v616
        %v1453 = vunpack.c.l.b16 %v617
        %v1454 = vunpack.c.h.b16 %v617
        %v1455 = vunpack.c.l.b16 %v618
        %v1456 = vunpack.c.h.b16 %v618
        %v1457 = vunpack.c.l.b16 %v619
        %v1458 = vunpack.c.h.b16 %v619
        %v1459 = vunpack.c.l.b16 %v620
        %v1460 = vunpack.c.h.b16 %v620
        %v1461 = vunpack.c.l.b16 %v621
        %v1462 = vunpack.c.h.b16 %v621
        %v1463 = vunpack.c.l.b16 %v622
        %v1464 = vunpack.c.h.b16 %v622
        %v1465 = vunpack.c.l.b16 %v623
        %v1466 = vunpack.c.h.b16 %v623
        %v1467 = vunpack.c.l.b16 %v624
        %v1468 = vunpack.c.h.b16 %v624
        %v1469 = vunpack.c.l.b16 %v625
        %v1470 = vunpack.c.h.b16 %v625
        %v1471 = vunpack.c.l.b16 %v626
        %v1472 = vunpack.c.h.b16 %v626
        %v1473 = vunpack.c.l.b16 %v627
        %v1474 = vunpack.c.h.b16 %v627
        %v1475 = vunpack.c.l.b16 %v628
        %v1476 = vunpack.c.h.b16 %v628
        %v1477 = vunpack.c.l.b16 %v629
        %v1478 = vunpack.c.h.b16 %v629
        %v1479 = vunpack.c.l.b16 %v630
        %v1480 = vunpack.c.h.b16 %v630
        %v1481 = vunpack.c.l.b16 %v631
        %v1482 = vunpack.c.h.b16 %v631
        %v1483 = vunpack.c.l.b16 %v632
        %v1484 = vunpack.c.h.b16 %v632
        %v1485 = vunpack.c.l.b16 %v633
        %v1486 = vunpack.c.h.b16 %v633
        %v1487 = vunpack.c.l.b16 %v634
        %v1488 = vunpack.c.h.b16 %v634
        %v1489 = vunpack.c.l.b16 %v635
        %v1490 = vunpack.c.h.b16 %v635
        %v1491 = vunpack.c.l.b16 %v636
        %v1492 = vunpack.c.h.b16 %v636
        %v1493 = vunpack.c.l.b16 %v637
        %v1494 = vunpack.c.h.b16 %v637
        %v1495 = vunpack.c.l.b16 %v638
        %v1496 = vunpack.c.h.b16 %v638
        %v1497 = vunpack.c.l.b16 %v639
        %v1498 = vunpack.c.h.b16 %v639
        %v1499 = vunpack.c.l.b16 %v640
        %v1500 = vunpack.c.h.b16 %v640
        %v1501 = vunpack.c.l.b16 %v641
        %v1502 = vunpack.c.h.b16 %v641
        %v1503 = vunpack.c.l.b16 %v642
        %v1504 = vunpack.c.h.b16 %v642
        %v1505 = vunpack.c.l.b16 %v643
        %v1506 = vunpack.c.h.b16 %v643
        %v1507 = vunpack.c.l.b16 %v644
        %v1508 = vunpack.c.h.b16 %v644
        %v1509 = vunpack.c.l.b16 %v645
        %v1510 = vunpack.c.h.b16 %v645
        %v1511 = vunpack.c.l.b16 %v646
        %v1512 = vunpack.c.h.b16 %v646
        %v1513 = vunpack.c.l.b16 %v647
        %v1514 = vunpack.c.h.b16 %v647
        %v1515 = vunpack.c.l.b16 %v648
        %v1516 = vunpack.c.h.b16 %v648
        %v1517 = vunpack.c.l.b16 %v649
        %v1518 = vunpack.c.h.b16 %v649
        %v1519 = vunpack.c.l.b16 %v650
        %v1520 = vunpack.c.h.b16 %v650
        %v1521 = vunpack.c.l.b16 %v651
        %v1522 = vunpack.c.h.b16 %v651
        %v1523 = vunpack.c.l.b16 %v652
        %v1524 = vunpack.c.h.b16 %v652
        %v1525 = vunpack.c.l.b16 %v653
        %v1526 = vunpack.c.h.b16 %v653
        %v1527 = vunpack.c.l.b16 %v654
        %v1528 = vunpack.c.h.b16 %v654
        %v1529 = vunpack.c.l.b16 %v655
        %v1530 = vunpack.c.h.b16 %v655
        %v1531 = vunpack.c.l.b16 %v656
        %v1532 = vunpack.c.h.b16 %v656
        %v1533 = vunpack.c.l.b16 %v657
        %v1534 = vunpack.c.h.b16 %v657
        %v1535 = vunpack.c.l.b16 %v658
        %v1536 = vunpack.c.h.b16 %v658
        %v1537 = vunpack.c.l.b16 %v659
        %v1538 = vunpack.c.h.b16 %v659
        %v1539 = vunpack.c.l.b16 %v660
        %v1540 = vunpack.c.h.b16 %v660
        %v1541 = vunpack.c.l.b16 %v661
        %v1542 = vunpack.c.h.b16 %v661
        %v1543 = vunpack.c.l.b16 %v662
        %v1544 = vunpack.c.h.b16 %v662
        %v1545 = vunpack.c.l.b16 %v663
        %v1546 = vunpack.c.h.b16 %v663
        %v1547 = vunpack.c.l.b16 %v664
        %v1548 = vunpack.c.h.b16 %v664
        %v1549 = vunpack.c.l.b16 %v665
        %v1550 = vunpack.c.h.b16 %v665
        %v1551 = vunpack.c.l.b16 %v666
        %v1552 = vunpack.c.h.b16 %v666
        %v1553 = vunpack.c.l.b16 %v667
        %v1554 = vunpack.c.h.b16 %v667
        %v1555 = vunpack.c.l.b16 %v668
        %v1556 = vunpack.c.h.b16 %v668
        %v1557 = vunpack.c.l.b16 %v669
        %v1558 = vunpack.c.h.b16 %v669
        %v1559 = vunpack.c.l.b16 %v670
        %v1560 = vunpack.c.h.b16 %v670
        %v1561 = vunpack.c.l.b16 %v671
        %v1562 = vunpack.c.h.b16 %v671
        %v1563 = vunpack.c.l.b16 %v672
        %v1564 = vunpack.c.h.b16 %v672
        %v1565 = vunpack.c.l.b16 %v673
        %v1566 = vunpack.c.h.b16 %v673
        %v1567 = vunpack.c.l.b16 %v674
        %v1568 = vunpack.c.h.b16 %v674
        %v1569 = vunpack.c.l.b16 %v675
        %v1570 = vunpack.c.h.b16 %v675
        %v1571 = vunpack.c.l.b16 %v676
        %v1572 = vunpack.c.h.b16 %v676
        %v1573 = vpack.c.b16 %v1003, %v997
        %v1574 = vpack.c.b16 %v1004, %v998
        %v1575 = vpack.c.b16 %v1005, %v999
        %v1576 = vpack.c.b16 %v1006, %v1000
        %v1577 = vpack.c.b16 %v1007, %v1001
        %v1578 = vpack.c.b16 %v1008, %v1002
        %v1579 = vpack.c.b16 %v1015, %v1009
        %v1580 = vpack.c.b16 %v1016, %v1010
        %v1581 = vpack.c.b16 %v1017, %v1011
        %v1582 = vpack.c.b16 %v1018, %v1012
        %v1583 = vpack.c.b16 %v1019, %v1013
        %v1584 = vpack.c.b16 %v1020, %v1014
        %v1585 = vpack.c.b16 %v1027, %v1021
        %v1586 = vpack.c.b16 %v1028, %v1022
        %v1587 = vpack.c.b16 %v1029, %v1023
        %v1588 = vpack.c.b16 %v1030, %v1024
        %v1589 = vpack.c.b16 %v1031, %v1025
        %v1590 = vpack.c.b16 %v1032, %v1026
        %v1591 = vpack.c.b16 %v1039, %v1033
        %v1592 = vpack.c.b16 %v1040, %v1034
        %v1593 = vpack.c.b16 %v1041, %v1035
        %v1594 = vpack.c.b16 %v1042, %v1036
        %v1595 = vpack.c.b16 %v1043, %v1037
        %v1596 = vpack.c.b16 %v1044, %v1038
        %v1597 = vpack.c.b16 %v1051, %v1045
        %v1598 = vpack.c.b16 %v1052, %v1046
        %v1599 = vpack.c.b16 %v1053, %v1047
        %v1600 = vpack.c.b16 %v1054, %v1048
        %v1601 = vpack.c.b16 %v1055, %v1049
        %v1602 = vpack.c.b16 %v1056, %v1050
        %v1603 = vpack.c.b16 %v1063, %v1057
        %v1604 = vpack.c.b16 %v1064, %v1058
        %v1605 = vpack.c.b16 %v1065, %v1059
        %v1606 = vpack.c.b16 %v1066, %v1060
        %v1607 = vpack.c.b16 %v1067, %v1061
        %v1608 = vpack.c.b16 %v1068, %v1062
        %v1609 = vpack.c.b16 %v1075, %v1069
        %v1610 = vpack.c.b16 %v1076, %v1070
        %v1611 = vpack.c.b16 %v1077, %v1071
        %v1612 = vpack.c.b16 %v1078, %v1072
        %v1613 = vpack.c.b16 %v1079, %v1073
        %v1614 = vpack.c.b16 %v1080, %v1074
        %v1615 = vpack.c.b16 %v1087, %v1081
        %v1616 = vpack.c.b16 %v1088, %v1082
        %v1617 = vpack.c.b16 %v1089, %v1083
        %v1618 = vpack.c.b16 %v1090, %v1084
        %v1619 = vpack.c.b16 %v1091, %v1085
        %v1620 = vpack.c.b16 %v1092, %v1086
        %v1621 = vpack.c.b16 %v1099, %v1093
        %v1622 = vpack.c.b16 %v1100, %v1094
        %v1623 = vpack.c.b16 %v1101, %v1095
        %v1624 = vpack.c.b16 %v1102, %v1096
        %v1625 = vpack.c.b16 %v1103, %v1097
        %v1626 = vpack.c.b16 %v1104, %v1098
        %v1627 = vpack.c.b16 %v1111, %v1105
        %v1628 = vpack.c.b16 %v1112, %v1106
        %v1629 = vpack.c.b16 %v1113, %v1107
        %v1630 = vpack.c.b16 %v1114, %v1108
        %v1631 = vpack.c.b16 %v1115, %v1109
        %v1632 = vpack.c.b16 %v1116, %v1110
        %v1633 = vpack.c.b16 %v1123, %v1117
        %v1634 = vpack.c.b16 %v1124, %v1118
        %v1635 = vpack.c.b16 %v1125, %v1119
        %v1636 = vpack.c.b16 %v1126, %v1120
        %v1637 = vpack.c.b16 %v1127, %v1121
        %v1638 = vpack.c.b16 %v1128, %v1122
        %v1639 = vpack.c.b16 %v1135, %v1129
        %v1640 = vpack.c.b16 %v1136, %v1130
        %v1641 = vpack.c.b16 %v1137, %v1131
        %v1642 = vpack.c.b16 %v1138, %v1132
        %v1643 = vpack.c.b16 %v1139, %v1133
        %v1644 = vpack.c.b16 %v1140, %v1134
        %v1645 = vpack.c.b16 %v1147, %v1141
        %v1646 = vpack.c.b16 %v1148, %v1142
        %v1647 = vpack.c.b16 %v1149, %v1143
        %v1648 = vpack.c.b16 %v1150, %v1144
        %v1649 = vpack.c.b16 %v1151, %v1145
        %v1650 = vpack.c.b16 %v1152, %v1146
        %v1651 = vpack.c.b16 %v1159, %v1153
        %v1652 = vpack.c.b16 %v1160, %v1154
        %v1653 = vpack.c.b16 %v1161, %v1155
        %v1654 = vpack.c.b16 %v1162, %v1156
        %v1655 = vpack.c.b16 %v1163, %v1157
        %v1656 = vpack.c.b16 %v1164, %v1158
        %v1657 = vpack.c.b16 %v1171, %v1165
        %v1658 = vpack.c.b16 %v1172, %v1166
        %v1659 = vpack.c.b16 %v1173, %v1167
        %v1660 = vpack.c.b16 %v1174, %v1168
        %v1661 = vpack.c.b16 %v1175, %v1169
        %v1662 = vpack.c.b16 %v1176, %v1170
        %v1663 = vpack.c.b16 %v1183, %v1177
        %v1664 = vpack.c.b16 %v1184, %v1178
        %v1665 = vpack.c.b16 %v1185, %v1179
        %v1666 = vpack.c.b16 %v1186, %v1180
        %v1667 = vpack.c.b16 %v1187, %v1181
        %v1668 = vpack.c.b16 %v1188, %v1182
        %v1669 = vpack.c.b16 %v1195, %v1189
        %v1670 = vpack.c.b16 %v1196, %v1190
        %v1671 = vpack.c.b16 %v1197, %v1191
        %v1672 = vpack.c.b16 %v1198, %v1192
        %v1673 = vpack.c.b16 %v1199, %v1193
        %v1674 = vpack.c.b16 %v1200, %v1194
        %v1675 = vpack.c.b16 %v1207, %v1201
        %v1676 = vpack.c.b16 %v1208, %v1202
        %v1677 = vpack.c.b16 %v1209, %v1203
        %v1678 = vpack.c.b16 %v1210, %v1204
        %v1679 = vpack.c.b16 %v1211, %v1205
        %v1680 = vpack.c.b16 %v1212, %v1206
        %v1681 = vpack.c.b16 %v1219, %v1213
        %v1682 = vpack.c.b16 %v1220, %v1214
        %v1683 = vpack.c.b16 %v1221, %v1215
        %v1684 = vpack.c.b16 %v1222, %v1216
        %v1685 = vpack.c.b16 %v1223, %v1217
        %v1686 = vpack.c.b16 %v1224, %v1218
        %v1687 = vpack.c.b16 %v1231, %v1225
        %v1688 = vpack.c.b16 %v1232, %v1226
        %v1689 = vpack.c.b16 %v1233, %v1227
        %v1690 = vpack.c.b16 %v1234, %v1228
        %v1691 = vpack.c.b16 %v1235, %v1229
        %v1692 = vpack.c.b16 %v1236, %v1230
        %v1693 = vpack.c.b16 %v1243, %v1237
        %v1694 = vpack.c.b16 %v1244, %v1238
        %v1695 = vpack.c.b16 %v1245, %v1239
        %v1696 = vpack.c.b16 %v1246, %v1240
        %v1697 = vpack.c.b16 %v1247, %v1241
        %v1698 = vpack.c.b16 %v1248, %v1242
        %v1699 = vpack.c.b16 %v1255, %v1249
        %v1700 = vpack.c.b16 %v1256, %v1250
        %v1701 = vpack.c.b16 %v1257, %v1251
        %v1702 = vpack.c.b16 %v1258, %v1252
        %v1703 = vpack.c.b16 %v1259, %v1253
        %v1704 = vpack.c.b16 %v1260, %v1254
        %v1705 = vpack.c.b16 %v1267, %v1261
        %v1706 = vpack.c.b16 %v1268, %v1262
        %v1707 = vpack.c.b16 %v1269, %v1263
        %v1708 = vpack.c.b16 %v1270, %v1264
        %v1709 = vpack.c.b16 %v1271, %v1265
        %v1710 = vpack.c.b16 %v1272, %v1266
        %v1711 = vpack.c.b16 %v1279, %v1273
        %v1712 = vpack.c.b16 %v1280, %v1274
        %v1713 = vpack.c.b16 %v1281, %v1275
        %v1714 = vpack.c.b16 %v1282, %v1276
        %v1715 = vpack.c.b16 %v1283, %v1277
        %v1716 = vpack.c.b16 %v1284, %v1278
        %v1717 = vpack.c.b16 %v1291, %v1285
        %v1718 = vpack.c.b16 %v1292, %v1286
        %v1719 = vpack.c.b16 %v1293, %v1287
        %v1720 = vpack.c.b16 %v1294, %v1288
        %v1721 = vpack.c.b16 %v1295, %v1289
        %v1722 = vpack.c.b16 %v1296, %v1290
        %v1723 = vpack.c.b16 %v1303, %v1297
        %v1724 = vpack.c.b16 %v1304, %v1298
        %v1725 = vpack.c.b16 %v1305, %v1299
        %v1726 = vpack.c.b16 %v1306, %v1300
        %v1727 = vpack.c.b16 %v1307, %v1301
        %v1728 = vpack.c.b16 %v1308, %v1302
        %v1729 = vpack.c.b16 %v1315, %v1309
        %v1730 = vpack.c.b16 %v1316, %v1310
        %v1731 = vpack.c.b16 %v1317, %v1311
        %v1732 = vpack.c.b16 %v1318, %v1312
        %v1733 = vpack.c.b16 %v1319, %v1313
        %v1734 = vpack.c.b16 %v1320, %v1314
        %v1735 = vpack.c.b16 %v1327, %v1321
        %v1736 = vpack.c.b16 %v1328, %v1322
        %v1737 = vpack.c.b16 %v1329, %v1323
        %v1738 = vpack.c.b16 %v1330, %v1324
        %v1739 = vpack.c.b16 %v1331, %v1325
        %v1740 = vpack.c.b16 %v1332, %v1326
        %v1741 = vpack.c.b16 %v1339, %v1333
        %v1742 = vpack.c.b16 %v1340, %v1334
        %v1743 = vpack.c.b16 %v1341, %v1335
        %v1744 = vpack.c.b16 %v1342, %v1336
        %v1745 = vpack.c.b16 %v1343, %v1337
        %v1746 = vpack.c.b16 %v1344, %v1338
        %v1747 = vpack.c.b16 %v1351, %v1345
        %v1748 = vpack.c.b16 %v1352, %v1346
        %v1749 = vpack.c.b16 %v1353, %v1347
        %v1750 = vpack.c.b16 %v1354, %v1348
        %v1751 = vpack.c.b16 %v1355, %v1349
        %v1752 = vpack.c.b16 %v1356, %v1350
        %v1753 = vpack.c.b16 %v1363, %v1357
        %v1754 = vpack.c.b16 %v1364, %v1358
        %v1755 = vpack.c.b16 %v1365, %v1359
        %v1756 = vpack.c.b16 %v1366, %v1360
        %v1757 = vpack.c.b16 %v1367, %v1361
        %v1758 = vpack.c.b16 %v1368, %v1362
        %v1759 = vpack.c.b16 %v1375, %v1369
        %v1760 = vpack.c.b16 %v1376, %v1370
        %v1761 = vpack.c.b16 %v1377, %v1371
        %v1762 = vpack.c.b16 %v1378, %v1372
        %v1763 = vpack.c.b16 %v1379, %v1373
        %v1764 = vpack.c.b16 %v1380, %v1374
        %v1765 = vpack.c.b16 %v1387, %v1381
        %v1766 = vpack.c.b16 %v1388, %v1382
        %v1767 = vpack.c.b16 %v1389, %v1383
        %v1768 = vpack.c.b16 %v1390, %v1384
        %v1769 = vpack.c.b16 %v1391, %v1385
        %v1770 = vpack.c.b16 %v1392, %v1386
        %v1771 = vpack.c.b16 %v1399, %v1393
        %v1772 = vpack.c.b16 %v1400, %v1394
        %v1773 = vpack.c.b16 %v1401, %v1395
        %v1774 = vpack.c.b16 %v1402, %v1396
        %v1775 = vpack.c.b16 %v1403, %v1397
        %v1776 = vpack.c.b16 %v1404, %v1398
        %v1777 = vpack.c.b16 %v1411, %v1405
        %v1778 = vpack.c.b16 %v1412, %v1406
        %v1779 = vpack.c.b16 %v1413, %v1407
        %v1780 = vpack.c.b16 %v1414, %v1408
        %v1781 = vpack.c.b16 %v1415, %v1409
        %v1782 = vpack.c.b16 %v1416, %v1410
        %v1783 = vpack.c.b16 %v1423, %v1417
        %v1784 = vpack.c.b16 %v1424, %v1418
        %v1785 = vpack.c.b16 %v1425, %v1419
        %v1786 = vpack.c.b16 %v1426, %v1420
        %v1787 = vpack.c.b16 %v1427, %v1421
        %v1788 = vpack.c.b16 %v1428, %v1422
        %v1789 = vpack.c.b16 %v1435, %v1429
        %v1790 = vpack.c.b16 %v1436, %v1430
        %v1791 = vpack.c.b16 %v1437, %v1431
        %v1792 = vpack.c.b16 %v1438, %v1432
        %v1793 = vpack.c.b16 %v1439, %v1433
        %v1794 = vpack.c.b16 %v1440, %v1434
        %v1795 = vpack.c.b16 %v1447, %v1441
        %v1796 = vpack.c.b16 %v1448, %v1442
        %v1797 = vpack.c.b16 %v1449, %v1443
        %v1798 = vpack.c.b16 %v1450, %v1444
        %v1799 = vpack.c.b16 %v1451, %v1445
        %v1800 = vpack.c.b16 %v1452, %v1446
        %v1801 = vpack.c.b16 %v1459, %v1453
        %v1802 = vpack.c.b16 %v1460, %v1454
        %v1803 = vpack.c.b16 %v1461, %v1455
        %v1804 = vpack.c.b16 %v1462, %v1456
        %v1805 = vpack.c.b16 %v1463, %v1457
        %v1806 = vpack.c.b16 %v1464, %v1458
        %v1807 = vpack.c.b16 %v1471, %v1465
        %v1808 = vpack.c.b16 %v1472, %v1466
        %v1809 = vpack.c.b16 %v1473, %v1467
        %v1810 = vpack.c.b16 %v1474, %v1468
        %v1811 = vpack.c.b16 %v1475, %v1469
        %v1812 = vpack.c.b16 %v1476, %v1470
        %v1813 = vpack.c.b16 %v1483, %v1477
        %v1814 = vpack.c.b16 %v1484, %v1478
        %v1815 = vpack.c.b16 %v1485, %v1479
        %v1816 = vpack.c.b16 %v1486, %v1480
        %v1817 = vpack.c.b16 %v1487, %v1481
        %v1818 = vpack.c.b16 %v1488, %v1482
        %v1819 = vpack.c.b16 %v1495, %v1489
        %v1820 = vpack.c.b16 %v1496, %v1490
        %v1821 = vpack.c.b16 %v1497, %v1491
        %v1822 = vpack.c.b16 %v1498, %v1492
        %v1823 = vpack.c.b16 %v1499, %v1493
        %v1824 = vpack.c.b16 %v1500, %v1494
        %v1825 = vpack.c.b16 %v1507, %v1501
        %v1826 = vpack.c.b16 %v1508, %v1502
        %v1827 = vpack.c.b16 %v1509, %v1503
        %v1828 = vpack.c.b16 %v1510, %v1504
        %v1829 = vpack.c.b16 %v1511, %v1505
        %v1830 = vpack.c.b16 %v1512, %v1506
        %v1831 = vpack.c.b16 %v1519, %v1513
        %v1832 = vpack.c.b16 %v1520, %v1514
        %v1833 = vpack.c.b16 %v1521, %v1515
        %v1834 = vpack.c.b16 %v1522, %v1516
        %v1835 = vpack.c.b16 %v1523, %v1517
        %v1836 = vpack.c.b16 %v1524, %v1518
        %v1837 = vpack.c.b16 %v1531, %v1525
        %v1838 = vpack.c.b16 %v1532, %v1526
        %v1839 = vpack.c.b16 %v1533, %v1527
        %v1840 = vpack.c.b16 %v1534, %v1528
        %v1841 = vpack.c.b16 %v1535, %v1529
        %v1842 = vpack.c.b16 %v1536, %v1530
        %v1843 = vpack.c.b16 %v1543, %v1537
        %v1844 = vpack.c.b16 %v1544, %v1538
        %v1845 = vpack.c.b16 %v1545, %v1539
        %v1846 = vpack.c.b16 %v1546, %v1540
        %v1847 = vpack.c.b16 %v1547, %v1541
        %v1848 = vpack.c.b16 %v1548, %v1542
        %v1849 = vpack.c.b16 %v1555, %v1549
        %v1850 = vpack.c.b16 %v1556, %v1550
        %v1851 = vpack.c.b16 %v1557, %v1551
        %v1852 = vpack.c.b16 %v1558, %v1552
        %v1853 = vpack.c.b16 %v1559, %v1553
        %v1854 = vpack.c.b16 %v1560, %v1554
        %v1855 = vpack.c.b16 %v1567, %v1561
        %v1856 = vpack.c.b16 %v1568, %v1562
        %v1857 = vpack.c.b16 %v1569, %v1563
        %v1858 = vpack.c.b16 %v1570, %v1564
        %v1859 = vpack.c.b16 %v1571, %v1565
        %v1860 = vpack.c.b16 %v1572, %v1566
        %2149 = vmatprep.subr.bf16.mxu0 %v1616
        %2150 = vmatpush1.bf16.msra.mxu0 %v1615
        %2151 = vmatprep.subr.bf16.mxu0 %v1610
        %2152 = vmatpush1.bf16.msra.mxu0 %v1609
        %2153 = vmatprep.subr.bf16.mxu0 %v1604
        %2154 = vmatpush1.bf16.msra.mxu0 %v1603
        %2155 = vmatprep.subr.bf16.mxu0 %v1598
        %2156 = vmatpush1.bf16.msra.mxu0 %v1597
        %2157 = vmatprep.subr.bf16.mxu0 %v1592
        %2158 = vmatpush1.bf16.msra.mxu0 %v1591
        %2159 = vmatprep.subr.bf16.mxu0 %v1586
        %2160 = vmatpush1.bf16.msra.mxu0 %v1585
        %2161 = vmatprep.subr.bf16.mxu0 %v1580
        %2162 = vmatpush1.bf16.msra.mxu0 %v1579
        %2163 = vmatprep.subr.bf16.mxu0 %v1574
        %2164 = vmatpush1.bf16.msra.mxu0 %v1573
        %2165 = vmatprep.subr.bf16.mxu0 %v1664
        %2166 = vmatpush2.bf16.msra.mxu0 %v1663
        %2167 = vmatprep.subr.bf16.mxu0 %v1658
        %2168 = vmatpush2.bf16.msra.mxu0 %v1657
        %2169 = vmatprep.subr.bf16.mxu0 %v1652
        %2170 = vmatpush2.bf16.msra.mxu0 %v1651
        %2171 = vmatprep.subr.bf16.mxu0 %v1646
        %2172 = vmatpush2.bf16.msra.mxu0 %v1645
        %2173 = vmatprep.subr.bf16.mxu0 %v1640
        %2174 = vmatpush2.bf16.msra.mxu0 %v1639
        %2175 = vmatprep.subr.bf16.mxu0 %v1634
        %2176 = vmatpush2.bf16.msra.mxu0 %v1633
        %2177 = vmatprep.subr.bf16.mxu0 %v1628
        %2178 = vmatpush2.bf16.msra.mxu0 %v1627
        %2179 = vmatprep.subr.bf16.mxu0 %v1622
        %2180 = vmatpush2.bf16.msra.mxu0 %v1621
        %2181 = vmatprep.mubr.bf16.mxu0 %v384
        %2182 = vmatmul.mubr.bf16.gmra.mxu0 %v383
        %v2183 = vpop.f32.mrf.mxu0
        %v2184 = vadd.f32 %v682, %v2183
        %v2185 = vpop.f32.mrf.mxu0
        %v2186 = vadd.f32 %v686, %v2185
        %v2187 = vpop.f32.mrf.mxu0
        %v2188 = vpop.f32.mrf.mxu0
        %2189 = vdwg.mxu0
        %2190 = vmatprep.subr.bf16.mxu0 %v1712
        %2191 = vmatpush1.bf16.msra.mxu0 %v1711
        %2192 = vmatprep.subr.bf16.mxu0 %v1706
        %2193 = vmatpush1.bf16.msra.mxu0 %v1705
        %2194 = vmatprep.subr.bf16.mxu0 %v1700
        %2195 = vmatpush1.bf16.msra.mxu0 %v1699
        %2196 = vmatprep.subr.bf16.mxu0 %v1694
        %2197 = vmatpush1.bf16.msra.mxu0 %v1693
        %2198 = vmatprep.subr.bf16.mxu0 %v1688
        %2199 = vmatpush1.bf16.msra.mxu0 %v1687
        %2200 = vmatprep.subr.bf16.mxu0 %v1682
        %2201 = vmatpush1.bf16.msra.mxu0 %v1681
        %2202 = vmatprep.subr.bf16.mxu0 %v1676
        %2203 = vmatpush1.bf16.msra.mxu0 %v1675
        %2204 = vmatprep.subr.bf16.mxu0 %v1670
        %2205 = vmatpush1.bf16.msra.mxu0 %v1669
        %2206 = vmatprep.subr.bf16.mxu0 %v1760
        %2207 = vmatpush2.bf16.msra.mxu0 %v1759
        %2208 = vmatprep.subr.bf16.mxu0 %v1754
        %2209 = vmatpush2.bf16.msra.mxu0 %v1753
        %2210 = vmatprep.subr.bf16.mxu0 %v1748
        %2211 = vmatpush2.bf16.msra.mxu0 %v1747
        %2212 = vmatprep.subr.bf16.mxu0 %v1742
        %2213 = vmatpush2.bf16.msra.mxu0 %v1741
        %2214 = vmatprep.subr.bf16.mxu0 %v1736
        %2215 = vmatpush2.bf16.msra.mxu0 %v1735
        %2216 = vmatprep.subr.bf16.mxu0 %v1730
        %2217 = vmatpush2.bf16.msra.mxu0 %v1729
        %2218 = vmatprep.subr.bf16.mxu0 %v1724
        %2219 = vmatpush2.bf16.msra.mxu0 %v1723
        %2220 = vmatprep.subr.bf16.mxu0 %v1718
        %2221 = vmatpush2.bf16.msra.mxu0 %v1717
        %2222 = vmatprep.mubr.bf16.mxu0 %v386
        %2223 = vmatmul.mubr.bf16.gmra.mxu0 %v385
        %v2224 = vpop.f32.mrf.mxu0
        %v2225 = vadd.f32 %v2184, %v2224
        %v2226 = vpop.f32.mrf.mxu0
        %v2227 = vadd.f32 %v2186, %v2226
        %v2228 = vpop.f32.mrf.mxu0
        %v2229 = vpop.f32.mrf.mxu0
        %2230 = vdwg.mxu0
        %2231 = vmatprep.subr.bf16.mxu0 %v1808
        %2232 = vmatpush1.bf16.msra.mxu0 %v1807
        %2233 = vmatprep.subr.bf16.mxu0 %v1802
        %2234 = vmatpush1.bf16.msra.mxu0 %v1801
        %2235 = vmatprep.subr.bf16.mxu0 %v1796
        %2236 = vmatpush1.bf16.msra.mxu0 %v1795
        %2237 = vmatprep.subr.bf16.mxu0 %v1790
        %2238 = vmatpush1.bf16.msra.mxu0 %v1789
        %2239 = vmatprep.subr.bf16.mxu0 %v1784
        %2240 = vmatpush1.bf16.msra.mxu0 %v1783
        %2241 = vmatprep.subr.bf16.mxu0 %v1778
        %2242 = vmatpush1.bf16.msra.mxu0 %v1777
        %2243 = vmatprep.subr.bf16.mxu0 %v1772
        %2244 = vmatpush1.bf16.msra.mxu0 %v1771
        %2245 = vmatprep.subr.bf16.mxu0 %v1766
        %2246 = vmatpush1.bf16.msra.mxu0 %v1765
        %2247 = vmatprep.subr.bf16.mxu0 %v1856
        %2248 = vmatpush2.bf16.msra.mxu0 %v1855
        %2249 = vmatprep.subr.bf16.mxu0 %v1850
        %2250 = vmatpush2.bf16.msra.mxu0 %v1849
        %2251 = vmatprep.subr.bf16.mxu0 %v1844
        %2252 = vmatpush2.bf16.msra.mxu0 %v1843
        %2253 = vmatprep.subr.bf16.mxu0 %v1838
        %2254 = vmatpush2.bf16.msra.mxu0 %v1837
        %2255 = vmatprep.subr.bf16.mxu0 %v1832
        %2256 = vmatpush2.bf16.msra.mxu0 %v1831
        %2257 = vmatprep.subr.bf16.mxu0 %v1826
        %2258 = vmatpush2.bf16.msra.mxu0 %v1825
        %2259 = vmatprep.subr.bf16.mxu0 %v1820
        %2260 = vmatpush2.bf16.msra.mxu0 %v1819
        %2261 = vmatprep.subr.bf16.mxu0 %v1814
        %2262 = vmatpush2.bf16.msra.mxu0 %v1813
        %2263 = vmatprep.mubr.bf16.mxu0 %v388
        %2264 = vmatmul.mubr.bf16.gmra.mxu0 %v387
        %v2265 = vpop.f32.mrf.mxu0
        %v2266 = vadd.f32 %v2225, %v2265
        %v2267 = vpop.f32.mrf.mxu0
        %v2268 = vadd.f32 %v2227, %v2267
        %v2269 = vpop.f32.mrf.mxu0
        %v2270 = vpop.f32.mrf.mxu0
        %2271 = vdwg.mxu0
        %2272 = vmatprep.subr.bf16.mxu0 %v1618
        %2273 = vmatpush1.bf16.msra.mxu0 %v1617
        %2274 = vmatprep.subr.bf16.mxu0 %v1612
        %2275 = vmatpush1.bf16.msra.mxu0 %v1611
        %2276 = vmatprep.subr.bf16.mxu0 %v1606
        %2277 = vmatpush1.bf16.msra.mxu0 %v1605
        %2278 = vmatprep.subr.bf16.mxu0 %v1600
        %2279 = vmatpush1.bf16.msra.mxu0 %v1599
        %2280 = vmatprep.subr.bf16.mxu0 %v1594
        %2281 = vmatpush1.bf16.msra.mxu0 %v1593
        %2282 = vmatprep.subr.bf16.mxu0 %v1588
        %2283 = vmatpush1.bf16.msra.mxu0 %v1587
        %2284 = vmatprep.subr.bf16.mxu0 %v1582
        %2285 = vmatpush1.bf16.msra.mxu0 %v1581
        %2286 = vmatprep.subr.bf16.mxu0 %v1576
        %2287 = vmatpush1.bf16.msra.mxu0 %v1575
        %2288 = vmatprep.subr.bf16.mxu0 %v1666
        %2289 = vmatpush2.bf16.msra.mxu0 %v1665
        %2290 = vmatprep.subr.bf16.mxu0 %v1660
        %2291 = vmatpush2.bf16.msra.mxu0 %v1659
        %2292 = vmatprep.subr.bf16.mxu0 %v1654
        %2293 = vmatpush2.bf16.msra.mxu0 %v1653
        %2294 = vmatprep.subr.bf16.mxu0 %v1648
        %2295 = vmatpush2.bf16.msra.mxu0 %v1647
        %2296 = vmatprep.subr.bf16.mxu0 %v1642
        %2297 = vmatpush2.bf16.msra.mxu0 %v1641
        %2298 = vmatprep.subr.bf16.mxu0 %v1636
        %2299 = vmatpush2.bf16.msra.mxu0 %v1635
        %2300 = vmatprep.subr.bf16.mxu0 %v1630
        %2301 = vmatpush2.bf16.msra.mxu0 %v1629
        %2302 = vmatprep.subr.bf16.mxu0 %v1624
        %2303 = vmatpush2.bf16.msra.mxu0 %v1623
        %2304 = vmatprep.mubr.bf16.mxu0 %v384
        %2305 = vmatmul.mubr.bf16.gmra.mxu0 %v383
        %v2306 = vpop.f32.mrf.mxu0
        %v2307 = vadd.f32 %v690, %v2306
        %v2308 = vpop.f32.mrf.mxu0
        %v2309 = vadd.f32 %v694, %v2308
        %v2310 = vpop.f32.mrf.mxu0
        %v2311 = vpop.f32.mrf.mxu0
        %2312 = vdwg.mxu0
        %2313 = vmatprep.subr.bf16.mxu0 %v1714
        %2314 = vmatpush1.bf16.msra.mxu0 %v1713
        %2315 = vmatprep.subr.bf16.mxu0 %v1708
        %2316 = vmatpush1.bf16.msra.mxu0 %v1707
        %2317 = vmatprep.subr.bf16.mxu0 %v1702
        %2318 = vmatpush1.bf16.msra.mxu0 %v1701
        %2319 = vmatprep.subr.bf16.mxu0 %v1696
        %2320 = vmatpush1.bf16.msra.mxu0 %v1695
        %2321 = vmatprep.subr.bf16.mxu0 %v1690
        %2322 = vmatpush1.bf16.msra.mxu0 %v1689
        %2323 = vmatprep.subr.bf16.mxu0 %v1684
        %2324 = vmatpush1.bf16.msra.mxu0 %v1683
        %2325 = vmatprep.subr.bf16.mxu0 %v1678
        %2326 = vmatpush1.bf16.msra.mxu0 %v1677
        %2327 = vmatprep.subr.bf16.mxu0 %v1672
        %2328 = vmatpush1.bf16.msra.mxu0 %v1671
        %2329 = vmatprep.subr.bf16.mxu0 %v1762
        %2330 = vmatpush2.bf16.msra.mxu0 %v1761
        %2331 = vmatprep.subr.bf16.mxu0 %v1756
        %2332 = vmatpush2.bf16.msra.mxu0 %v1755
        %2333 = vmatprep.subr.bf16.mxu0 %v1750
        %2334 = vmatpush2.bf16.msra.mxu0 %v1749
        %2335 = vmatprep.subr.bf16.mxu0 %v1744
        %2336 = vmatpush2.bf16.msra.mxu0 %v1743
        %2337 = vmatprep.subr.bf16.mxu0 %v1738
        %2338 = vmatpush2.bf16.msra.mxu0 %v1737
        %2339 = vmatprep.subr.bf16.mxu0 %v1732
        %2340 = vmatpush2.bf16.msra.mxu0 %v1731
        %2341 = vmatprep.subr.bf16.mxu0 %v1726
        %2342 = vmatpush2.bf16.msra.mxu0 %v1725
        %2343 = vmatprep.subr.bf16.mxu0 %v1720
        %2344 = vmatpush2.bf16.msra.mxu0 %v1719
        %2345 = vmatprep.mubr.bf16.mxu0 %v386
        %2346 = vmatmul.mubr.bf16.gmra.mxu0 %v385
        %v2347 = vpop.f32.mrf.mxu0
        %v2348 = vadd.f32 %v2307, %v2347
        %v2349 = vpop.f32.mrf.mxu0
        %v2350 = vadd.f32 %v2309, %v2349
        %v2351 = vpop.f32.mrf.mxu0
        %v2352 = vpop.f32.mrf.mxu0
        %2353 = vdwg.mxu0
        %2354 = vmatprep.subr.bf16.mxu0 %v1810
        %2355 = vmatpush1.bf16.msra.mxu0 %v1809
        %2356 = vmatprep.subr.bf16.mxu0 %v1804
        %2357 = vmatpush1.bf16.msra.mxu0 %v1803
        %2358 = vmatprep.subr.bf16.mxu0 %v1798
        %2359 = vmatpush1.bf16.msra.mxu0 %v1797
        %2360 = vmatprep.subr.bf16.mxu0 %v1792
        %2361 = vmatpush1.bf16.msra.mxu0 %v1791
        %2362 = vmatprep.subr.bf16.mxu0 %v1786
        %2363 = vmatpush1.bf16.msra.mxu0 %v1785
        %2364 = vmatprep.subr.bf16.mxu0 %v1780
        %2365 = vmatpush1.bf16.msra.mxu0 %v1779
        %2366 = vmatprep.subr.bf16.mxu0 %v1774
        %2367 = vmatpush1.bf16.msra.mxu0 %v1773
        %2368 = vmatprep.subr.bf16.mxu0 %v1768
        %2369 = vmatpush1.bf16.msra.mxu0 %v1767
        %2370 = vmatprep.subr.bf16.mxu0 %v1858
        %2371 = vmatpush2.bf16.msra.mxu0 %v1857
        %2372 = vmatprep.subr.bf16.mxu0 %v1852
        %2373 = vmatpush2.bf16.msra.mxu0 %v1851
        %2374 = vmatprep.subr.bf16.mxu0 %v1846
        %2375 = vmatpush2.bf16.msra.mxu0 %v1845
        %2376 = vmatprep.subr.bf16.mxu0 %v1840
        %2377 = vmatpush2.bf16.msra.mxu0 %v1839
        %2378 = vmatprep.subr.bf16.mxu0 %v1834
        %2379 = vmatpush2.bf16.msra.mxu0 %v1833
        %2380 = vmatprep.subr.bf16.mxu0 %v1828
        %2381 = vmatpush2.bf16.msra.mxu0 %v1827
        %2382 = vmatprep.subr.bf16.mxu0 %v1822
        %2383 = vmatpush2.bf16.msra.mxu0 %v1821
        %2384 = vmatprep.subr.bf16.mxu0 %v1816
        %2385 = vmatpush2.bf16.msra.mxu0 %v1815
        %2386 = vmatprep.mubr.bf16.mxu0 %v388
        %2387 = vmatmul.mubr.bf16.gmra.mxu0 %v387
        %v2388 = vpop.f32.mrf.mxu0
        %v2389 = vadd.f32 %v2348, %v2388
        %v2390 = vpop.f32.mrf.mxu0
        %v2391 = vadd.f32 %v2350, %v2390
        %v2392 = vpop.f32.mrf.mxu0
        %v2393 = vpop.f32.mrf.mxu0
        %2394 = vdwg.mxu0
        %2395 = vmatprep.subr.bf16.mxu0 %v1620
        %2396 = vmatpush1.bf16.msra.mxu0 %v1619
        %2397 = vmatprep.subr.bf16.mxu0 %v1614
        %2398 = vmatpush1.bf16.msra.mxu0 %v1613
        %2399 = vmatprep.subr.bf16.mxu0 %v1608
        %2400 = vmatpush1.bf16.msra.mxu0 %v1607
        %2401 = vmatprep.subr.bf16.mxu0 %v1602
        %2402 = vmatpush1.bf16.msra.mxu0 %v1601
        %2403 = vmatprep.subr.bf16.mxu0 %v1596
        %2404 = vmatpush1.bf16.msra.mxu0 %v1595
        %2405 = vmatprep.subr.bf16.mxu0 %v1590
        %2406 = vmatpush1.bf16.msra.mxu0 %v1589
        %2407 = vmatprep.subr.bf16.mxu0 %v1584
        %2408 = vmatpush1.bf16.msra.mxu0 %v1583
        %2409 = vmatprep.subr.bf16.mxu0 %v1578
        %2410 = vmatpush1.bf16.msra.mxu0 %v1577
        %2411 = vmatprep.subr.bf16.mxu0 %v1668
        %2412 = vmatpush2.bf16.msra.mxu0 %v1667
        %2413 = vmatprep.subr.bf16.mxu0 %v1662
        %2414 = vmatpush2.bf16.msra.mxu0 %v1661
        %2415 = vmatprep.subr.bf16.mxu0 %v1656
        %2416 = vmatpush2.bf16.msra.mxu0 %v1655
        %2417 = vmatprep.subr.bf16.mxu0 %v1650
        %2418 = vmatpush2.bf16.msra.mxu0 %v1649
        %2419 = vmatprep.subr.bf16.mxu0 %v1644
        %2420 = vmatpush2.bf16.msra.mxu0 %v1643
        %2421 = vmatprep.subr.bf16.mxu0 %v1638
        %2422 = vmatpush2.bf16.msra.mxu0 %v1637
        %2423 = vmatprep.subr.bf16.mxu0 %v1632
        %2424 = vmatpush2.bf16.msra.mxu0 %v1631
        %2425 = vmatprep.subr.bf16.mxu0 %v1626
        %2426 = vmatpush2.bf16.msra.mxu0 %v1625
        %2427 = vmatprep.mubr.bf16.mxu0 %v384
        %2428 = vmatmul.mubr.bf16.gmra.mxu0 %v383
        %v2429 = vpop.f32.mrf.mxu0
        %v2430 = vadd.f32 %v698, %v2429
        %v2431 = vpop.f32.mrf.mxu0
        %v2432 = vadd.f32 %v702, %v2431
        %v2433 = vpop.f32.mrf.mxu0
        %v2434 = vpop.f32.mrf.mxu0
        %2435 = vdwg.mxu0
        %2436 = vmatprep.subr.bf16.mxu0 %v1716
        %2437 = vmatpush1.bf16.msra.mxu0 %v1715
        %2438 = vmatprep.subr.bf16.mxu0 %v1710
        %2439 = vmatpush1.bf16.msra.mxu0 %v1709
        %2440 = vmatprep.subr.bf16.mxu0 %v1704
        %2441 = vmatpush1.bf16.msra.mxu0 %v1703
        %2442 = vmatprep.subr.bf16.mxu0 %v1698
        %2443 = vmatpush1.bf16.msra.mxu0 %v1697
        %2444 = vmatprep.subr.bf16.mxu0 %v1692
        %2445 = vmatpush1.bf16.msra.mxu0 %v1691
        %2446 = vmatprep.subr.bf16.mxu0 %v1686
        %2447 = vmatpush1.bf16.msra.mxu0 %v1685
        %2448 = vmatprep.subr.bf16.mxu0 %v1680
        %2449 = vmatpush1.bf16.msra.mxu0 %v1679
        %2450 = vmatprep.subr.bf16.mxu0 %v1674
        %2451 = vmatpush1.bf16.msra.mxu0 %v1673
        %2452 = vmatprep.subr.bf16.mxu0 %v1764
        %2453 = vmatpush2.bf16.msra.mxu0 %v1763
        %2454 = vmatprep.subr.bf16.mxu0 %v1758
        %2455 = vmatpush2.bf16.msra.mxu0 %v1757
        %2456 = vmatprep.subr.bf16.mxu0 %v1752
        %2457 = vmatpush2.bf16.msra.mxu0 %v1751
        %2458 = vmatprep.subr.bf16.mxu0 %v1746
        %2459 = vmatpush2.bf16.msra.mxu0 %v1745
        %2460 = vmatprep.subr.bf16.mxu0 %v1740
        %2461 = vmatpush2.bf16.msra.mxu0 %v1739
        %2462 = vmatprep.subr.bf16.mxu0 %v1734
        %2463 = vmatpush2.bf16.msra.mxu0 %v1733
        %2464 = vmatprep.subr.bf16.mxu0 %v1728
        %2465 = vmatpush2.bf16.msra.mxu0 %v1727
        %2466 = vmatprep.subr.bf16.mxu0 %v1722
        %2467 = vmatpush2.bf16.msra.mxu0 %v1721
        %2468 = vmatprep.mubr.bf16.mxu0 %v386
        %2469 = vmatmul.mubr.bf16.gmra.mxu0 %v385
        %v2470 = vpop.f32.mrf.mxu0
        %v2471 = vadd.f32 %v2430, %v2470
        %v2472 = vpop.f32.mrf.mxu0
        %v2473 = vadd.f32 %v2432, %v2472
        %v2474 = vpop.f32.mrf.mxu0
        %v2475 = vpop.f32.mrf.mxu0
        %2476 = vdwg.mxu0
        %2477 = vmatprep.subr.bf16.mxu0 %v1812
        %2478 = vmatpush1.bf16.msra.mxu0 %v1811
        %2479 = vmatprep.subr.bf16.mxu0 %v1806
        %2480 = vmatpush1.bf16.msra.mxu0 %v1805
        %2481 = vmatprep.subr.bf16.mxu0 %v1800
        %2482 = vmatpush1.bf16.msra.mxu0 %v1799
        %2483 = vmatprep.subr.bf16.mxu0 %v1794
        %2484 = vmatpush1.bf16.msra.mxu0 %v1793
        %2485 = vmatprep.subr.bf16.mxu0 %v1788
        %2486 = vmatpush1.bf16.msra.mxu0 %v1787
        %2487 = vmatprep.subr.bf16.mxu0 %v1782
        %2488 = vmatpush1.bf16.msra.mxu0 %v1781
        %2489 = vmatprep.subr.bf16.mxu0 %v1776
        %2490 = vmatpush1.bf16.msra.mxu0 %v1775
        %2491 = vmatprep.subr.bf16.mxu0 %v1770
        %2492 = vmatpush1.bf16.msra.mxu0 %v1769
        %2493 = vmatprep.subr.bf16.mxu0 %v1860
        %2494 = vmatpush2.bf16.msra.mxu0 %v1859
        %2495 = vmatprep.subr.bf16.mxu0 %v1854
        %2496 = vmatpush2.bf16.msra.mxu0 %v1853
        %2497 = vmatprep.subr.bf16.mxu0 %v1848
        %2498 = vmatpush2.bf16.msra.mxu0 %v1847
        %2499 = vmatprep.subr.bf16.mxu0 %v1842
        %2500 = vmatpush2.bf16.msra.mxu0 %v1841
        %2501 = vmatprep.subr.bf16.mxu0 %v1836
        %2502 = vmatpush2.bf16.msra.mxu0 %v1835
        %2503 = vmatprep.subr.bf16.mxu0 %v1830
        %2504 = vmatpush2.bf16.msra.mxu0 %v1829
        %2505 = vmatprep.subr.bf16.mxu0 %v1824
        %2506 = vmatpush2.bf16.msra.mxu0 %v1823
        %2507 = vmatprep.subr.bf16.mxu0 %v1818
        %2508 = vmatpush2.bf16.msra.mxu0 %v1817
        %2509 = vmatprep.mubr.bf16.mxu0 %v388
        %2510 = vmatmul.mubr.bf16.gmra.mxu0 %v387
        %v2511 = vpop.f32.mrf.mxu0
        %v2512 = vadd.f32 %v2471, %v2511
        %v2513 = vpop.f32.mrf.mxu0
        %v2514 = vadd.f32 %v2473, %v2513
        %v2515 = vpop.f32.mrf.mxu0
        %v2516 = vpop.f32.mrf.mxu0
        %2517 = vdwg.mxu0
        %v2518 = vtanh.pop %v2266
        %v2519 = vtanh.pop %v2268
        %v2520 = vtanh.pop %v2389
        %v2521 = vtanh.pop %v2391
        %v2522 = vtanh.pop %v2512
        %v2523 = vtanh.pop %v2514
        %v2524 = vpack.c.bf16 %v2518, %v2518
        %v2525 = vpack.c.bf16 %v2519, %v2519
        %v2526 = vpack.c.bf16 %v2520, %v2520
        %v2527 = vpack.c.bf16 %v2521, %v2521
        %v2528 = vpack.c.bf16 %v2522, %v2522
        %v2529 = vpack.c.bf16 %v2523, %v2523
        %v2530 = vld [vmem:[#allocation8] sm:$0xff]
        %v2531 = vld [vmem:[#allocation8 + $0x8] sm:$0xff]
        %v2532 = vld [vmem:[#allocation8 + $0x10] sm:$0xff]
        %v2533 = vld [vmem:[#allocation8 + $0x18] sm:$0xff]
        %v2534 = vld [vmem:[#allocation8 + $0x20] sm:$0xff]
        %v2535 = vld [vmem:[#allocation8 + $0x28] sm:$0xff]
        %v2536 = vld [vmem:[#allocation8 + $0x30] sm:$0xff]
        %v2537 = vld [vmem:[#allocation8 + $0x38] sm:$0xff]
        %v2538 = vld [vmem:[#allocation8 + $0x40] sm:$0xff]
        %v2539 = vld [vmem:[#allocation8 + $0x48] sm:$0xff]
        %v2540 = vld [vmem:[#allocation8 + $0x50] sm:$0xff]
        %v2541 = vld [vmem:[#allocation8 + $0x58] sm:$0xff]
        %v2542 = vld [vmem:[#allocation8 + $0x60] sm:$0xff]
        %v2543 = vld [vmem:[#allocation8 + $0x68] sm:$0xff]
        %v2544 = vld [vmem:[#allocation8 + $0x70] sm:$0xff]
        %v2545 = vld [vmem:[#allocation8 + $0x78] sm:$0xff]
        %v2546 = vld [vmem:[#allocation8 + $0x80] sm:$0xff]
        %v2547 = vld [vmem:[#allocation8 + $0x88] sm:$0xff]
        %v2548 = vld [vmem:[#allocation8 + $0x90] sm:$0xff]
        %v2549 = vld [vmem:[#allocation8 + $0x98] sm:$0xff]
        %v2550 = vld [vmem:[#allocation8 + $0xa0] sm:$0xff]
        %v2551 = vld [vmem:[#allocation8 + $0xa8] sm:$0xff]
        %v2552 = vld [vmem:[#allocation8 + $0xb0] sm:$0xff]
        %v2553 = vld [vmem:[#allocation8 + $0xb8] sm:$0xff]
        %v2554 = vld [vmem:[#allocation8 + $0xc0] sm:$0xff]
        %v2555 = vld [vmem:[#allocation8 + $0xc8] sm:$0xff]
        %v2556 = vld [vmem:[#allocation8 + $0xd0] sm:$0xff]
        %v2557 = vld [vmem:[#allocation8 + $0xd8] sm:$0xff]
        %v2558 = vld [vmem:[#allocation8 + $0xe0] sm:$0xff]
        %v2559 = vld [vmem:[#allocation8 + $0xe8] sm:$0xff]
        %v2560 = vld [vmem:[#allocation8 + $0xf0] sm:$0xff]
        %v2561 = vld [vmem:[#allocation8 + $0xf8] sm:$0xff]
        %v2562 = vld [vmem:[#allocation8 + $0x100] sm:$0xff]
        %v2563 = vld [vmem:[#allocation8 + $0x108] sm:$0xff]
        %v2564 = vld [vmem:[#allocation8 + $0x110] sm:$0xff]
        %v2565 = vld [vmem:[#allocation8 + $0x118] sm:$0xff]
        %v2566 = vld [vmem:[#allocation8 + $0x120] sm:$0xff]
        %v2567 = vld [vmem:[#allocation8 + $0x128] sm:$0xff]
        %v2568 = vld [vmem:[#allocation8 + $0x130] sm:$0xff]
        %v2569 = vld [vmem:[#allocation8 + $0x138] sm:$0xff]
        %v2570 = vld [vmem:[#allocation8 + $0x140] sm:$0xff]
        %v2571 = vld [vmem:[#allocation8 + $0x148] sm:$0xff]
        %v2572 = vld [vmem:[#allocation8 + $0x150] sm:$0xff]
        %v2573 = vld [vmem:[#allocation8 + $0x158] sm:$0xff]
        %v2574 = vld [vmem:[#allocation8 + $0x160] sm:$0xff]
        %v2575 = vld [vmem:[#allocation8 + $0x168] sm:$0xff]
        %v2576 = vld [vmem:[#allocation8 + $0x170] sm:$0xff]
        %v2577 = vld [vmem:[#allocation8 + $0x178] sm:$0xff]
        %v2578 = vld [vmem:[#allocation8 + $0x180] sm:$0xff]
        %v2579 = vld [vmem:[#allocation8 + $0x188] sm:$0xff]
        %v2580 = vld [vmem:[#allocation8 + $0x190] sm:$0xff]
        %v2581 = vld [vmem:[#allocation8 + $0x198] sm:$0xff]
        %v2582 = vld [vmem:[#allocation8 + $0x1a0] sm:$0xff]
        %v2583 = vld [vmem:[#allocation8 + $0x1a8] sm:$0xff]
        %v2584 = vld [vmem:[#allocation8 + $0x1b0] sm:$0xff]
        %v2585 = vld [vmem:[#allocation8 + $0x1b8] sm:$0xff]
        %v2586 = vld [vmem:[#allocation8 + $0x1c0] sm:$0xff]
        %v2587 = vld [vmem:[#allocation8 + $0x1c8] sm:$0xff]
        %v2588 = vld [vmem:[#allocation8 + $0x1d0] sm:$0xff]
        %v2589 = vld [vmem:[#allocation8 + $0x1d8] sm:$0xff]
        %v2590 = vld [vmem:[#allocation8 + $0x1e0] sm:$0xff]
        %v2591 = vld [vmem:[#allocation8 + $0x1e8] sm:$0xff]
        %v2592 = vld [vmem:[#allocation8 + $0x1f0] sm:$0xff]
        %v2593 = vld [vmem:[#allocation8 + $0x1f8] sm:$0xff]
        %v2594 = vld [vmem:[#allocation8 + $0x200] sm:$0xff]
        %v2595 = vld [vmem:[#allocation8 + $0x208] sm:$0xff]
        %v2596 = vld [vmem:[#allocation8 + $0x210] sm:$0xff]
        %v2597 = vld [vmem:[#allocation8 + $0x218] sm:$0xff]
        %v2598 = vld [vmem:[#allocation8 + $0x220] sm:$0xff]
        %v2599 = vld [vmem:[#allocation8 + $0x228] sm:$0xff]
        %v2600 = vld [vmem:[#allocation8 + $0x230] sm:$0xff]
        %v2601 = vld [vmem:[#allocation8 + $0x238] sm:$0xff]
        %v2602 = vld [vmem:[#allocation8 + $0x240] sm:$0xff]
        %v2603 = vld [vmem:[#allocation8 + $0x248] sm:$0xff]
        %v2604 = vld [vmem:[#allocation8 + $0x250] sm:$0xff]
        %v2605 = vld [vmem:[#allocation8 + $0x258] sm:$0xff]
        %v2606 = vld [vmem:[#allocation8 + $0x260] sm:$0xff]
        %v2607 = vld [vmem:[#allocation8 + $0x268] sm:$0xff]
        %v2608 = vld [vmem:[#allocation8 + $0x270] sm:$0xff]
        %v2609 = vld [vmem:[#allocation8 + $0x278] sm:$0xff]
        %v2610 = vld [vmem:[#allocation8 + $0x280] sm:$0xff]
        %v2611 = vld [vmem:[#allocation8 + $0x288] sm:$0xff]
        %v2612 = vld [vmem:[#allocation8 + $0x290] sm:$0xff]
        %v2613 = vld [vmem:[#allocation8 + $0x298] sm:$0xff]
        %v2614 = vld [vmem:[#allocation8 + $0x2a0] sm:$0xff]
        %v2615 = vld [vmem:[#allocation8 + $0x2a8] sm:$0xff]
        %v2616 = vld [vmem:[#allocation8 + $0x2b0] sm:$0xff]
        %v2617 = vld [vmem:[#allocation8 + $0x2b8] sm:$0xff]
        %v2618 = vld [vmem:[#allocation8 + $0x2c0] sm:$0xff]
        %v2619 = vld [vmem:[#allocation8 + $0x2c8] sm:$0xff]
        %v2620 = vld [vmem:[#allocation8 + $0x2d0] sm:$0xff]
        %v2621 = vld [vmem:[#allocation8 + $0x2d8] sm:$0xff]
        %v2622 = vld [vmem:[#allocation8 + $0x2e0] sm:$0xff]
        %v2623 = vld [vmem:[#allocation8 + $0x2e8] sm:$0xff]
        %v2624 = vld [vmem:[#allocation8 + $0x2f0] sm:$0xff]
        %v2625 = vld [vmem:[#allocation8 + $0x2f8] sm:$0xff]
        %v2626 = vld [vmem:[#allocation8 + $0x300] sm:$0xff]
        %v2627 = vld [vmem:[#allocation8 + $0x308] sm:$0xff]
        %v2628 = vld [vmem:[#allocation8 + $0x310] sm:$0xff]
        %v2629 = vld [vmem:[#allocation8 + $0x318] sm:$0xff]
        %v2630 = vld [vmem:[#allocation8 + $0x320] sm:$0xff]
        %v2631 = vld [vmem:[#allocation8 + $0x328] sm:$0xff]
        %v2632 = vld [vmem:[#allocation8 + $0x330] sm:$0xff]
        %v2633 = vld [vmem:[#allocation8 + $0x338] sm:$0xff]
        %v2634 = vld [vmem:[#allocation8 + $0x340] sm:$0xff]
        %v2635 = vld [vmem:[#allocation8 + $0x348] sm:$0xff]
        %v2636 = vld [vmem:[#allocation8 + $0x350] sm:$0xff]
        %v2637 = vld [vmem:[#allocation8 + $0x358] sm:$0xff]
        %v2638 = vld [vmem:[#allocation8 + $0x360] sm:$0xff]
        %v2639 = vld [vmem:[#allocation8 + $0x368] sm:$0xff]
        %v2640 = vld [vmem:[#allocation8 + $0x370] sm:$0xff]
        %v2641 = vld [vmem:[#allocation8 + $0x378] sm:$0xff]
        %v2642 = vld [vmem:[#allocation8 + $0x380] sm:$0xff]
        %v2643 = vld [vmem:[#allocation8 + $0x388] sm:$0xff]
        %v2644 = vld [vmem:[#allocation8 + $0x390] sm:$0xff]
        %v2645 = vld [vmem:[#allocation8 + $0x398] sm:$0xff]
        %v2646 = vld [vmem:[#allocation8 + $0x3a0] sm:$0xff]
        %v2647 = vld [vmem:[#allocation8 + $0x3a8] sm:$0xff]
        %v2648 = vld [vmem:[#allocation8 + $0x3b0] sm:$0xff]
        %v2649 = vld [vmem:[#allocation8 + $0x3b8] sm:$0xff]
        %v2650 = vld [vmem:[#allocation8 + $0x3c0] sm:$0xff]
        %v2651 = vld [vmem:[#allocation8 + $0x3c8] sm:$0xff]
        %v2652 = vld [vmem:[#allocation8 + $0x3d0] sm:$0xff]
        %v2653 = vld [vmem:[#allocation8 + $0x3d8] sm:$0xff]
        %v2654 = vld [vmem:[#allocation8 + $0x3e0] sm:$0xff]
        %v2655 = vld [vmem:[#allocation8 + $0x3e8] sm:$0xff]
        %v2656 = vld [vmem:[#allocation8 + $0x3f0] sm:$0xff]
        %v2657 = vld [vmem:[#allocation8 + $0x3f8] sm:$0xff]
        %v2658 = vld [vmem:[#allocation8 + $0x400] sm:$0xff]
        %v2659 = vld [vmem:[#allocation8 + $0x408] sm:$0xff]
        %v2660 = vld [vmem:[#allocation8 + $0x410] sm:$0xff]
        %v2661 = vld [vmem:[#allocation8 + $0x418] sm:$0xff]
        %v2662 = vld [vmem:[#allocation8 + $0x420] sm:$0xff]
        %v2663 = vld [vmem:[#allocation8 + $0x428] sm:$0xff]
        %v2664 = vld [vmem:[#allocation8 + $0x430] sm:$0xff]
        %v2665 = vld [vmem:[#allocation8 + $0x438] sm:$0xff]
        %v2666 = vld [vmem:[#allocation8 + $0x440] sm:$0xff]
        %v2667 = vld [vmem:[#allocation8 + $0x448] sm:$0xff]
        %v2668 = vld [vmem:[#allocation8 + $0x450] sm:$0xff]
        %v2669 = vld [vmem:[#allocation8 + $0x458] sm:$0xff]
        %v2670 = vld [vmem:[#allocation8 + $0x460] sm:$0xff]
        %v2671 = vld [vmem:[#allocation8 + $0x468] sm:$0xff]
        %v2672 = vld [vmem:[#allocation8 + $0x470] sm:$0xff]
        %v2673 = vld [vmem:[#allocation8 + $0x478] sm:$0xff]
        %v2674 = vld [vmem:[#allocation8 + $0x480] sm:$0xff]
        %v2675 = vld [vmem:[#allocation8 + $0x488] sm:$0xff]
        %v2676 = vld [vmem:[#allocation8 + $0x490] sm:$0xff]
        %v2677 = vld [vmem:[#allocation8 + $0x498] sm:$0xff]
        %v2678 = vld [vmem:[#allocation8 + $0x4a0] sm:$0xff]
        %v2679 = vld [vmem:[#allocation8 + $0x4a8] sm:$0xff]
        %v2680 = vld [vmem:[#allocation8 + $0x4b0] sm:$0xff]
        %v2681 = vld [vmem:[#allocation8 + $0x4b8] sm:$0xff]
        %v2682 = vld [vmem:[#allocation8 + $0x4c0] sm:$0xff]
        %v2683 = vld [vmem:[#allocation8 + $0x4c8] sm:$0xff]
        %v2684 = vld [vmem:[#allocation8 + $0x4d0] sm:$0xff]
        %v2685 = vld [vmem:[#allocation8 + $0x4d8] sm:$0xff]
        %v2686 = vld [vmem:[#allocation8 + $0x4e0] sm:$0xff]
        %v2687 = vld [vmem:[#allocation8 + $0x4e8] sm:$0xff]
        %v2688 = vld [vmem:[#allocation8 + $0x4f0] sm:$0xff]
        %v2689 = vld [vmem:[#allocation8 + $0x4f8] sm:$0xff]
        %v2690 = vld [vmem:[#allocation8 + $0x500] sm:$0xff]
        %v2691 = vld [vmem:[#allocation8 + $0x508] sm:$0xff]
        %v2692 = vld [vmem:[#allocation8 + $0x510] sm:$0xff]
        %v2693 = vld [vmem:[#allocation8 + $0x518] sm:$0xff]
        %v2694 = vld [vmem:[#allocation8 + $0x520] sm:$0xff]
        %v2695 = vld [vmem:[#allocation8 + $0x528] sm:$0xff]
        %v2696 = vld [vmem:[#allocation8 + $0x530] sm:$0xff]
        %v2697 = vld [vmem:[#allocation8 + $0x538] sm:$0xff]
        %v2698 = vld [vmem:[#allocation8 + $0x540] sm:$0xff]
        %v2699 = vld [vmem:[#allocation8 + $0x548] sm:$0xff]
        %v2700 = vld [vmem:[#allocation8 + $0x550] sm:$0xff]
        %v2701 = vld [vmem:[#allocation8 + $0x558] sm:$0xff]
        %v2702 = vld [vmem:[#allocation8 + $0x560] sm:$0xff]
        %v2703 = vld [vmem:[#allocation8 + $0x568] sm:$0xff]
        %v2704 = vld [vmem:[#allocation8 + $0x570] sm:$0xff]
        %v2705 = vld [vmem:[#allocation8 + $0x578] sm:$0xff]
        %v2706 = vld [vmem:[#allocation8 + $0x580] sm:$0xff]
        %v2707 = vld [vmem:[#allocation8 + $0x588] sm:$0xff]
        %v2708 = vld [vmem:[#allocation8 + $0x590] sm:$0xff]
        %v2709 = vld [vmem:[#allocation8 + $0x598] sm:$0xff]
        %v2710 = vld [vmem:[#allocation8 + $0x5a0] sm:$0xff]
        %v2711 = vld [vmem:[#allocation8 + $0x5a8] sm:$0xff]
        %v2712 = vld [vmem:[#allocation8 + $0x5b0] sm:$0xff]
        %v2713 = vld [vmem:[#allocation8 + $0x5b8] sm:$0xff]
        %v2714 = vld [vmem:[#allocation8 + $0x5c0] sm:$0xff]
        %v2715 = vld [vmem:[#allocation8 + $0x5c8] sm:$0xff]
        %v2716 = vld [vmem:[#allocation8 + $0x5d0] sm:$0xff]
        %v2717 = vld [vmem:[#allocation8 + $0x5d8] sm:$0xff]
        %v2718 = vld [vmem:[#allocation8 + $0x5e0] sm:$0xff]
        %v2719 = vld [vmem:[#allocation8 + $0x5e8] sm:$0xff]
        %v2720 = vld [vmem:[#allocation8 + $0x5f0] sm:$0xff]
        %v2721 = vld [vmem:[#allocation8 + $0x5f8] sm:$0xff]
        %v2722 = vld [vmem:[#allocation10] sm:$0xf]
        %v2724 = vlaneseq
        %v2725 = vshrl.u32 %v2724, 7
        %v2726 = vsub.s32 0, %v2725
        %v2727 = vrot.slane %v2722, %v2726
        %v2728 = vlaneseq
        %v2729 = vshrl.u32 %v2728, 7
        %v2730 = vsub.s32 1, %v2729
        %v2731 = vrot.slane %v2722, %v2730
        %v2732 = vlaneseq
        %v2733 = vshrl.u32 %v2732, 7
        %v2734 = vsub.s32 2, %v2733
        %v2735 = vrot.slane %v2722, %v2734
        %v2736 = vlaneseq
        %v2737 = vshrl.u32 %v2736, 7
        %v2738 = vsub.s32 3, %v2737
        %v2739 = vrot.slane %v2722, %v2738
        %v2936 = vunpack.c.l.b16 %v2530
        %v2937 = vunpack.c.h.b16 %v2530
        %v2938 = vunpack.c.l.b16 %v2531
        %v2939 = vunpack.c.h.b16 %v2531
        %v2940 = vunpack.c.l.b16 %v2532
        %v2941 = vunpack.c.h.b16 %v2532
        %v2942 = vunpack.c.l.b16 %v2533
        %v2943 = vunpack.c.h.b16 %v2533
        %v2944 = vunpack.c.l.b16 %v2534
        %v2945 = vunpack.c.h.b16 %v2534
        %v2946 = vunpack.c.l.b16 %v2535
        %v2947 = vunpack.c.h.b16 %v2535
        %v2948 = vunpack.c.l.b16 %v2536
        %v2949 = vunpack.c.h.b16 %v2536
        %v2950 = vunpack.c.l.b16 %v2537
        %v2951 = vunpack.c.h.b16 %v2537
        %v2952 = vunpack.c.l.b16 %v2538
        %v2953 = vunpack.c.h.b16 %v2538
        %v2954 = vunpack.c.l.b16 %v2539
        %v2955 = vunpack.c.h.b16 %v2539
        %v2956 = vunpack.c.l.b16 %v2540
        %v2957 = vunpack.c.h.b16 %v2540
        %v2958 = vunpack.c.l.b16 %v2541
        %v2959 = vunpack.c.h.b16 %v2541
        %v2960 = vunpack.c.l.b16 %v2542
        %v2961 = vunpack.c.h.b16 %v2542
        %v2962 = vunpack.c.l.b16 %v2543
        %v2963 = vunpack.c.h.b16 %v2543
        %v2964 = vunpack.c.l.b16 %v2544
        %v2965 = vunpack.c.h.b16 %v2544
        %v2966 = vunpack.c.l.b16 %v2545
        %v2967 = vunpack.c.h.b16 %v2545
        %v2968 = vunpack.c.l.b16 %v2546
        %v2969 = vunpack.c.h.b16 %v2546
        %v2970 = vunpack.c.l.b16 %v2547
        %v2971 = vunpack.c.h.b16 %v2547
        %v2972 = vunpack.c.l.b16 %v2548
        %v2973 = vunpack.c.h.b16 %v2548
        %v2974 = vunpack.c.l.b16 %v2549
        %v2975 = vunpack.c.h.b16 %v2549
        %v2976 = vunpack.c.l.b16 %v2550
        %v2977 = vunpack.c.h.b16 %v2550
        %v2978 = vunpack.c.l.b16 %v2551
        %v2979 = vunpack.c.h.b16 %v2551
        %v2980 = vunpack.c.l.b16 %v2552
        %v2981 = vunpack.c.h.b16 %v2552
        %v2982 = vunpack.c.l.b16 %v2553
        %v2983 = vunpack.c.h.b16 %v2553
        %v2984 = vunpack.c.l.b16 %v2554
        %v2985 = vunpack.c.h.b16 %v2554
        %v2986 = vunpack.c.l.b16 %v2555
        %v2987 = vunpack.c.h.b16 %v2555
        %v2988 = vunpack.c.l.b16 %v2556
        %v2989 = vunpack.c.h.b16 %v2556
        %v2990 = vunpack.c.l.b16 %v2557
        %v2991 = vunpack.c.h.b16 %v2557
        %v2992 = vunpack.c.l.b16 %v2558
        %v2993 = vunpack.c.h.b16 %v2558
        %v2994 = vunpack.c.l.b16 %v2559
        %v2995 = vunpack.c.h.b16 %v2559
        %v2996 = vunpack.c.l.b16 %v2560
        %v2997 = vunpack.c.h.b16 %v2560
        %v2998 = vunpack.c.l.b16 %v2561
        %v2999 = vunpack.c.h.b16 %v2561
        %v3000 = vunpack.c.l.b16 %v2562
        %v3001 = vunpack.c.h.b16 %v2562
        %v3002 = vunpack.c.l.b16 %v2563
        %v3003 = vunpack.c.h.b16 %v2563
        %v3004 = vunpack.c.l.b16 %v2564
        %v3005 = vunpack.c.h.b16 %v2564
        %v3006 = vunpack.c.l.b16 %v2565
        %v3007 = vunpack.c.h.b16 %v2565
        %v3008 = vunpack.c.l.b16 %v2566
        %v3009 = vunpack.c.h.b16 %v2566
        %v3010 = vunpack.c.l.b16 %v2567
        %v3011 = vunpack.c.h.b16 %v2567
        %v3012 = vunpack.c.l.b16 %v2568
        %v3013 = vunpack.c.h.b16 %v2568
        %v3014 = vunpack.c.l.b16 %v2569
        %v3015 = vunpack.c.h.b16 %v2569
        %v3016 = vunpack.c.l.b16 %v2570
        %v3017 = vunpack.c.h.b16 %v2570
        %v3018 = vunpack.c.l.b16 %v2571
        %v3019 = vunpack.c.h.b16 %v2571
        %v3020 = vunpack.c.l.b16 %v2572
        %v3021 = vunpack.c.h.b16 %v2572
        %v3022 = vunpack.c.l.b16 %v2573
        %v3023 = vunpack.c.h.b16 %v2573
        %v3024 = vunpack.c.l.b16 %v2574
        %v3025 = vunpack.c.h.b16 %v2574
        %v3026 = vunpack.c.l.b16 %v2575
        %v3027 = vunpack.c.h.b16 %v2575
        %v3028 = vunpack.c.l.b16 %v2576
        %v3029 = vunpack.c.h.b16 %v2576
        %v3030 = vunpack.c.l.b16 %v2577
        %v3031 = vunpack.c.h.b16 %v2577
        %v3032 = vunpack.c.l.b16 %v2578
        %v3033 = vunpack.c.h.b16 %v2578
        %v3034 = vunpack.c.l.b16 %v2579
        %v3035 = vunpack.c.h.b16 %v2579
        %v3036 = vunpack.c.l.b16 %v2580
        %v3037 = vunpack.c.h.b16 %v2580
        %v3038 = vunpack.c.l.b16 %v2581
        %v3039 = vunpack.c.h.b16 %v2581
        %v3040 = vunpack.c.l.b16 %v2582
        %v3041 = vunpack.c.h.b16 %v2582
        %v3042 = vunpack.c.l.b16 %v2583
        %v3043 = vunpack.c.h.b16 %v2583
        %v3044 = vunpack.c.l.b16 %v2584
        %v3045 = vunpack.c.h.b16 %v2584
        %v3046 = vunpack.c.l.b16 %v2585
        %v3047 = vunpack.c.h.b16 %v2585
        %v3048 = vunpack.c.l.b16 %v2586
        %v3049 = vunpack.c.h.b16 %v2586
        %v3050 = vunpack.c.l.b16 %v2587
        %v3051 = vunpack.c.h.b16 %v2587
        %v3052 = vunpack.c.l.b16 %v2588
        %v3053 = vunpack.c.h.b16 %v2588
        %v3054 = vunpack.c.l.b16 %v2589
        %v3055 = vunpack.c.h.b16 %v2589
        %v3056 = vunpack.c.l.b16 %v2590
        %v3057 = vunpack.c.h.b16 %v2590
        %v3058 = vunpack.c.l.b16 %v2591
        %v3059 = vunpack.c.h.b16 %v2591
        %v3060 = vunpack.c.l.b16 %v2592
        %v3061 = vunpack.c.h.b16 %v2592
        %v3062 = vunpack.c.l.b16 %v2593
        %v3063 = vunpack.c.h.b16 %v2593
        %v3064 = vunpack.c.l.b16 %v2594
        %v3065 = vunpack.c.h.b16 %v2594
        %v3066 = vunpack.c.l.b16 %v2595
        %v3067 = vunpack.c.h.b16 %v2595
        %v3068 = vunpack.c.l.b16 %v2596
        %v3069 = vunpack.c.h.b16 %v2596
        %v3070 = vunpack.c.l.b16 %v2597
        %v3071 = vunpack.c.h.b16 %v2597
        %v3072 = vunpack.c.l.b16 %v2598
        %v3073 = vunpack.c.h.b16 %v2598
        %v3074 = vunpack.c.l.b16 %v2599
        %v3075 = vunpack.c.h.b16 %v2599
        %v3076 = vunpack.c.l.b16 %v2600
        %v3077 = vunpack.c.h.b16 %v2600
        %v3078 = vunpack.c.l.b16 %v2601
        %v3079 = vunpack.c.h.b16 %v2601
        %v3080 = vunpack.c.l.b16 %v2602
        %v3081 = vunpack.c.h.b16 %v2602
        %v3082 = vunpack.c.l.b16 %v2603
        %v3083 = vunpack.c.h.b16 %v2603
        %v3084 = vunpack.c.l.b16 %v2604
        %v3085 = vunpack.c.h.b16 %v2604
        %v3086 = vunpack.c.l.b16 %v2605
        %v3087 = vunpack.c.h.b16 %v2605
        %v3088 = vunpack.c.l.b16 %v2606
        %v3089 = vunpack.c.h.b16 %v2606
        %v3090 = vunpack.c.l.b16 %v2607
        %v3091 = vunpack.c.h.b16 %v2607
        %v3092 = vunpack.c.l.b16 %v2608
        %v3093 = vunpack.c.h.b16 %v2608
        %v3094 = vunpack.c.l.b16 %v2609
        %v3095 = vunpack.c.h.b16 %v2609
        %v3096 = vunpack.c.l.b16 %v2610
        %v3097 = vunpack.c.h.b16 %v2610
        %v3098 = vunpack.c.l.b16 %v2611
        %v3099 = vunpack.c.h.b16 %v2611
        %v3100 = vunpack.c.l.b16 %v2612
        %v3101 = vunpack.c.h.b16 %v2612
        %v3102 = vunpack.c.l.b16 %v2613
        %v3103 = vunpack.c.h.b16 %v2613
        %v3104 = vunpack.c.l.b16 %v2614
        %v3105 = vunpack.c.h.b16 %v2614
        %v3106 = vunpack.c.l.b16 %v2615
        %v3107 = vunpack.c.h.b16 %v2615
        %v3108 = vunpack.c.l.b16 %v2616
        %v3109 = vunpack.c.h.b16 %v2616
        %v3110 = vunpack.c.l.b16 %v2617
        %v3111 = vunpack.c.h.b16 %v2617
        %v3112 = vunpack.c.l.b16 %v2618
        %v3113 = vunpack.c.h.b16 %v2618
        %v3114 = vunpack.c.l.b16 %v2619
        %v3115 = vunpack.c.h.b16 %v2619
        %v3116 = vunpack.c.l.b16 %v2620
        %v3117 = vunpack.c.h.b16 %v2620
        %v3118 = vunpack.c.l.b16 %v2621
        %v3119 = vunpack.c.h.b16 %v2621
        %v3120 = vunpack.c.l.b16 %v2622
        %v3121 = vunpack.c.h.b16 %v2622
        %v3122 = vunpack.c.l.b16 %v2623
        %v3123 = vunpack.c.h.b16 %v2623
        %v3124 = vunpack.c.l.b16 %v2624
        %v3125 = vunpack.c.h.b16 %v2624
        %v3126 = vunpack.c.l.b16 %v2625
        %v3127 = vunpack.c.h.b16 %v2625
        %v3128 = vunpack.c.l.b16 %v2626
        %v3129 = vunpack.c.h.b16 %v2626
        %v3130 = vunpack.c.l.b16 %v2627
        %v3131 = vunpack.c.h.b16 %v2627
        %v3132 = vunpack.c.l.b16 %v2628
        %v3133 = vunpack.c.h.b16 %v2628
        %v3134 = vunpack.c.l.b16 %v2629
        %v3135 = vunpack.c.h.b16 %v2629
        %v3136 = vunpack.c.l.b16 %v2630
        %v3137 = vunpack.c.h.b16 %v2630
        %v3138 = vunpack.c.l.b16 %v2631
        %v3139 = vunpack.c.h.b16 %v2631
        %v3140 = vunpack.c.l.b16 %v2632
        %v3141 = vunpack.c.h.b16 %v2632
        %v3142 = vunpack.c.l.b16 %v2633
        %v3143 = vunpack.c.h.b16 %v2633
        %v3144 = vunpack.c.l.b16 %v2634
        %v3145 = vunpack.c.h.b16 %v2634
        %v3146 = vunpack.c.l.b16 %v2635
        %v3147 = vunpack.c.h.b16 %v2635
        %v3148 = vunpack.c.l.b16 %v2636
        %v3149 = vunpack.c.h.b16 %v2636
        %v3150 = vunpack.c.l.b16 %v2637
        %v3151 = vunpack.c.h.b16 %v2637
        %v3152 = vunpack.c.l.b16 %v2638
        %v3153 = vunpack.c.h.b16 %v2638
        %v3154 = vunpack.c.l.b16 %v2639
        %v3155 = vunpack.c.h.b16 %v2639
        %v3156 = vunpack.c.l.b16 %v2640
        %v3157 = vunpack.c.h.b16 %v2640
        %v3158 = vunpack.c.l.b16 %v2641
        %v3159 = vunpack.c.h.b16 %v2641
        %v3160 = vunpack.c.l.b16 %v2642
        %v3161 = vunpack.c.h.b16 %v2642
        %v3162 = vunpack.c.l.b16 %v2643
        %v3163 = vunpack.c.h.b16 %v2643
        %v3164 = vunpack.c.l.b16 %v2644
        %v3165 = vunpack.c.h.b16 %v2644
        %v3166 = vunpack.c.l.b16 %v2645
        %v3167 = vunpack.c.h.b16 %v2645
        %v3168 = vunpack.c.l.b16 %v2646
        %v3169 = vunpack.c.h.b16 %v2646
        %v3170 = vunpack.c.l.b16 %v2647
        %v3171 = vunpack.c.h.b16 %v2647
        %v3172 = vunpack.c.l.b16 %v2648
        %v3173 = vunpack.c.h.b16 %v2648
        %v3174 = vunpack.c.l.b16 %v2649
        %v3175 = vunpack.c.h.b16 %v2649
        %v3176 = vunpack.c.l.b16 %v2650
        %v3177 = vunpack.c.h.b16 %v2650
        %v3178 = vunpack.c.l.b16 %v2651
        %v3179 = vunpack.c.h.b16 %v2651
        %v3180 = vunpack.c.l.b16 %v2652
        %v3181 = vunpack.c.h.b16 %v2652
        %v3182 = vunpack.c.l.b16 %v2653
        %v3183 = vunpack.c.h.b16 %v2653
        %v3184 = vunpack.c.l.b16 %v2654
        %v3185 = vunpack.c.h.b16 %v2654
        %v3186 = vunpack.c.l.b16 %v2655
        %v3187 = vunpack.c.h.b16 %v2655
        %v3188 = vunpack.c.l.b16 %v2656
        %v3189 = vunpack.c.h.b16 %v2656
        %v3190 = vunpack.c.l.b16 %v2657
        %v3191 = vunpack.c.h.b16 %v2657
        %v3192 = vunpack.c.l.b16 %v2658
        %v3193 = vunpack.c.h.b16 %v2658
        %v3194 = vunpack.c.l.b16 %v2659
        %v3195 = vunpack.c.h.b16 %v2659
        %v3196 = vunpack.c.l.b16 %v2660
        %v3197 = vunpack.c.h.b16 %v2660
        %v3198 = vunpack.c.l.b16 %v2661
        %v3199 = vunpack.c.h.b16 %v2661
        %v3200 = vunpack.c.l.b16 %v2662
        %v3201 = vunpack.c.h.b16 %v2662
        %v3202 = vunpack.c.l.b16 %v2663
        %v3203 = vunpack.c.h.b16 %v2663
        %v3204 = vunpack.c.l.b16 %v2664
        %v3205 = vunpack.c.h.b16 %v2664
        %v3206 = vunpack.c.l.b16 %v2665
        %v3207 = vunpack.c.h.b16 %v2665
        %v3208 = vunpack.c.l.b16 %v2666
        %v3209 = vunpack.c.h.b16 %v2666
        %v3210 = vunpack.c.l.b16 %v2667
        %v3211 = vunpack.c.h.b16 %v2667
        %v3212 = vunpack.c.l.b16 %v2668
        %v3213 = vunpack.c.h.b16 %v2668
        %v3214 = vunpack.c.l.b16 %v2669
        %v3215 = vunpack.c.h.b16 %v2669
        %v3216 = vunpack.c.l.b16 %v2670
        %v3217 = vunpack.c.h.b16 %v2670
        %v3218 = vunpack.c.l.b16 %v2671
        %v3219 = vunpack.c.h.b16 %v2671
        %v3220 = vunpack.c.l.b16 %v2672
        %v3221 = vunpack.c.h.b16 %v2672
        %v3222 = vunpack.c.l.b16 %v2673
        %v3223 = vunpack.c.h.b16 %v2673
        %v3224 = vunpack.c.l.b16 %v2674
        %v3225 = vunpack.c.h.b16 %v2674
        %v3226 = vunpack.c.l.b16 %v2675
        %v3227 = vunpack.c.h.b16 %v2675
        %v3228 = vunpack.c.l.b16 %v2676
        %v3229 = vunpack.c.h.b16 %v2676
        %v3230 = vunpack.c.l.b16 %v2677
        %v3231 = vunpack.c.h.b16 %v2677
        %v3232 = vunpack.c.l.b16 %v2678
        %v3233 = vunpack.c.h.b16 %v2678
        %v3234 = vunpack.c.l.b16 %v2679
        %v3235 = vunpack.c.h.b16 %v2679
        %v3236 = vunpack.c.l.b16 %v2680
        %v3237 = vunpack.c.h.b16 %v2680
        %v3238 = vunpack.c.l.b16 %v2681
        %v3239 = vunpack.c.h.b16 %v2681
        %v3240 = vunpack.c.l.b16 %v2682
        %v3241 = vunpack.c.h.b16 %v2682
        %v3242 = vunpack.c.l.b16 %v2683
        %v3243 = vunpack.c.h.b16 %v2683
        %v3244 = vunpack.c.l.b16 %v2684
        %v3245 = vunpack.c.h.b16 %v2684
        %v3246 = vunpack.c.l.b16 %v2685
        %v3247 = vunpack.c.h.b16 %v2685
        %v3248 = vunpack.c.l.b16 %v2686
        %v3249 = vunpack.c.h.b16 %v2686
        %v3250 = vunpack.c.l.b16 %v2687
        %v3251 = vunpack.c.h.b16 %v2687
        %v3252 = vunpack.c.l.b16 %v2688
        %v3253 = vunpack.c.h.b16 %v2688
        %v3254 = vunpack.c.l.b16 %v2689
        %v3255 = vunpack.c.h.b16 %v2689
        %v3256 = vunpack.c.l.b16 %v2690
        %v3257 = vunpack.c.h.b16 %v2690
        %v3258 = vunpack.c.l.b16 %v2691
        %v3259 = vunpack.c.h.b16 %v2691
        %v3260 = vunpack.c.l.b16 %v2692
        %v3261 = vunpack.c.h.b16 %v2692
        %v3262 = vunpack.c.l.b16 %v2693
        %v3263 = vunpack.c.h.b16 %v2693
        %v3264 = vunpack.c.l.b16 %v2694
        %v3265 = vunpack.c.h.b16 %v2694
        %v3266 = vunpack.c.l.b16 %v2695
        %v3267 = vunpack.c.h.b16 %v2695
        %v3268 = vunpack.c.l.b16 %v2696
        %v3269 = vunpack.c.h.b16 %v2696
        %v3270 = vunpack.c.l.b16 %v2697
        %v3271 = vunpack.c.h.b16 %v2697
        %v3272 = vunpack.c.l.b16 %v2698
        %v3273 = vunpack.c.h.b16 %v2698
        %v3274 = vunpack.c.l.b16 %v2699
        %v3275 = vunpack.c.h.b16 %v2699
        %v3276 = vunpack.c.l.b16 %v2700
        %v3277 = vunpack.c.h.b16 %v2700
        %v3278 = vunpack.c.l.b16 %v2701
        %v3279 = vunpack.c.h.b16 %v2701
        %v3280 = vunpack.c.l.b16 %v2702
        %v3281 = vunpack.c.h.b16 %v2702
        %v3282 = vunpack.c.l.b16 %v2703
        %v3283 = vunpack.c.h.b16 %v2703
        %v3284 = vunpack.c.l.b16 %v2704
        %v3285 = vunpack.c.h.b16 %v2704
        %v3286 = vunpack.c.l.b16 %v2705
        %v3287 = vunpack.c.h.b16 %v2705
        %v3288 = vunpack.c.l.b16 %v2706
        %v3289 = vunpack.c.h.b16 %v2706
        %v3290 = vunpack.c.l.b16 %v2707
        %v3291 = vunpack.c.h.b16 %v2707
        %v3292 = vunpack.c.l.b16 %v2708
        %v3293 = vunpack.c.h.b16 %v2708
        %v3294 = vunpack.c.l.b16 %v2709
        %v3295 = vunpack.c.h.b16 %v2709
        %v3296 = vunpack.c.l.b16 %v2710
        %v3297 = vunpack.c.h.b16 %v2710
        %v3298 = vunpack.c.l.b16 %v2711
        %v3299 = vunpack.c.h.b16 %v2711
        %v3300 = vunpack.c.l.b16 %v2712
        %v3301 = vunpack.c.h.b16 %v2712
        %v3302 = vunpack.c.l.b16 %v2713
        %v3303 = vunpack.c.h.b16 %v2713
        %v3304 = vunpack.c.l.b16 %v2714
        %v3305 = vunpack.c.h.b16 %v2714
        %v3306 = vunpack.c.l.b16 %v2715
        %v3307 = vunpack.c.h.b16 %v2715
        %v3308 = vunpack.c.l.b16 %v2716
        %v3309 = vunpack.c.h.b16 %v2716
        %v3310 = vunpack.c.l.b16 %v2717
        %v3311 = vunpack.c.h.b16 %v2717
        %v3312 = vunpack.c.l.b16 %v2718
        %v3313 = vunpack.c.h.b16 %v2718
        %v3314 = vunpack.c.l.b16 %v2719
        %v3315 = vunpack.c.h.b16 %v2719
        %v3316 = vunpack.c.l.b16 %v2720
        %v3317 = vunpack.c.h.b16 %v2720
        %v3318 = vunpack.c.l.b16 %v2721
        %v3319 = vunpack.c.h.b16 %v2721
        %v3320 = vpack.c.b16 %v2940, %v2936
        %v3321 = vpack.c.b16 %v2941, %v2937
        %v3322 = vpack.c.b16 %v2942, %v2938
        %v3323 = vpack.c.b16 %v2943, %v2939
        %v3324 = vpack.c.b16 %v2948, %v2944
        %v3325 = vpack.c.b16 %v2949, %v2945
        %v3326 = vpack.c.b16 %v2950, %v2946
        %v3327 = vpack.c.b16 %v2951, %v2947
        %v3328 = vpack.c.b16 %v2956, %v2952
        %v3329 = vpack.c.b16 %v2957, %v2953
        %v3330 = vpack.c.b16 %v2958, %v2954
        %v3331 = vpack.c.b16 %v2959, %v2955
        %v3332 = vpack.c.b16 %v2964, %v2960
        %v3333 = vpack.c.b16 %v2965, %v2961
        %v3334 = vpack.c.b16 %v2966, %v2962
        %v3335 = vpack.c.b16 %v2967, %v2963
        %v3336 = vpack.c.b16 %v2972, %v2968
        %v3337 = vpack.c.b16 %v2973, %v2969
        %v3338 = vpack.c.b16 %v2974, %v2970
        %v3339 = vpack.c.b16 %v2975, %v2971
        %v3340 = vpack.c.b16 %v2980, %v2976
        %v3341 = vpack.c.b16 %v2981, %v2977
        %v3342 = vpack.c.b16 %v2982, %v2978
        %v3343 = vpack.c.b16 %v2983, %v2979
        %v3344 = vpack.c.b16 %v2988, %v2984
        %v3345 = vpack.c.b16 %v2989, %v2985
        %v3346 = vpack.c.b16 %v2990, %v2986
        %v3347 = vpack.c.b16 %v2991, %v2987
        %v3348 = vpack.c.b16 %v2996, %v2992
        %v3349 = vpack.c.b16 %v2997, %v2993
        %v3350 = vpack.c.b16 %v2998, %v2994
        %v3351 = vpack.c.b16 %v2999, %v2995
        %v3352 = vpack.c.b16 %v3004, %v3000
        %v3353 = vpack.c.b16 %v3005, %v3001
        %v3354 = vpack.c.b16 %v3006, %v3002
        %v3355 = vpack.c.b16 %v3007, %v3003
        %v3356 = vpack.c.b16 %v3012, %v3008
        %v3357 = vpack.c.b16 %v3013, %v3009
        %v3358 = vpack.c.b16 %v3014, %v3010
        %v3359 = vpack.c.b16 %v3015, %v3011
        %v3360 = vpack.c.b16 %v3020, %v3016
        %v3361 = vpack.c.b16 %v3021, %v3017
        %v3362 = vpack.c.b16 %v3022, %v3018
        %v3363 = vpack.c.b16 %v3023, %v3019
        %v3364 = vpack.c.b16 %v3028, %v3024
        %v3365 = vpack.c.b16 %v3029, %v3025
        %v3366 = vpack.c.b16 %v3030, %v3026
        %v3367 = vpack.c.b16 %v3031, %v3027
        %v3368 = vpack.c.b16 %v3036, %v3032
        %v3369 = vpack.c.b16 %v3037, %v3033
        %v3370 = vpack.c.b16 %v3038, %v3034
        %v3371 = vpack.c.b16 %v3039, %v3035
        %v3372 = vpack.c.b16 %v3044, %v3040
        %v3373 = vpack.c.b16 %v3045, %v3041
        %v3374 = vpack.c.b16 %v3046, %v3042
        %v3375 = vpack.c.b16 %v3047, %v3043
        %v3376 = vpack.c.b16 %v3052, %v3048
        %v3377 = vpack.c.b16 %v3053, %v3049
        %v3378 = vpack.c.b16 %v3054, %v3050
        %v3379 = vpack.c.b16 %v3055, %v3051
        %v3380 = vpack.c.b16 %v3060, %v3056
        %v3381 = vpack.c.b16 %v3061, %v3057
        %v3382 = vpack.c.b16 %v3062, %v3058
        %v3383 = vpack.c.b16 %v3063, %v3059
        %v3384 = vpack.c.b16 %v3068, %v3064
        %v3385 = vpack.c.b16 %v3069, %v3065
        %v3386 = vpack.c.b16 %v3070, %v3066
        %v3387 = vpack.c.b16 %v3071, %v3067
        %v3388 = vpack.c.b16 %v3076, %v3072
        %v3389 = vpack.c.b16 %v3077, %v3073
        %v3390 = vpack.c.b16 %v3078, %v3074
        %v3391 = vpack.c.b16 %v3079, %v3075
        %v3392 = vpack.c.b16 %v3084, %v3080
        %v3393 = vpack.c.b16 %v3085, %v3081
        %v3394 = vpack.c.b16 %v3086, %v3082
        %v3395 = vpack.c.b16 %v3087, %v3083
        %v3396 = vpack.c.b16 %v3092, %v3088
        %v3397 = vpack.c.b16 %v3093, %v3089
        %v3398 = vpack.c.b16 %v3094, %v3090
        %v3399 = vpack.c.b16 %v3095, %v3091
        %v3400 = vpack.c.b16 %v3100, %v3096
        %v3401 = vpack.c.b16 %v3101, %v3097
        %v3402 = vpack.c.b16 %v3102, %v3098
        %v3403 = vpack.c.b16 %v3103, %v3099
        %v3404 = vpack.c.b16 %v3108, %v3104
        %v3405 = vpack.c.b16 %v3109, %v3105
        %v3406 = vpack.c.b16 %v3110, %v3106
        %v3407 = vpack.c.b16 %v3111, %v3107
        %v3408 = vpack.c.b16 %v3116, %v3112
        %v3409 = vpack.c.b16 %v3117, %v3113
        %v3410 = vpack.c.b16 %v3118, %v3114
        %v3411 = vpack.c.b16 %v3119, %v3115
        %v3412 = vpack.c.b16 %v3124, %v3120
        %v3413 = vpack.c.b16 %v3125, %v3121
        %v3414 = vpack.c.b16 %v3126, %v3122
        %v3415 = vpack.c.b16 %v3127, %v3123
        %v3416 = vpack.c.b16 %v3132, %v3128
        %v3417 = vpack.c.b16 %v3133, %v3129
        %v3418 = vpack.c.b16 %v3134, %v3130
        %v3419 = vpack.c.b16 %v3135, %v3131
        %v3420 = vpack.c.b16 %v3140, %v3136
        %v3421 = vpack.c.b16 %v3141, %v3137
        %v3422 = vpack.c.b16 %v3142, %v3138
        %v3423 = vpack.c.b16 %v3143, %v3139
        %v3424 = vpack.c.b16 %v3148, %v3144
        %v3425 = vpack.c.b16 %v3149, %v3145
        %v3426 = vpack.c.b16 %v3150, %v3146
        %v3427 = vpack.c.b16 %v3151, %v3147
        %v3428 = vpack.c.b16 %v3156, %v3152
        %v3429 = vpack.c.b16 %v3157, %v3153
        %v3430 = vpack.c.b16 %v3158, %v3154
        %v3431 = vpack.c.b16 %v3159, %v3155
        %v3432 = vpack.c.b16 %v3164, %v3160
        %v3433 = vpack.c.b16 %v3165, %v3161
        %v3434 = vpack.c.b16 %v3166, %v3162
        %v3435 = vpack.c.b16 %v3167, %v3163
        %v3436 = vpack.c.b16 %v3172, %v3168
        %v3437 = vpack.c.b16 %v3173, %v3169
        %v3438 = vpack.c.b16 %v3174, %v3170
        %v3439 = vpack.c.b16 %v3175, %v3171
        %v3440 = vpack.c.b16 %v3180, %v3176
        %v3441 = vpack.c.b16 %v3181, %v3177
        %v3442 = vpack.c.b16 %v3182, %v3178
        %v3443 = vpack.c.b16 %v3183, %v3179
        %v3444 = vpack.c.b16 %v3188, %v3184
        %v3445 = vpack.c.b16 %v3189, %v3185
        %v3446 = vpack.c.b16 %v3190, %v3186
        %v3447 = vpack.c.b16 %v3191, %v3187
        %v3448 = vpack.c.b16 %v3196, %v3192
        %v3449 = vpack.c.b16 %v3197, %v3193
        %v3450 = vpack.c.b16 %v3198, %v3194
        %v3451 = vpack.c.b16 %v3199, %v3195
        %v3452 = vpack.c.b16 %v3204, %v3200
        %v3453 = vpack.c.b16 %v3205, %v3201
        %v3454 = vpack.c.b16 %v3206, %v3202
        %v3455 = vpack.c.b16 %v3207, %v3203
        %v3456 = vpack.c.b16 %v3212, %v3208
        %v3457 = vpack.c.b16 %v3213, %v3209
        %v3458 = vpack.c.b16 %v3214, %v3210
        %v3459 = vpack.c.b16 %v3215, %v3211
        %v3460 = vpack.c.b16 %v3220, %v3216
        %v3461 = vpack.c.b16 %v3221, %v3217
        %v3462 = vpack.c.b16 %v3222, %v3218
        %v3463 = vpack.c.b16 %v3223, %v3219
        %v3464 = vpack.c.b16 %v3228, %v3224
        %v3465 = vpack.c.b16 %v3229, %v3225
        %v3466 = vpack.c.b16 %v3230, %v3226
        %v3467 = vpack.c.b16 %v3231, %v3227
        %v3468 = vpack.c.b16 %v3236, %v3232
        %v3469 = vpack.c.b16 %v3237, %v3233
        %v3470 = vpack.c.b16 %v3238, %v3234
        %v3471 = vpack.c.b16 %v3239, %v3235
        %v3472 = vpack.c.b16 %v3244, %v3240
        %v3473 = vpack.c.b16 %v3245, %v3241
        %v3474 = vpack.c.b16 %v3246, %v3242
        %v3475 = vpack.c.b16 %v3247, %v3243
        %v3476 = vpack.c.b16 %v3252, %v3248
        %v3477 = vpack.c.b16 %v3253, %v3249
        %v3478 = vpack.c.b16 %v3254, %v3250
        %v3479 = vpack.c.b16 %v3255, %v3251
        %v3480 = vpack.c.b16 %v3260, %v3256
        %v3481 = vpack.c.b16 %v3261, %v3257
        %v3482 = vpack.c.b16 %v3262, %v3258
        %v3483 = vpack.c.b16 %v3263, %v3259
        %v3484 = vpack.c.b16 %v3268, %v3264
        %v3485 = vpack.c.b16 %v3269, %v3265
        %v3486 = vpack.c.b16 %v3270, %v3266
        %v3487 = vpack.c.b16 %v3271, %v3267
        %v3488 = vpack.c.b16 %v3276, %v3272
        %v3489 = vpack.c.b16 %v3277, %v3273
        %v3490 = vpack.c.b16 %v3278, %v3274
        %v3491 = vpack.c.b16 %v3279, %v3275
        %v3492 = vpack.c.b16 %v3284, %v3280
        %v3493 = vpack.c.b16 %v3285, %v3281
        %v3494 = vpack.c.b16 %v3286, %v3282
        %v3495 = vpack.c.b16 %v3287, %v3283
        %v3496 = vpack.c.b16 %v3292, %v3288
        %v3497 = vpack.c.b16 %v3293, %v3289
        %v3498 = vpack.c.b16 %v3294, %v3290
        %v3499 = vpack.c.b16 %v3295, %v3291
        %v3500 = vpack.c.b16 %v3300, %v3296
        %v3501 = vpack.c.b16 %v3301, %v3297
        %v3502 = vpack.c.b16 %v3302, %v3298
        %v3503 = vpack.c.b16 %v3303, %v3299
        %v3504 = vpack.c.b16 %v3308, %v3304
        %v3505 = vpack.c.b16 %v3309, %v3305
        %v3506 = vpack.c.b16 %v3310, %v3306
        %v3507 = vpack.c.b16 %v3311, %v3307
        %v3508 = vpack.c.b16 %v3316, %v3312
        %v3509 = vpack.c.b16 %v3317, %v3313
        %v3510 = vpack.c.b16 %v3318, %v3314
        %v3511 = vpack.c.b16 %v3319, %v3315
        %3704 = vmatprep.subr.bf16.mxu0 %v3349
        %3705 = vmatpush1.bf16.msra.mxu0 %v3348
        %3706 = vmatprep.subr.bf16.mxu0 %v3345
        %3707 = vmatpush1.bf16.msra.mxu0 %v3344
        %3708 = vmatprep.subr.bf16.mxu0 %v3341
        %3709 = vmatpush1.bf16.msra.mxu0 %v3340
        %3710 = vmatprep.subr.bf16.mxu0 %v3337
        %3711 = vmatpush1.bf16.msra.mxu0 %v3336
        %3712 = vmatprep.subr.bf16.mxu0 %v3333
        %3713 = vmatpush1.bf16.msra.mxu0 %v3332
        %3714 = vmatprep.subr.bf16.mxu0 %v3329
        %3715 = vmatpush1.bf16.msra.mxu0 %v3328
        %3716 = vmatprep.subr.bf16.mxu0 %v3325
        %3717 = vmatpush1.bf16.msra.mxu0 %v3324
        %3718 = vmatprep.subr.bf16.mxu0 %v3321
        %3719 = vmatpush1.bf16.msra.mxu0 %v3320
        %3720 = vmatprep.subr.bf16.mxu0 %v3381
        %3721 = vmatpush2.bf16.msra.mxu0 %v3380
        %3722 = vmatprep.subr.bf16.mxu0 %v3377
        %3723 = vmatpush2.bf16.msra.mxu0 %v3376
        %3724 = vmatprep.subr.bf16.mxu0 %v3373
        %3725 = vmatpush2.bf16.msra.mxu0 %v3372
        %3726 = vmatprep.subr.bf16.mxu0 %v3369
        %3727 = vmatpush2.bf16.msra.mxu0 %v3368
        %3728 = vmatprep.subr.bf16.mxu0 %v3365
        %3729 = vmatpush2.bf16.msra.mxu0 %v3364
        %3730 = vmatprep.subr.bf16.mxu0 %v3361
        %3731 = vmatpush2.bf16.msra.mxu0 %v3360
        %3732 = vmatprep.subr.bf16.mxu0 %v3357
        %3733 = vmatpush2.bf16.msra.mxu0 %v3356
        %3734 = vmatprep.subr.bf16.mxu0 %v3353
        %3735 = vmatpush2.bf16.msra.mxu0 %v3352
        %3736 = vmatprep.mubr.bf16.mxu0 %v2525
        %3737 = vmatmul.mubr.bf16.gmra.mxu0 %v2524
        %v3738 = vpop.f32.mrf.mxu0
        %v3739 = vadd.f32 %v2727, %v3738
        %v3740 = vpop.f32.mrf.mxu0
        %v3741 = vadd.f32 %v2731, %v3740
        %v3742 = vpop.f32.mrf.mxu0
        %v3743 = vpop.f32.mrf.mxu0
        %3744 = vdwg.mxu0
        %3745 = vmatprep.subr.bf16.mxu0 %v3413
        %3746 = vmatpush1.bf16.msra.mxu0 %v3412
        %3747 = vmatprep.subr.bf16.mxu0 %v3409
        %3748 = vmatpush1.bf16.msra.mxu0 %v3408
        %3749 = vmatprep.subr.bf16.mxu0 %v3405
        %3750 = vmatpush1.bf16.msra.mxu0 %v3404
        %3751 = vmatprep.subr.bf16.mxu0 %v3401
        %3752 = vmatpush1.bf16.msra.mxu0 %v3400
        %3753 = vmatprep.subr.bf16.mxu0 %v3397
        %3754 = vmatpush1.bf16.msra.mxu0 %v3396
        %3755 = vmatprep.subr.bf16.mxu0 %v3393
        %3756 = vmatpush1.bf16.msra.mxu0 %v3392
        %3757 = vmatprep.subr.bf16.mxu0 %v3389
        %3758 = vmatpush1.bf16.msra.mxu0 %v3388
        %3759 = vmatprep.subr.bf16.mxu0 %v3385
        %3760 = vmatpush1.bf16.msra.mxu0 %v3384
        %3761 = vmatprep.subr.bf16.mxu0 %v3445
        %3762 = vmatpush2.bf16.msra.mxu0 %v3444
        %3763 = vmatprep.subr.bf16.mxu0 %v3441
        %3764 = vmatpush2.bf16.msra.mxu0 %v3440
        %3765 = vmatprep.subr.bf16.mxu0 %v3437
        %3766 = vmatpush2.bf16.msra.mxu0 %v3436
        %3767 = vmatprep.subr.bf16.mxu0 %v3433
        %3768 = vmatpush2.bf16.msra.mxu0 %v3432
        %3769 = vmatprep.subr.bf16.mxu0 %v3429
        %3770 = vmatpush2.bf16.msra.mxu0 %v3428
        %3771 = vmatprep.subr.bf16.mxu0 %v3425
        %3772 = vmatpush2.bf16.msra.mxu0 %v3424
        %3773 = vmatprep.subr.bf16.mxu0 %v3421
        %3774 = vmatpush2.bf16.msra.mxu0 %v3420
        %3775 = vmatprep.subr.bf16.mxu0 %v3417
        %3776 = vmatpush2.bf16.msra.mxu0 %v3416
        %3777 = vmatprep.mubr.bf16.mxu0 %v2527
        %3778 = vmatmul.mubr.bf16.gmra.mxu0 %v2526
        %v3779 = vpop.f32.mrf.mxu0
        %v3780 = vadd.f32 %v3739, %v3779
        %v3781 = vpop.f32.mrf.mxu0
        %v3782 = vadd.f32 %v3741, %v3781
        %v3783 = vpop.f32.mrf.mxu0
        %v3784 = vpop.f32.mrf.mxu0
        %3785 = vdwg.mxu0
        %3786 = vmatprep.subr.bf16.mxu0 %v3477
        %3787 = vmatpush1.bf16.msra.mxu0 %v3476
        %3788 = vmatprep.subr.bf16.mxu0 %v3473
        %3789 = vmatpush1.bf16.msra.mxu0 %v3472
        %3790 = vmatprep.subr.bf16.mxu0 %v3469
        %3791 = vmatpush1.bf16.msra.mxu0 %v3468
        %3792 = vmatprep.subr.bf16.mxu0 %v3465
        %3793 = vmatpush1.bf16.msra.mxu0 %v3464
        %3794 = vmatprep.subr.bf16.mxu0 %v3461
        %3795 = vmatpush1.bf16.msra.mxu0 %v3460
        %3796 = vmatprep.subr.bf16.mxu0 %v3457
        %3797 = vmatpush1.bf16.msra.mxu0 %v3456
        %3798 = vmatprep.subr.bf16.mxu0 %v3453
        %3799 = vmatpush1.bf16.msra.mxu0 %v3452
        %3800 = vmatprep.subr.bf16.mxu0 %v3449
        %3801 = vmatpush1.bf16.msra.mxu0 %v3448
        %3802 = vmatprep.subr.bf16.mxu0 %v3509
        %3803 = vmatpush2.bf16.msra.mxu0 %v3508
        %3804 = vmatprep.subr.bf16.mxu0 %v3505
        %3805 = vmatpush2.bf16.msra.mxu0 %v3504
        %3806 = vmatprep.subr.bf16.mxu0 %v3501
        %3807 = vmatpush2.bf16.msra.mxu0 %v3500
        %3808 = vmatprep.subr.bf16.mxu0 %v3497
        %3809 = vmatpush2.bf16.msra.mxu0 %v3496
        %3810 = vmatprep.subr.bf16.mxu0 %v3493
        %3811 = vmatpush2.bf16.msra.mxu0 %v3492
        %3812 = vmatprep.subr.bf16.mxu0 %v3489
        %3813 = vmatpush2.bf16.msra.mxu0 %v3488
        %3814 = vmatprep.subr.bf16.mxu0 %v3485
        %3815 = vmatpush2.bf16.msra.mxu0 %v3484
        %3816 = vmatprep.subr.bf16.mxu0 %v3481
        %3817 = vmatpush2.bf16.msra.mxu0 %v3480
        %3818 = vmatprep.mubr.bf16.mxu0 %v2529
        %3819 = vmatmul.mubr.bf16.gmra.mxu0 %v2528
        %v3820 = vpop.f32.mrf.mxu0
        %v3821 = vadd.f32 %v3780, %v3820
        %v3822 = vpop.f32.mrf.mxu0
        %v3823 = vadd.f32 %v3782, %v3822
        %v3824 = vpop.f32.mrf.mxu0
        %v3825 = vpop.f32.mrf.mxu0
        %3826 = vdwg.mxu0
        %3827 = vmatprep.subr.bf16.mxu0 %v3351
        %3828 = vmatpush1.bf16.msra.mxu0 %v3350
        %3829 = vmatprep.subr.bf16.mxu0 %v3347
        %3830 = vmatpush1.bf16.msra.mxu0 %v3346
        %3831 = vmatprep.subr.bf16.mxu0 %v3343
        %3832 = vmatpush1.bf16.msra.mxu0 %v3342
        %3833 = vmatprep.subr.bf16.mxu0 %v3339
        %3834 = vmatpush1.bf16.msra.mxu0 %v3338
        %3835 = vmatprep.subr.bf16.mxu0 %v3335
        %3836 = vmatpush1.bf16.msra.mxu0 %v3334
        %3837 = vmatprep.subr.bf16.mxu0 %v3331
        %3838 = vmatpush1.bf16.msra.mxu0 %v3330
        %3839 = vmatprep.subr.bf16.mxu0 %v3327
        %3840 = vmatpush1.bf16.msra.mxu0 %v3326
        %3841 = vmatprep.subr.bf16.mxu0 %v3323
        %3842 = vmatpush1.bf16.msra.mxu0 %v3322
        %3843 = vmatprep.subr.bf16.mxu0 %v3383
        %3844 = vmatpush2.bf16.msra.mxu0 %v3382
        %3845 = vmatprep.subr.bf16.mxu0 %v3379
        %3846 = vmatpush2.bf16.msra.mxu0 %v3378
        %3847 = vmatprep.subr.bf16.mxu0 %v3375
        %3848 = vmatpush2.bf16.msra.mxu0 %v3374
        %3849 = vmatprep.subr.bf16.mxu0 %v3371
        %3850 = vmatpush2.bf16.msra.mxu0 %v3370
        %3851 = vmatprep.subr.bf16.mxu0 %v3367
        %3852 = vmatpush2.bf16.msra.mxu0 %v3366
        %3853 = vmatprep.subr.bf16.mxu0 %v3363
        %3854 = vmatpush2.bf16.msra.mxu0 %v3362
        %3855 = vmatprep.subr.bf16.mxu0 %v3359
        %3856 = vmatpush2.bf16.msra.mxu0 %v3358
        %3857 = vmatprep.subr.bf16.mxu0 %v3355
        %3858 = vmatpush2.bf16.msra.mxu0 %v3354
        %3859 = vmatprep.mubr.bf16.mxu0 %v2525
        %3860 = vmatmul.mubr.bf16.gmra.mxu0 %v2524
        %v3861 = vpop.f32.mrf.mxu0
        %v3862 = vadd.f32 %v2735, %v3861
        %v3863 = vpop.f32.mrf.mxu0
        %v3864 = vadd.f32 %v2739, %v3863
        %v3865 = vpop.f32.mrf.mxu0
        %v3866 = vpop.f32.mrf.mxu0
        %3867 = vdwg.mxu0
        %3868 = vmatprep.subr.bf16.mxu0 %v3415
        %3869 = vmatpush1.bf16.msra.mxu0 %v3414
        %3870 = vmatprep.subr.bf16.mxu0 %v3411
        %3871 = vmatpush1.bf16.msra.mxu0 %v3410
        %3872 = vmatprep.subr.bf16.mxu0 %v3407
        %3873 = vmatpush1.bf16.msra.mxu0 %v3406
        %3874 = vmatprep.subr.bf16.mxu0 %v3403
        %3875 = vmatpush1.bf16.msra.mxu0 %v3402
        %3876 = vmatprep.subr.bf16.mxu0 %v3399
        %3877 = vmatpush1.bf16.msra.mxu0 %v3398
        %3878 = vmatprep.subr.bf16.mxu0 %v3395
        %3879 = vmatpush1.bf16.msra.mxu0 %v3394
        %3880 = vmatprep.subr.bf16.mxu0 %v3391
        %3881 = vmatpush1.bf16.msra.mxu0 %v3390
        %3882 = vmatprep.subr.bf16.mxu0 %v3387
        %3883 = vmatpush1.bf16.msra.mxu0 %v3386
        %3884 = vmatprep.subr.bf16.mxu0 %v3447
        %3885 = vmatpush2.bf16.msra.mxu0 %v3446
        %3886 = vmatprep.subr.bf16.mxu0 %v3443
        %3887 = vmatpush2.bf16.msra.mxu0 %v3442
        %3888 = vmatprep.subr.bf16.mxu0 %v3439
        %3889 = vmatpush2.bf16.msra.mxu0 %v3438
        %3890 = vmatprep.subr.bf16.mxu0 %v3435
        %3891 = vmatpush2.bf16.msra.mxu0 %v3434
        %3892 = vmatprep.subr.bf16.mxu0 %v3431
        %3893 = vmatpush2.bf16.msra.mxu0 %v3430
        %3894 = vmatprep.subr.bf16.mxu0 %v3427
        %3895 = vmatpush2.bf16.msra.mxu0 %v3426
        %3896 = vmatprep.subr.bf16.mxu0 %v3423
        %3897 = vmatpush2.bf16.msra.mxu0 %v3422
        %3898 = vmatprep.subr.bf16.mxu0 %v3419
        %3899 = vmatpush2.bf16.msra.mxu0 %v3418
        %3900 = vmatprep.mubr.bf16.mxu0 %v2527
        %3901 = vmatmul.mubr.bf16.gmra.mxu0 %v2526
        %v3902 = vpop.f32.mrf.mxu0
        %v3903 = vadd.f32 %v3862, %v3902
        %v3904 = vpop.f32.mrf.mxu0
        %v3905 = vadd.f32 %v3864, %v3904
        %v3906 = vpop.f32.mrf.mxu0
        %v3907 = vpop.f32.mrf.mxu0
        %3908 = vdwg.mxu0
        %3909 = vmatprep.subr.bf16.mxu0 %v3479
        %3910 = vmatpush1.bf16.msra.mxu0 %v3478
        %3911 = vmatprep.subr.bf16.mxu0 %v3475
        %3912 = vmatpush1.bf16.msra.mxu0 %v3474
        %3913 = vmatprep.subr.bf16.mxu0 %v3471
        %3914 = vmatpush1.bf16.msra.mxu0 %v3470
        %3915 = vmatprep.subr.bf16.mxu0 %v3467
        %3916 = vmatpush1.bf16.msra.mxu0 %v3466
        %3917 = vmatprep.subr.bf16.mxu0 %v3463
        %3918 = vmatpush1.bf16.msra.mxu0 %v3462
        %3919 = vmatprep.subr.bf16.mxu0 %v3459
        %3920 = vmatpush1.bf16.msra.mxu0 %v3458
        %3921 = vmatprep.subr.bf16.mxu0 %v3455
        %3922 = vmatpush1.bf16.msra.mxu0 %v3454
        %3923 = vmatprep.subr.bf16.mxu0 %v3451
        %3924 = vmatpush1.bf16.msra.mxu0 %v3450
        %3925 = vmatprep.subr.bf16.mxu0 %v3511
        %3926 = vmatpush2.bf16.msra.mxu0 %v3510
        %3927 = vmatprep.subr.bf16.mxu0 %v3507
        %3928 = vmatpush2.bf16.msra.mxu0 %v3506
        %3929 = vmatprep.subr.bf16.mxu0 %v3503
        %3930 = vmatpush2.bf16.msra.mxu0 %v3502
        %3931 = vmatprep.subr.bf16.mxu0 %v3499
        %3932 = vmatpush2.bf16.msra.mxu0 %v3498
        %3933 = vmatprep.subr.bf16.mxu0 %v3495
        %3934 = vmatpush2.bf16.msra.mxu0 %v3494
        %3935 = vmatprep.subr.bf16.mxu0 %v3491
        %3936 = vmatpush2.bf16.msra.mxu0 %v3490
        %3937 = vmatprep.subr.bf16.mxu0 %v3487
        %3938 = vmatpush2.bf16.msra.mxu0 %v3486
        %3939 = vmatprep.subr.bf16.mxu0 %v3483
        %3940 = vmatpush2.bf16.msra.mxu0 %v3482
        %3941 = vmatprep.mubr.bf16.mxu0 %v2529
        %3942 = vmatmul.mubr.bf16.gmra.mxu0 %v2528
        %v3943 = vpop.f32.mrf.mxu0
        %v3944 = vadd.f32 %v3903, %v3943
        %v3945 = vpop.f32.mrf.mxu0
        %v3946 = vadd.f32 %v3905, %v3945
        %v3947 = vpop.f32.mrf.mxu0
        %v3948 = vpop.f32.mrf.mxu0
        %3949 = vdwg.mxu0
        %v3950 = vmax.f32 %v3821, 0.0
        %v3951 = vmax.f32 %v3823, 0.0
        %v3952 = vmax.f32 %v3944, 0.0
        %v3953 = vmax.f32 %v3946, 0.0
        %v3954 = vpack.c.bf16 %v3950, %v3950
        %v3955 = vpack.c.bf16 %v3951, %v3951
        %v3956 = vpack.c.bf16 %v3952, %v3952
        %v3957 = vpack.c.bf16 %v3953, %v3953
        %v3958 = vld [vmem:[#allocation11] sm:$0xf]
        %v3959 = vld [vmem:[#allocation11 + $0x4] sm:$0xf]
        %v3960 = vld [vmem:[#allocation11 + $0x8] sm:$0xf]
        %v3961 = vld [vmem:[#allocation11 + $0xc] sm:$0xf]
        %v3962 = vld [vmem:[#allocation11 + $0x10] sm:$0xf]
        %v3963 = vld [vmem:[#allocation11 + $0x14] sm:$0xf]
        %v3964 = vld [vmem:[#allocation11 + $0x18] sm:$0xf]
        %v3965 = vld [vmem:[#allocation11 + $0x1c] sm:$0xf]
        %v3966 = vld [vmem:[#allocation11 + $0x20] sm:$0xf]
        %v3967 = vld [vmem:[#allocation11 + $0x24] sm:$0xf]
        %v3968 = vld [vmem:[#allocation11 + $0x28] sm:$0xf]
        %v3969 = vld [vmem:[#allocation11 + $0x2c] sm:$0xf]
        %v3970 = vld [vmem:[#allocation11 + $0x30] sm:$0xf]
        %v3971 = vld [vmem:[#allocation11 + $0x34] sm:$0xf]
        %v3972 = vld [vmem:[#allocation11 + $0x38] sm:$0xf]
        %v3973 = vld [vmem:[#allocation11 + $0x3c] sm:$0xf]
        %v3974 = vld [vmem:[#allocation11 + $0x40] sm:$0xf]
        %v3975 = vld [vmem:[#allocation11 + $0x44] sm:$0xf]
        %v3976 = vld [vmem:[#allocation11 + $0x48] sm:$0xf]
        %v3977 = vld [vmem:[#allocation11 + $0x4c] sm:$0xf]
        %v3978 = vld [vmem:[#allocation11 + $0x50] sm:$0xf]
        %v3979 = vld [vmem:[#allocation11 + $0x54] sm:$0xf]
        %v3980 = vld [vmem:[#allocation11 + $0x58] sm:$0xf]
        %v3981 = vld [vmem:[#allocation11 + $0x5c] sm:$0xf]
        %v3982 = vld [vmem:[#allocation11 + $0x60] sm:$0xf]
        %v3983 = vld [vmem:[#allocation11 + $0x64] sm:$0xf]
        %v3984 = vld [vmem:[#allocation11 + $0x68] sm:$0xf]
        %v3985 = vld [vmem:[#allocation11 + $0x6c] sm:$0xf]
        %v3986 = vld [vmem:[#allocation11 + $0x70] sm:$0xf]
        %v3987 = vld [vmem:[#allocation11 + $0x74] sm:$0xf]
        %v3988 = vld [vmem:[#allocation11 + $0x78] sm:$0xf]
        %v3989 = vld [vmem:[#allocation11 + $0x7c] sm:$0xf]
        %v3990 = vld [vmem:[#allocation11 + $0x80] sm:$0xf]
        %v3991 = vld [vmem:[#allocation11 + $0x84] sm:$0xf]
        %v3992 = vld [vmem:[#allocation11 + $0x88] sm:$0xf]
        %v3993 = vld [vmem:[#allocation11 + $0x8c] sm:$0xf]
        %v3994 = vld [vmem:[#allocation11 + $0x90] sm:$0xf]
        %v3995 = vld [vmem:[#allocation11 + $0x94] sm:$0xf]
        %v3996 = vld [vmem:[#allocation11 + $0x98] sm:$0xf]
        %v3997 = vld [vmem:[#allocation11 + $0x9c] sm:$0xf]
        %v3998 = vld [vmem:[#allocation11 + $0xa0] sm:$0xf]
        %v3999 = vld [vmem:[#allocation11 + $0xa4] sm:$0xf]
        %v4000 = vld [vmem:[#allocation11 + $0xa8] sm:$0xf]
        %v4001 = vld [vmem:[#allocation11 + $0xac] sm:$0xf]
        %v4002 = vld [vmem:[#allocation11 + $0xb0] sm:$0xf]
        %v4003 = vld [vmem:[#allocation11 + $0xb4] sm:$0xf]
        %v4004 = vld [vmem:[#allocation11 + $0xb8] sm:$0xf]
        %v4005 = vld [vmem:[#allocation11 + $0xbc] sm:$0xf]
        %v4006 = vld [vmem:[#allocation11 + $0xc0] sm:$0xf]
        %v4007 = vld [vmem:[#allocation11 + $0xc4] sm:$0xf]
        %v4008 = vld [vmem:[#allocation11 + $0xc8] sm:$0xf]
        %v4009 = vld [vmem:[#allocation11 + $0xcc] sm:$0xf]
        %v4010 = vld [vmem:[#allocation11 + $0xd0] sm:$0xf]
        %v4011 = vld [vmem:[#allocation11 + $0xd4] sm:$0xf]
        %v4012 = vld [vmem:[#allocation11 + $0xd8] sm:$0xf]
        %v4013 = vld [vmem:[#allocation11 + $0xdc] sm:$0xf]
        %v4014 = vld [vmem:[#allocation11 + $0xe0] sm:$0xf]
        %v4015 = vld [vmem:[#allocation11 + $0xe4] sm:$0xf]
        %v4016 = vld [vmem:[#allocation11 + $0xe8] sm:$0xf]
        %v4017 = vld [vmem:[#allocation11 + $0xec] sm:$0xf]
        %v4018 = vld [vmem:[#allocation11 + $0xf0] sm:$0xf]
        %v4019 = vld [vmem:[#allocation11 + $0xf4] sm:$0xf]
        %v4020 = vld [vmem:[#allocation11 + $0xf8] sm:$0xf]
        %v4021 = vld [vmem:[#allocation11 + $0xfc] sm:$0xf]
        %v4022 = vld [vmem:[#allocation13] sm:$0x1]
        %v4024 = vlaneseq
        %v4025 = vshrl.u32 %v4024, 7
        %v4026 = vsub.s32 0, %v4025
        %v4027 = vrot.slane %v4022, %v4026
        %v4093 = vunpack.c.l.b16 %v3958
        %v4094 = vunpack.c.l.b16 %v3959
        %v4095 = vunpack.c.l.b16 %v3960
        %v4096 = vunpack.c.l.b16 %v3961
        %v4097 = vunpack.c.l.b16 %v3962
        %v4098 = vunpack.c.l.b16 %v3963
        %v4099 = vunpack.c.l.b16 %v3964
        %v4100 = vunpack.c.l.b16 %v3965
        %v4101 = vunpack.c.l.b16 %v3966
        %v4102 = vunpack.c.l.b16 %v3967
        %v4103 = vunpack.c.l.b16 %v3968
        %v4104 = vunpack.c.l.b16 %v3969
        %v4105 = vunpack.c.l.b16 %v3970
        %v4106 = vunpack.c.l.b16 %v3971
        %v4107 = vunpack.c.l.b16 %v3972
        %v4108 = vunpack.c.l.b16 %v3973
        %v4109 = vunpack.c.l.b16 %v3974
        %v4110 = vunpack.c.l.b16 %v3975
        %v4111 = vunpack.c.l.b16 %v3976
        %v4112 = vunpack.c.l.b16 %v3977
        %v4113 = vunpack.c.l.b16 %v3978
        %v4114 = vunpack.c.l.b16 %v3979
        %v4115 = vunpack.c.l.b16 %v3980
        %v4116 = vunpack.c.l.b16 %v3981
        %v4117 = vunpack.c.l.b16 %v3982
        %v4118 = vunpack.c.l.b16 %v3983
        %v4119 = vunpack.c.l.b16 %v3984
        %v4120 = vunpack.c.l.b16 %v3985
        %v4121 = vunpack.c.l.b16 %v3986
        %v4122 = vunpack.c.l.b16 %v3987
        %v4123 = vunpack.c.l.b16 %v3988
        %v4124 = vunpack.c.l.b16 %v3989
        %v4125 = vunpack.c.l.b16 %v3990
        %v4126 = vunpack.c.l.b16 %v3991
        %v4127 = vunpack.c.l.b16 %v3992
        %v4128 = vunpack.c.l.b16 %v3993
        %v4129 = vunpack.c.l.b16 %v3994
        %v4130 = vunpack.c.l.b16 %v3995
        %v4131 = vunpack.c.l.b16 %v3996
        %v4132 = vunpack.c.l.b16 %v3997
        %v4133 = vunpack.c.l.b16 %v3998
        %v4134 = vunpack.c.l.b16 %v3999
        %v4135 = vunpack.c.l.b16 %v4000
        %v4136 = vunpack.c.l.b16 %v4001
        %v4137 = vunpack.c.l.b16 %v4002
        %v4138 = vunpack.c.l.b16 %v4003
        %v4139 = vunpack.c.l.b16 %v4004
        %v4140 = vunpack.c.l.b16 %v4005
        %v4141 = vunpack.c.l.b16 %v4006
        %v4142 = vunpack.c.l.b16 %v4007
        %v4143 = vunpack.c.l.b16 %v4008
        %v4144 = vunpack.c.l.b16 %v4009
        %v4145 = vunpack.c.l.b16 %v4010
        %v4146 = vunpack.c.l.b16 %v4011
        %v4147 = vunpack.c.l.b16 %v4012
        %v4148 = vunpack.c.l.b16 %v4013
        %v4149 = vunpack.c.l.b16 %v4014
        %v4150 = vunpack.c.l.b16 %v4015
        %v4151 = vunpack.c.l.b16 %v4016
        %v4152 = vunpack.c.l.b16 %v4017
        %v4153 = vunpack.c.l.b16 %v4018
        %v4154 = vunpack.c.l.b16 %v4019
        %v4155 = vunpack.c.l.b16 %v4020
        %v4156 = vunpack.c.l.b16 %v4021
        %v4157 = vpack.c.b16 %v4094, %v4093
        %v4158 = vpack.c.b16 %v4096, %v4095
        %v4159 = vpack.c.b16 %v4098, %v4097
        %v4160 = vpack.c.b16 %v4100, %v4099
        %v4161 = vpack.c.b16 %v4102, %v4101
        %v4162 = vpack.c.b16 %v4104, %v4103
        %v4163 = vpack.c.b16 %v4106, %v4105
        %v4164 = vpack.c.b16 %v4108, %v4107
        %v4165 = vpack.c.b16 %v4110, %v4109
        %v4166 = vpack.c.b16 %v4112, %v4111
        %v4167 = vpack.c.b16 %v4114, %v4113
        %v4168 = vpack.c.b16 %v4116, %v4115
        %v4169 = vpack.c.b16 %v4118, %v4117
        %v4170 = vpack.c.b16 %v4120, %v4119
        %v4171 = vpack.c.b16 %v4122, %v4121
        %v4172 = vpack.c.b16 %v4124, %v4123
        %v4173 = vpack.c.b16 %v4126, %v4125
        %v4174 = vpack.c.b16 %v4128, %v4127
        %v4175 = vpack.c.b16 %v4130, %v4129
        %v4176 = vpack.c.b16 %v4132, %v4131
        %v4177 = vpack.c.b16 %v4134, %v4133
        %v4178 = vpack.c.b16 %v4136, %v4135
        %v4179 = vpack.c.b16 %v4138, %v4137
        %v4180 = vpack.c.b16 %v4140, %v4139
        %v4181 = vpack.c.b16 %v4142, %v4141
        %v4182 = vpack.c.b16 %v4144, %v4143
        %v4183 = vpack.c.b16 %v4146, %v4145
        %v4184 = vpack.c.b16 %v4148, %v4147
        %v4185 = vpack.c.b16 %v4150, %v4149
        %v4186 = vpack.c.b16 %v4152, %v4151
        %v4187 = vpack.c.b16 %v4154, %v4153
        %v4188 = vpack.c.b16 %v4156, %v4155
        %4221 = vmatprep.subr.bf16.mxu0 0
        %4222 = vmatpush1.bf16.msra.mxu0 %v4164
        %4223 = vmatprep.subr.bf16.mxu0 0
        %4224 = vmatpush1.bf16.msra.mxu0 %v4163
        %4225 = vmatprep.subr.bf16.mxu0 0
        %4226 = vmatpush1.bf16.msra.mxu0 %v4162
        %4227 = vmatprep.subr.bf16.mxu0 0
        %4228 = vmatpush1.bf16.msra.mxu0 %v4161
        %4229 = vmatprep.subr.bf16.mxu0 0
        %4230 = vmatpush1.bf16.msra.mxu0 %v4160
        %4231 = vmatprep.subr.bf16.mxu0 0
        %4232 = vmatpush1.bf16.msra.mxu0 %v4159
        %4233 = vmatprep.subr.bf16.mxu0 0
        %4234 = vmatpush1.bf16.msra.mxu0 %v4158
        %4235 = vmatprep.subr.bf16.mxu0 0
        %4236 = vmatpush1.bf16.msra.mxu0 %v4157
        %4237 = vmatprep.subr.bf16.mxu0 0
        %4238 = vmatpush2.bf16.msra.mxu0 %v4172
        %4239 = vmatprep.subr.bf16.mxu0 0
        %4240 = vmatpush2.bf16.msra.mxu0 %v4171
        %4241 = vmatprep.subr.bf16.mxu0 0
        %4242 = vmatpush2.bf16.msra.mxu0 %v4170
        %4243 = vmatprep.subr.bf16.mxu0 0
        %4244 = vmatpush2.bf16.msra.mxu0 %v4169
        %4245 = vmatprep.subr.bf16.mxu0 0
        %4246 = vmatpush2.bf16.msra.mxu0 %v4168
        %4247 = vmatprep.subr.bf16.mxu0 0
        %4248 = vmatpush2.bf16.msra.mxu0 %v4167
        %4249 = vmatprep.subr.bf16.mxu0 0
        %4250 = vmatpush2.bf16.msra.mxu0 %v4166
        %4251 = vmatprep.subr.bf16.mxu0 0
        %4252 = vmatpush2.bf16.msra.mxu0 %v4165
        %4253 = vmatprep.mubr.bf16.mxu0 %v3955
        %4254 = vmatmul.mubr.bf16.gmra.mxu0 %v3954
        %v4255 = vpop.f32.mrf.mxu0
        %v4256 = vadd.f32 %v4027, %v4255
        %v4257 = vpop.f32.mrf.mxu0
        %v4258 = vpop.f32.mrf.mxu0
        %v4259 = vpop.f32.mrf.mxu0
        %4260 = vdwg.mxu0
        %4261 = vmatprep.subr.bf16.mxu0 0
        %4262 = vmatpush1.bf16.msra.mxu0 %v4180
        %4263 = vmatprep.subr.bf16.mxu0 0
        %4264 = vmatpush1.bf16.msra.mxu0 %v4179
        %4265 = vmatprep.subr.bf16.mxu0 0
        %4266 = vmatpush1.bf16.msra.mxu0 %v4178
        %4267 = vmatprep.subr.bf16.mxu0 0
        %4268 = vmatpush1.bf16.msra.mxu0 %v4177
        %4269 = vmatprep.subr.bf16.mxu0 0
        %4270 = vmatpush1.bf16.msra.mxu0 %v4176
        %4271 = vmatprep.subr.bf16.mxu0 0
        %4272 = vmatpush1.bf16.msra.mxu0 %v4175
        %4273 = vmatprep.subr.bf16.mxu0 0
        %4274 = vmatpush1.bf16.msra.mxu0 %v4174
        %4275 = vmatprep.subr.bf16.mxu0 0
        %4276 = vmatpush1.bf16.msra.mxu0 %v4173
        %4277 = vmatprep.subr.bf16.mxu0 0
        %4278 = vmatpush2.bf16.msra.mxu0 %v4188
        %4279 = vmatprep.subr.bf16.mxu0 0
        %4280 = vmatpush2.bf16.msra.mxu0 %v4187
        %4281 = vmatprep.subr.bf16.mxu0 0
        %4282 = vmatpush2.bf16.msra.mxu0 %v4186
        %4283 = vmatprep.subr.bf16.mxu0 0
        %4284 = vmatpush2.bf16.msra.mxu0 %v4185
        %4285 = vmatprep.subr.bf16.mxu0 0
        %4286 = vmatpush2.bf16.msra.mxu0 %v4184
        %4287 = vmatprep.subr.bf16.mxu0 0
        %4288 = vmatpush2.bf16.msra.mxu0 %v4183
        %4289 = vmatprep.subr.bf16.mxu0 0
        %4290 = vmatpush2.bf16.msra.mxu0 %v4182
        %4291 = vmatprep.subr.bf16.mxu0 0
        %4292 = vmatpush2.bf16.msra.mxu0 %v4181
        %4293 = vmatprep.mubr.bf16.mxu0 %v3957
        %4294 = vmatmul.mubr.bf16.gmra.mxu0 %v3956
        %v4295 = vpop.f32.mrf.mxu0
        %v4296 = vadd.f32 %v4256, %v4295
        %v4297 = vpop.f32.mrf.mxu0
        %v4298 = vpop.f32.mrf.mxu0
        %v4299 = vpop.f32.mrf.mxu0
        %4300 = vdwg.mxu0
        %v4301 = vlaneseq
        %v4302 = vand.u32 %v4301, 127
        %vm4303 = vcmp.lt.s32.totalorder %v4302, 2
        %v4304 = vsel %vm4303, %v4296, -inf
        %4305 = vmax.xlane.f32.xlu0 %v4304
        %v4306 = vpop.xlane.xlu0 %4305
        %v4307 = vsub.f32 %v4304, %v4306
        %v4308 = vmul.f32 %v4307, 1.442695
        %v4309 = vpow.pop %v4308
        %4310 = vadd.xlane.f32.xlu0 %v4309
        %v4311 = vpop.xlane.xlu0 %4310
        %v4312 = vlog2.pop %v4311
        %v4313 = vmul.f32 %v4312, 0.6931472
        %v4314 = vadd.f32 %v4313, %v4306
        %v4315 = vsub.f32 %v4304, %v4314
        %4316 = vst [vmem:[%s375] sm:$0xff] %v4315
        %s4317 = sand.u32 %s187, 1
        %s4318 = scalar_lea.sflag [#allocation4], %s4317
        %s4319 = sand.u32 %s187, 1
        %s4320 = smul.addr %s4319, 8
        %s4321 = scalar_lea.vmem [#allocation14], %s4320
        // Predicated region
        $region77: #{tpu_custom_call.1} parent=47 // pred_check
          %p4322 = pneg %p197
        $region78: #{tpu_custom_call.1} parent=47 // pred_check_branch
          %4324 = sbr.rel (%p4322) target = $region80
        $region79: #{tpu_custom_call.1} parent=47 // pred_region
          %s4326 = ssub.s32 128, 128
          %4327 = vsyncadd %s4318, %s4326
          %s4328 = smul.addr %s27, 128
          %s4329 = scalar_lea.hbm %s7, %s4328
          %s4331 = sshll.u32 %s4321, 4
          %s4332 = int_to_ptr.vmem [resolvable:$true] %s4331
          %4334 = dma.vmem_to_hbm [thread:$0]  %s4332, 128, %s4329, %s4318
        $region80: #{tpu_custom_call.1} parent=47 // pred_fallthru
          _
      $region48: #{tpu_custom_call.1} parent=5 // pred_fallthru
        _
      %p4335 = scmp.le.s32.totalorder 2, %s22
      // Predicated region
      $region81: #{tpu_custom_call.1} parent=5 // pred_check
        %p4336 = pneg %p4335
      $region82: #{tpu_custom_call.1} parent=5 // pred_check_branch
        %4338 = sbr.rel (%p4336) target = $region84
      $region83: #{tpu_custom_call.1} parent=5 // pred_region
        %s4339 = ssub.s32 %s22, 2
        // Predicated region
        $region85: #{tpu_custom_call.1} parent=83 // pred_check
          %p4340 = pneg %p203
        $region86: #{tpu_custom_call.1} parent=83 // pred_check_branch
          %4342 = sbr.rel (%p4340) target = $region88
        $region87: #{tpu_custom_call.1} parent=83 // pred_region
          %s4343 = sand.u32 %s188, 1
          %s4344 = scalar_lea.sflag [#allocation4], %s4343
          %s4345 = sand.u32 %s188, 1
          %s4346 = smul.addr %s4345, 8
          %s4347 = scalar_lea.vmem [#allocation14], %s4346
          %4348 = dma.done %s4344, 128
        $region88: #{tpu_custom_call.1} parent=83 // pred_fallthru
          _
      $region84: #{tpu_custom_call.1} parent=5 // pred_fallthru
        _
    $region6: #{tpu_custom_call.1} parent=1 // loop_footer
      %s26 = sadd.s32 1, %s22
    $region7: #{tpu_custom_call.1} parent=1 // loop_footer_branch
      %21 = sbr.rel target = $region3
    $region8: #{tpu_custom_call.1} parent=1 // loop_exit
      _
    %4349 = vsyncpa [#allocation3], 1
    %s4350 = scalar_lea.sflag [#allocation3], 1
    %4351 = vsyncpa %s4350, 1
    %4352 = vsyncpa [#allocation6], 1
    %4353 = vsyncpa [#allocation9], 1
    %4354 = vsyncpa [#allocation12], 1
    %4355 = vsyncpa [#allocation4], 1
    %s4356 = scalar_lea.sflag [#allocation4], 1
    %4357 = vsyncpa %s4356, 1

</llo_original>
